<compile_context>
chip_gen: v5e
topology: v5e:2x2
jax: 0.10.0
libtpu: 0.0.40
codegen_flags: <defaults>
</compile_context>

<pallas_src>
import functools

import jax
import jax.numpy as jnp
from jax.experimental import pallas as pl
from jax.experimental.pallas import tpu as pltpu


# ----------------------------------------------------------------------------
# Pallas kernels: fused per-plane Linear(C -> 2C) + chunk (+ reparam sample).
# Layout: channels on sublanes, (batch * spatial) on lanes.
# ----------------------------------------------------------------------------
def _hexvae_kernel_train(x_ref, w_ref, b_ref, eps_ref,
                         samp_ref, mu_ref, logvar_ref, *, c, planes_per_block):
    # x_ref/eps_ref: (Pblk, C, Ntile)   w_ref: (Pblk, 2C, C)   b_ref: (Pblk, 2C, 1)
    # outputs:       (Pblk, C, Ntile)
    for j in range(planes_per_block):        # tiny static loop (<= 3 planes)
        # One fused (2C,C)@(C,Ntile) dot per plane: batch lives in the lane
        # dim, so there is no per-batch loop and the bias broadcast happens
        # exactly once per plane.  f32 accumulation on the MXU.
        y = jnp.dot(w_ref[j], x_ref[j],
                    preferred_element_type=jnp.float32,
                    precision=jax.lax.Precision.HIGHEST) + b_ref[j]
        mu = y[:c, :]                         # 8-aligned sublane chunk at row C
        logvar = y[c:, :]
        mu_ref[j] = mu.astype(mu_ref.dtype)
        logvar_ref[j] = logvar.astype(logvar_ref.dtype)
        samp = mu + eps_ref[j].astype(jnp.float32) * jnp.exp(0.5 * logvar)
        samp_ref[j] = samp.astype(samp_ref.dtype)


def _hexvae_kernel_eval(x_ref, w_ref, b_ref, mu_ref, logvar_ref, *, c,
                        planes_per_block):
    # Eval writes only (mu, logvar): sample == mu, so the third HBM output is
    # dropped entirely (the kernel is write-bound).
    for j in range(planes_per_block):
        y = jnp.dot(w_ref[j], x_ref[j],
                    preferred_element_type=jnp.float32,
                    precision=jax.lax.Precision.HIGHEST) + b_ref[j]
        mu_ref[j] = y[:c, :].astype(mu_ref.dtype)
        logvar_ref[j] = y[c:, :].astype(logvar_ref.dtype)


# ----------------------------------------------------------------------------
# pallas_call wrapper
# ----------------------------------------------------------------------------
def _round_up(x, m):
    return ((x + m - 1) // m) * m


def _pick_tile_n(c, n, planes_per_block, n_blocks, itemsize,
                 vmem_budget_bytes=12 * 1024 * 1024):
    """Largest lane-tile (multiple of 128 dividing n) whose double-buffered
    blocks fit a conservative VMEM budget.  12 MiB leaves headroom under
    v5e's 16 MiB scoped default; raise vmem_limit_bytes via CompilerParams to
    use bigger tiles on v6e (128 MiB) / v7x (64 MiB)."""
    per_lane = planes_per_block * c * itemsize * n_blocks * 2   # double-buffered
    tile = min(n, max(128, (vmem_budget_bytes // per_lane) // 128 * 128))
    while n % tile:
        tile -= 128
    return tile


@functools.partial(jax.jit, static_argnames=("training",))
def hexplane_vae_fused(x_stacked, w_stacked, b_stacked, eps_stacked, *,
                       training=True):
    """x_stacked: (P, C, N) with N = B*Sp, Sp a multiple of 128;
    w_stacked: (P, 2C, C); b_stacked: (P, 2C, 1);
    eps_stacked: (P, C, N) in training mode, None in eval.
    Returns (sample, mu, logvar), each (P, C, N)."""
    p, c, n = x_stacked.shape
    # 3 planes per grid block where possible: one pipeline prologue per pair
    # of steps instead of six, and on v7x the two TensorCores split the planes.
    blk = 3 if p % 3 == 0 else 1
    n_blocks = 5 if training else 3            # x (+eps) + outputs per step
    tile_n = _pick_tile_n(c, n, blk, n_blocks, x_stacked.dtype.itemsize)
    grid = (p // blk, n // tile_n)

    x_spec = pl.BlockSpec((blk, c, tile_n), lambda i, j: (i, 0, j))
    w_spec = pl.BlockSpec((blk, 2 * c, c), lambda i, j: (i, 0, 0))
    b_spec = pl.BlockSpec((blk, 2 * c, 1), lambda i, j: (i, 0, 0))
    out_shape = jax.ShapeDtypeStruct((p, c, n), x_stacked.dtype)
    cparams = pltpu.CompilerParams(
        dimension_semantics=("parallel", "parallel"))

    if training:
        kernel = functools.partial(_hexvae_kernel_train, c=c,
                                   planes_per_block=blk)
        samp, mu, logvar = pl.pallas_call(
            kernel,
            out_shape=(out_shape, out_shape, out_shape),
            grid=grid,
            in_specs=[x_spec, w_spec, b_spec, x_spec],
            out_specs=(x_spec, x_spec, x_spec),
            compiler_params=cparams,
        )(x_stacked, w_stacked, b_stacked, eps_stacked)
        return samp, mu, logvar

    kernel = functools.partial(_hexvae_kernel_eval, c=c, planes_per_block=blk)
    mu, logvar = pl.pallas_call(
        kernel,
        out_shape=(out_shape, out_shape),
        grid=grid,
        in_specs=[x_spec, w_spec, b_spec],
        out_specs=(x_spec, x_spec),
        compiler_params=cparams,
    )(x_stacked, w_stacked, b_stacked)
    return mu, mu, logvar          # eval: sample is mu (no duplicate HBM write)


# ----------------------------------------------------------------------------
# DynamicCityAE forward (JAX glue around the single fused Pallas call)
# ----------------------------------------------------------------------------
def dynamic_city_ae_forward(voxels_hexplane, params, key, training=True):
    """voxels_hexplane: list of planes, each (B, C, D1, D2) NCHW."""
    # TODO(synk): TrEncoder not provided — encoder treated as identity.
    planes = voxels_hexplane
    shapes = [pln.shape for pln in planes]
    spatials = [d1 * d2 for (_, _, d1, d2) in shapes]
    sp = _round_up(max(spatials), 128)          # lane-dense, unmasked stores

    # NCHW -> (C, B*Sp): free reshape + one transpose per plane, batch folded
    # into the lane dimension.  (Ideally the encoder emits this layout.)
    cols = []
    for pln, s in zip(planes, spatials):
        bsz, c, d1, d2 = pln.shape
        x = pln.reshape(bsz, c, s)              # (B, C, S)
        x = jnp.transpose(x, (1, 0, 2))         # (C, B, S)
        if s != sp:
            x = jnp.pad(x, ((0, 0), (0, 0), (0, sp - s)))
        cols.append(x.reshape(c, bsz * sp))
    x_stacked = jnp.stack(cols)                 # (P, C, B*Sp)
    w_stacked = jnp.stack(params["w"])          # (P, 2C, C)
    b_stacked = jnp.stack(params["b"])[..., None]   # (P, 2C, 1)

    # eps as an HBM input (not in-kernel pltpu PRNG) so the kernel also runs
    # under interpret mode / CPU where prng_seed has no lowering.
    eps_stacked = (jax.random.normal(key, x_stacked.shape, x_stacked.dtype)
                   if training else None)

    samp, mu, logvar = hexplane_vae_fused(
        x_stacked, w_stacked, b_stacked, eps_stacked, training=training)

    # Back to the module's list-of-NCHW contract.
    # TODO(synk): feed the stacked (P, C, B*Sp) outputs straight into the
    # (not-provided) ConvDecoder to avoid these output slice copies.
    samples, mus, logvars = [], [], []
    for i, ((bsz, c, d1, d2), s) in enumerate(zip(shapes, spatials)):
        def back(m, i=i, bsz=bsz, c=c, d1=d1, d2=d2, s=s):
            y = m[i].reshape(c, bsz, sp)[:, :, :s]       # drop lane padding
            return jnp.transpose(y, (1, 0, 2)).reshape(bsz, c, d1, d2)
        samples.append(back(samp))
        mus.append(back(mu))
        logvars.append(back(logvar))

    # TODO(synk): ConvDecoder not provided — decoder treated as identity.
    pred = samples
    return dict(hexplane=samples, mus=mus, logvars=logvars, pred=pred)


# ----------------------------------------------------------------------------
# Deterministic parameter init + reference checks
# ----------------------------------------------------------------------------
def init_params(key, latent_channels, num_planes=6):
    """PyTorch nn.Linear-style init: W (2C, C), b (2C,), uniform(+-1/sqrt(C))."""
    ws, bs = [], []
    for _ in range(num_planes):
        kw, kb, key = jax.random.split(key, 3)
        scale = 1.0 / jnp.sqrt(latent_channels)
        ws.append(jax.random.uniform(
            kw, (2 * latent_channels, latent_channels),
            minval=-scale, maxval=scale, dtype=jnp.float32))
        bs.append(jax.random.uniform(
            kb, (2 * latent_channels,),
            minval=-scale, maxval=scale, dtype=jnp.float32))
    return {"w": ws, "b": bs}


if __name__ == "__main__":
    B, C, D1, D2 = 2, 32, 16, 16   # latent_channels = 32
    NUM_PLANES = 6

    root = jax.random.PRNGKey(0)
    k_params, k_data, k_noise = jax.random.split(root, 3)

    params = init_params(k_params, C, NUM_PLANES)
    plane_keys = jax.random.split(k_data, NUM_PLANES)
    hexplane = [jax.random.normal(plane_keys[i], (B, C, D1, D2), jnp.float32)
                for i in range(NUM_PLANES)]

    out_tr = dynamic_city_ae_forward(hexplane, params, k_noise, training=True)
    jax.block_until_ready(out_tr)
    out_ev = dynamic_city_ae_forward(hexplane, params, k_noise, training=False)
    jax.block_until_ready(out_ev)

    # --- correctness checks against a pure-JAX reference ---------------------
    for i in range(NUM_PLANES):
        # Reference in the original PyTorch orientation: rows x channels.
        x2d = jnp.transpose(hexplane[i], (0, 2, 3, 1)).reshape(B * D1 * D2, C)
        y = jnp.matmul(x2d, params["w"][i].T,
                       precision=jax.lax.Precision.HIGHEST) + params["b"][i]
        ref_mu, ref_lv = y[:, :C], y[:, C:]

        got_mu = jnp.transpose(out_tr["mus"][i], (0, 2, 3, 1)).reshape(B * D1 * D2, C)
        got_lv = jnp.transpose(out_tr["logvars"][i], (0, 2, 3, 1)).reshape(B * D1 * D2, C)
        assert jnp.allclose(got_mu, ref_mu, atol=1e-4, rtol=1e-4)
        assert jnp.allclose(got_lv, ref_lv, atol=1e-4, rtol=1e-4)
        # Eval mode: sample is exactly mu; mus agree across modes.
        assert jnp.array_equal(out_ev["hexplane"][i], out_ev["mus"][i])
        assert jnp.allclose(out_ev["mus"][i], out_tr["mus"][i], atol=1e-5)

    # Training mode: implied eps = (z - mu) * exp(-0.5*logvar) must be ~N(0,1).
    eps_parts = [
        ((out_tr["hexplane"][i] - out_tr["mus"][i])
         * jnp.exp(-0.5 * out_tr["logvars"][i])).ravel()
        for i in range(NUM_PLANES)]
    eps_all = jnp.concatenate(eps_parts)
    assert bool(jnp.isfinite(eps_all).all())
    assert abs(float(eps_all.mean())) < 0.05
    assert abs(float(eps_all.std()) - 1.0) < 0.05

    print("KERNEL_OK")
</pallas_src>

<mosaic_0001>
module attributes {stable_mosaic.version = 11 : i64} {
  func.func @_hexvae_kernel_train(%arg0: i32, %arg1: i32, %arg2: memref<3x32x512xf32, #tpu.memory_space<vmem>>, %arg3: memref<3x64x32xf32, #tpu.memory_space<vmem>>, %arg4: memref<3x64x1xf32, #tpu.memory_space<vmem>>, %arg5: memref<3x32x512xf32, #tpu.memory_space<vmem>>, %arg6: memref<3x32x512xf32, #tpu.memory_space<vmem>>, %arg7: memref<3x32x512xf32, #tpu.memory_space<vmem>>, %arg8: memref<3x32x512xf32, #tpu.memory_space<vmem>>) attributes {dimension_semantics = [#tpu.dimension_semantics<parallel>, #tpu.dimension_semantics<parallel>], iteration_bounds = array<i64: 2, 1>, scalar_prefetch = 0 : i64, scratch_operands = 0 : i64, tpu.core_type = #tpu.core_type<tc>, window_params = [{transform_indices = @transform_0, window_bounds = array<i64: 3, 32, 512>}, {transform_indices = @transform_1, window_bounds = array<i64: 3, 64, 32>}, {transform_indices = @transform_2, window_bounds = array<i64: 3, 64, 1>}, {transform_indices = @transform_3, window_bounds = array<i64: 3, 32, 512>}, {transform_indices = @transform_4, window_bounds = array<i64: 3, 32, 512>}, {transform_indices = @transform_5, window_bounds = array<i64: 3, 32, 512>}, {transform_indices = @transform_6, window_bounds = array<i64: 3, 32, 512>}]} {
    %c0 = arith.constant 0 : index
    %c0_0 = arith.constant 0 : index
    %c0_1 = arith.constant 0 : index
    %0 = vector.load %arg3[%c0, %c0_0, %c0_1] : memref<3x64x32xf32, #tpu.memory_space<vmem>>, vector<1x64x32xf32>
    %1 = vector.shape_cast %0 : vector<1x64x32xf32> to vector<64x32xf32>
    %c0_2 = arith.constant 0 : index
    %c0_3 = arith.constant 0 : index
    %c0_4 = arith.constant 0 : index
    %2 = vector.load %arg2[%c0_2, %c0_3, %c0_4] : memref<3x32x512xf32, #tpu.memory_space<vmem>>, vector<1x32x512xf32>
    %3 = vector.shape_cast %2 : vector<1x32x512xf32> to vector<32x512xf32>
    %cst = arith.constant dense<0.000000e+00> : vector<64x512xf32>
    %4 = tpu.matmul %1, %3, %cst {dimension_numbers = #tpu.dot_dimension_numbers<[1], [0], [0], [1], [0, 0, 1, 1], [], []>, precision = #tpu.contract_precision<fp32>} : vector<64x32xf32>, vector<32x512xf32>, vector<64x512xf32> -> vector<64x512xf32>
    %c0_5 = arith.constant 0 : index
    %c0_6 = arith.constant 0 : index
    %c0_7 = arith.constant 0 : index
    %5 = vector.load %arg4[%c0_5, %c0_6, %c0_7] : memref<3x64x1xf32, #tpu.memory_space<vmem>>, vector<1x64x1xf32>
    %6 = vector.shape_cast %5 : vector<1x64x1xf32> to vector<64x1xf32>
    %7 = vector.broadcast %6 : vector<64x1xf32> to vector<64x512xf32>
    %8 = arith.addf %4, %7 : vector<64x512xf32>
    %9 = vector.extract_strided_slice %8 {offsets = [0, 0], sizes = [32, 512], strides = [1, 1]} : vector<64x512xf32> to vector<32x512xf32>
    %10 = vector.extract_strided_slice %8 {offsets = [32, 0], sizes = [32, 512], strides = [1, 1]} : vector<64x512xf32> to vector<32x512xf32>
    %c0_8 = arith.constant 0 : index
    %c0_9 = arith.constant 0 : index
    %c0_10 = arith.constant 0 : index
    %11 = vector.load %arg7[%c0_8, %c0_9, %c0_10] : memref<3x32x512xf32, #tpu.memory_space<vmem>>, vector<1x32x512xf32>
    %12 = vector.shape_cast %11 : vector<1x32x512xf32> to vector<32x512xf32>
    %13 = vector.shape_cast %9 : vector<32x512xf32> to vector<1x32x512xf32>
    tpu.vector_store %arg7[%c0_8, %c0_9, %c0_10], %13 {strides = array<i32>} : memref<3x32x512xf32, #tpu.memory_space<vmem>>, vector<1x32x512xf32>,
    %c0_11 = arith.constant 0 : index
    %c0_12 = arith.constant 0 : index
    %c0_13 = arith.constant 0 : index
    %14 = vector.load %arg8[%c0_11, %c0_12, %c0_13] : memref<3x32x512xf32, #tpu.memory_space<vmem>>, vector<1x32x512xf32>
    %15 = vector.shape_cast %14 : vector<1x32x512xf32> to vector<32x512xf32>
    %16 = vector.shape_cast %10 : vector<32x512xf32> to vector<1x32x512xf32>
    tpu.vector_store %arg8[%c0_11, %c0_12, %c0_13], %16 {strides = array<i32>} : memref<3x32x512xf32, #tpu.memory_space<vmem>>, vector<1x32x512xf32>,
    %c0_14 = arith.constant 0 : index
    %c0_15 = arith.constant 0 : index
    %c0_16 = arith.constant 0 : index
    %17 = vector.load %arg5[%c0_14, %c0_15, %c0_16] : memref<3x32x512xf32, #tpu.memory_space<vmem>>, vector<1x32x512xf32>
    %18 = vector.shape_cast %17 : vector<1x32x512xf32> to vector<32x512xf32>
    %cst_17 = arith.constant 5.000000e-01 : f32
    %19 = vector.broadcast %cst_17 : f32 to vector<32x512xf32>
    %20 = arith.mulf %19, %10 : vector<32x512xf32>
    %21 = math.exp %20 : vector<32x512xf32>
    %22 = arith.mulf %18, %21 : vector<32x512xf32>
    %23 = arith.addf %9, %22 : vector<32x512xf32>
    %c0_18 = arith.constant 0 : index
    %c0_19 = arith.constant 0 : index
    %c0_20 = arith.constant 0 : index
    %24 = vector.load %arg6[%c0_18, %c0_19, %c0_20] : memref<3x32x512xf32, #tpu.memory_space<vmem>>, vector<1x32x512xf32>
    %25 = vector.shape_cast %24 : vector<1x32x512xf32> to vector<32x512xf32>
    %26 = vector.shape_cast %23 : vector<32x512xf32> to vector<1x32x512xf32>
    tpu.vector_store %arg6[%c0_18, %c0_19, %c0_20], %26 {strides = array<i32>} : memref<3x32x512xf32, #tpu.memory_space<vmem>>, vector<1x32x512xf32>,
    %c1 = arith.constant 1 : index
    %c0_21 = arith.constant 0 : index
    %c0_22 = arith.constant 0 : index
    %27 = vector.load %arg3[%c1, %c0_21, %c0_22] : memref<3x64x32xf32, #tpu.memory_space<vmem>>, vector<1x64x32xf32>
    %28 = vector.shape_cast %27 : vector<1x64x32xf32> to vector<64x32xf32>
    %c1_23 = arith.constant 1 : index
    %c0_24 = arith.constant 0 : index
    %c0_25 = arith.constant 0 : index
    %29 = vector.load %arg2[%c1_23, %c0_24, %c0_25] : memref<3x32x512xf32, #tpu.memory_space<vmem>>, vector<1x32x512xf32>
    %30 = vector.shape_cast %29 : vector<1x32x512xf32> to vector<32x512xf32>
    %cst_26 = arith.constant dense<0.000000e+00> : vector<64x512xf32>
    %31 = tpu.matmul %28, %30, %cst_26 {dimension_numbers = #tpu.dot_dimension_numbers<[1], [0], [0], [1], [0, 0, 1, 1], [], []>, precision = #tpu.contract_precision<fp32>} : vector<64x32xf32>, vector<32x512xf32>, vector<64x512xf32> -> vector<64x512xf32>
    %c1_27 = arith.constant 1 : index
    %c0_28 = arith.constant 0 : index
    %c0_29 = arith.constant 0 : index
    %32 = vector.load %arg4[%c1_27, %c0_28, %c0_29] : memref<3x64x1xf32, #tpu.memory_space<vmem>>, vector<1x64x1xf32>
    %33 = vector.shape_cast %32 : vector<1x64x1xf32> to vector<64x1xf32>
    %34 = vector.broadcast %33 : vector<64x1xf32> to vector<64x512xf32>
    %35 = arith.addf %31, %34 : vector<64x512xf32>
    %36 = vector.extract_strided_slice %35 {offsets = [0, 0], sizes = [32, 512], strides = [1, 1]} : vector<64x512xf32> to vector<32x512xf32>
    %37 = vector.extract_strided_slice %35 {offsets = [32, 0], sizes = [32, 512], strides = [1, 1]} : vector<64x512xf32> to vector<32x512xf32>
    %c1_30 = arith.constant 1 : index
    %c0_31 = arith.constant 0 : index
    %c0_32 = arith.constant 0 : index
    %38 = vector.load %arg7[%c1_30, %c0_31, %c0_32] : memref<3x32x512xf32, #tpu.memory_space<vmem>>, vector<1x32x512xf32>
    %39 = vector.shape_cast %38 : vector<1x32x512xf32> to vector<32x512xf32>
    %40 = vector.shape_cast %36 : vector<32x512xf32> to vector<1x32x512xf32>
    tpu.vector_store %arg7[%c1_30, %c0_31, %c0_32], %40 {strides = array<i32>} : memref<3x32x512xf32, #tpu.memory_space<vmem>>, vector<1x32x512xf32>,
    %c1_33 = arith.constant 1 : index
    %c0_34 = arith.constant 0 : index
    %c0_35 = arith.constant 0 : index
    %41 = vector.load %arg8[%c1_33, %c0_34, %c0_35] : memref<3x32x512xf32, #tpu.memory_space<vmem>>, vector<1x32x512xf32>
    %42 = vector.shape_cast %41 : vector<1x32x512xf32> to vector<32x512xf32>
    %43 = vector.shape_cast %37 : vector<32x512xf32> to vector<1x32x512xf32>
    tpu.vector_store %arg8[%c1_33, %c0_34, %c0_35], %43 {strides = array<i32>} : memref<3x32x512xf32, #tpu.memory_space<vmem>>, vector<1x32x512xf32>,
    %c1_36 = arith.constant 1 : index
    %c0_37 = arith.constant 0 : index
    %c0_38 = arith.constant 0 : index
    %44 = vector.load %arg5[%c1_36, %c0_37, %c0_38] : memref<3x32x512xf32, #tpu.memory_space<vmem>>, vector<1x32x512xf32>
    %45 = vector.shape_cast %44 : vector<1x32x512xf32> to vector<32x512xf32>
    %cst_39 = arith.constant 5.000000e-01 : f32
    %46 = vector.broadcast %cst_39 : f32 to vector<32x512xf32>
    %47 = arith.mulf %46, %37 : vector<32x512xf32>
    %48 = math.exp %47 : vector<32x512xf32>
    %49 = arith.mulf %45, %48 : vector<32x512xf32>
    %50 = arith.addf %36, %49 : vector<32x512xf32>
    %c1_40 = arith.constant 1 : index
    %c0_41 = arith.constant 0 : index
    %c0_42 = arith.constant 0 : index
    %51 = vector.load %arg6[%c1_40, %c0_41, %c0_42] : memref<3x32x512xf32, #tpu.memory_space<vmem>>, vector<1x32x512xf32>
    %52 = vector.shape_cast %51 : vector<1x32x512xf32> to vector<32x512xf32>
    %53 = vector.shape_cast %50 : vector<32x512xf32> to vector<1x32x512xf32>
    tpu.vector_store %arg6[%c1_40, %c0_41, %c0_42], %53 {strides = array<i32>} : memref<3x32x512xf32, #tpu.memory_space<vmem>>, vector<1x32x512xf32>,
    %c2 = arith.constant 2 : index
    %c0_43 = arith.constant 0 : index
    %c0_44 = arith.constant 0 : index
    %54 = vector.load %arg3[%c2, %c0_43, %c0_44] : memref<3x64x32xf32, #tpu.memory_space<vmem>>, vector<1x64x32xf32>
    %55 = vector.shape_cast %54 : vector<1x64x32xf32> to vector<64x32xf32>
    %c2_45 = arith.constant 2 : index
    %c0_46 = arith.constant 0 : index
    %c0_47 = arith.constant 0 : index
    %56 = vector.load %arg2[%c2_45, %c0_46, %c0_47] : memref<3x32x512xf32, #tpu.memory_space<vmem>>, vector<1x32x512xf32>
    %57 = vector.shape_cast %56 : vector<1x32x512xf32> to vector<32x512xf32>
    %cst_48 = arith.constant dense<0.000000e+00> : vector<64x512xf32>
    %58 = tpu.matmul %55, %57, %cst_48 {dimension_numbers = #tpu.dot_dimension_numbers<[1], [0], [0], [1], [0, 0, 1, 1], [], []>, precision = #tpu.contract_precision<fp32>} : vector<64x32xf32>, vector<32x512xf32>, vector<64x512xf32> -> vector<64x512xf32>
    %c2_49 = arith.constant 2 : index
    %c0_50 = arith.constant 0 : index
    %c0_51 = arith.constant 0 : index
    %59 = vector.load %arg4[%c2_49, %c0_50, %c0_51] : memref<3x64x1xf32, #tpu.memory_space<vmem>>, vector<1x64x1xf32>
    %60 = vector.shape_cast %59 : vector<1x64x1xf32> to vector<64x1xf32>
    %61 = vector.broadcast %60 : vector<64x1xf32> to vector<64x512xf32>
    %62 = arith.addf %58, %61 : vector<64x512xf32>
    %63 = vector.extract_strided_slice %62 {offsets = [0, 0], sizes = [32, 512], strides = [1, 1]} : vector<64x512xf32> to vector<32x512xf32>
    %64 = vector.extract_strided_slice %62 {offsets = [32, 0], sizes = [32, 512], strides = [1, 1]} : vector<64x512xf32> to vector<32x512xf32>
    %c2_52 = arith.constant 2 : index
    %c0_53 = arith.constant 0 : index
    %c0_54 = arith.constant 0 : index
    %65 = vector.load %arg7[%c2_52, %c0_53, %c0_54] : memref<3x32x512xf32, #tpu.memory_space<vmem>>, vector<1x32x512xf32>
    %66 = vector.shape_cast %65 : vector<1x32x512xf32> to vector<32x512xf32>
    %67 = vector.shape_cast %63 : vector<32x512xf32> to vector<1x32x512xf32>
    tpu.vector_store %arg7[%c2_52, %c0_53, %c0_54], %67 {strides = array<i32>} : memref<3x32x512xf32, #tpu.memory_space<vmem>>, vector<1x32x512xf32>,
    %c2_55 = arith.constant 2 : index
    %c0_56 = arith.constant 0 : index
    %c0_57 = arith.constant 0 : index
    %68 = vector.load %arg8[%c2_55, %c0_56, %c0_57] : memref<3x32x512xf32, #tpu.memory_space<vmem>>, vector<1x32x512xf32>
    %69 = vector.shape_cast %68 : vector<1x32x512xf32> to vector<32x512xf32>
    %70 = vector.shape_cast %64 : vector<32x512xf32> to vector<1x32x512xf32>
    tpu.vector_store %arg8[%c2_55, %c0_56, %c0_57], %70 {strides = array<i32>} : memref<3x32x512xf32, #tpu.memory_space<vmem>>, vector<1x32x512xf32>,
    %c2_58 = arith.constant 2 : index
    %c0_59 = arith.constant 0 : index
    %c0_60 = arith.constant 0 : index
    %71 = vector.load %arg5[%c2_58, %c0_59, %c0_60] : memref<3x32x512xf32, #tpu.memory_space<vmem>>, vector<1x32x512xf32>
    %72 = vector.shape_cast %71 : vector<1x32x512xf32> to vector<32x512xf32>
    %cst_61 = arith.constant 5.000000e-01 : f32
    %73 = vector.broadcast %cst_61 : f32 to vector<32x512xf32>
    %74 = arith.mulf %73, %64 : vector<32x512xf32>
    %75 = math.exp %74 : vector<32x512xf32>
    %76 = arith.mulf %72, %75 : vector<32x512xf32>
    %77 = arith.addf %63, %76 : vector<32x512xf32>
    %c2_62 = arith.constant 2 : index
    %c0_63 = arith.constant 0 : index
    %c0_64 = arith.constant 0 : index
    %78 = vector.load %arg6[%c2_62, %c0_63, %c0_64] : memref<3x32x512xf32, #tpu.memory_space<vmem>>, vector<1x32x512xf32>
    %79 = vector.shape_cast %78 : vector<1x32x512xf32> to vector<32x512xf32>
    %80 = vector.shape_cast %77 : vector<32x512xf32> to vector<1x32x512xf32>
    tpu.vector_store %arg6[%c2_62, %c0_63, %c0_64], %80 {strides = array<i32>} : memref<3x32x512xf32, #tpu.memory_space<vmem>>, vector<1x32x512xf32>,
    return
  }
  func.func @transform_0(%arg0: i32, %arg1: i32) -> (i32, i32, i32) {
    %c0_i32 = arith.constant 0 : i32
    %c0_i32_0 = arith.constant 0 : i32
    return %arg0, %c0_i32, %arg1 : i32, i32, i32
  }
  func.func @transform_1(%arg0: i32, %arg1: i32) -> (i32, i32, i32) {
    %c0_i32 = arith.constant 0 : i32
    %c0_i32_0 = arith.constant 0 : i32
    %c0_i32_1 = arith.constant 0 : i32
    return %arg0, %c0_i32, %c0_i32_0 : i32, i32, i32
  }
  func.func @transform_2(%arg0: i32, %arg1: i32) -> (i32, i32, i32) {
    %c0_i32 = arith.constant 0 : i32
    %c0_i32_0 = arith.constant 0 : i32
    %c0_i32_1 = arith.constant 0 : i32
    return %arg0, %c0_i32, %c0_i32_0 : i32, i32, i32
  }
  func.func @transform_3(%arg0: i32, %arg1: i32) -> (i32, i32, i32) {
    %c0_i32 = arith.constant 0 : i32
    %c0_i32_0 = arith.constant 0 : i32
    return %arg0, %c0_i32, %arg1 : i32, i32, i32
  }
  func.func @transform_4(%arg0: i32, %arg1: i32) -> (i32, i32, i32) {
    %c0_i32 = arith.constant 0 : i32
    %c0_i32_0 = arith.constant 0 : i32
    return %arg0, %c0_i32, %arg1 : i32, i32, i32
  }
  func.func @transform_5(%arg0: i32, %arg1: i32) -> (i32, i32, i32) {
    %c0_i32 = arith.constant 0 : i32
    %c0_i32_0 = arith.constant 0 : i32
    return %arg0, %c0_i32, %arg1 : i32, i32, i32
  }
  func.func @transform_6(%arg0: i32, %arg1: i32) -> (i32, i32, i32) {
    %c0_i32 = arith.constant 0 : i32
    %c0_i32_0 = arith.constant 0 : i32
    return %arg0, %c0_i32, %arg1 : i32, i32, i32
  }
}

</mosaic_0001>

<llo_original>
// kernel: hexplane_vae_fused.1
$region0: #{hexplane_vae_fused.1}
  #allocation0 [shape = 'u32[]', space=smem, size = 0x4, offset = 0x4, fixed_abs, tag = 'smem constant byte address 0x4 - core index']
  #allocation1 [shape = 'u32[72,128]{1,0:T(1,128)}', space=vmem, size = 0x9000, scoped, tag = 'internal scratch']
  %s0 = inlined_call_operand.vmem [shape: f32[6,32,512], index: 0, kind: input, shape index: {}]
  %s1 = inlined_call_operand.vmem [shape: f32[6,64,32], index: 1, kind: input, shape index: {}]
  %s2 = inlined_call_operand.vmem [shape: f32[6,64,1], index: 2, kind: input, shape index: {}]
  %s3 = inlined_call_operand.hbm [shape: f32[6,32,512], index: 3, kind: input, shape index: {}]
  %s4 = inlined_call_operand.hbm [shape: f32[6,32,512], index: 4, kind: output, shape index: {0}]
  %s5 = inlined_call_operand.hbm [shape: f32[6,32,512], index: 5, kind: output, shape index: {1}]
  %s6 = inlined_call_operand.hbm [shape: f32[6,32,512], index: 6, kind: output, shape index: {2}]
  %7 = xla_tuple %s4, %s5, %s6
  %s8 = sld [smem:[#allocation0]]
  $region69: #{hexplane_vae_fused.1} parent=0
    _
  %s10 = ssub.s32 1, %s8
  %s11 = scalar_select 0, %s10, %s8
  $region1: #{hexplane_vae_fused.1} parent=0
    #allocation2 [shape = 'u8[393216]{0}', space=vmem, size = 0x60000, scoped, tag = 'input window, operand 3']
    #allocation3 [shape = 's32[2]{0}', space=sflag, size = 0x8, scoped, tag = 'scoped memory for hexplane_vae_fused.1']
    #allocation4 [shape = 's32[2]{0}', space=sflag, size = 0x8, scoped, tag = 'scoped memory for hexplane_vae_fused.1']
    #allocation5 [shape = 'u8[393216]{0}', space=vmem, size = 0x60000, scoped, tag = 'output window, operand 0']
    #allocation6 [shape = 'u8[393216]{0}', space=vmem, size = 0x60000, scoped, tag = 'output window, operand 1']
    #allocation7 [shape = 's32[2]{0}', space=sflag, size = 0x8, scoped, tag = 'scoped memory for hexplane_vae_fused.1']
    #allocation8 [shape = 'u8[393216]{0}', space=vmem, size = 0x60000, scoped, tag = 'output window, operand 2']
    %12 = vsyncpa [#allocation3], 0
    %s13 = scalar_lea.sflag [#allocation3], 1
    %14 = vsyncpa %s13, 0
    %15 = vsyncpa [#allocation4], 0
    %s16 = scalar_lea.sflag [#allocation4], 1
    %17 = vsyncpa %s16, 0
    %18 = vsyncpa [#allocation7], 0
    %s19 = scalar_lea.sflag [#allocation7], 1
    %20 = vsyncpa %s19, 0
    loop: start=0, step=1, limit=4
    $region2: #{hexplane_vae_fused.1} parent=1 // loop_pre_header
      _
    $region3: #{hexplane_vae_fused.1} parent=1 // loop_header
      %s22 = sphi 0, %s26
      %p23 = scmp.ge.s32.totalorder %s22, 4
      %s29 = sphi 0, %s41
      %s30 = sphi 0, %s37
      %s31 = sphi 0, %s29
      %s32 = sphi 0, %s30
      %s33 = sphi 0, %s31
      %s34 = sphi 0, %s32
      %s46 = sphi 0, %s48
      %s49 = sphi 0, %s46
      %s50 = sphi 0, %s49
      %s66 = sphi 0, %s50
      %s72 = sphi 0, %s74
      %s75 = sphi 0, %s72
      %s76 = sphi 0, %s75
      %s92 = sphi 0, %s76
      %s98 = sphi 0, %s100
      %s101 = sphi 0, %s98
      %s102 = sphi 0, %s101
      %s118 = sphi 0, %s102
      %s126 = sphi 0, %s128
      %s129 = sphi 0, %s126
      %s130 = sphi 0, %s129
      %s146 = sphi 0, %s130
      %s154 = sphi 0, %s156
      %s157 = sphi 0, %s154
      %s158 = sphi 0, %s157
      %s174 = sphi 0, %s158
      %s182 = sphi 0, %s184
      %s185 = sphi 0, %s182
      %s186 = sphi 0, %s185
      %s202 = sphi 0, %s186
      %s210 = sphi 0, %s212
      %s213 = sphi 0, %s210
      %s214 = sphi 0, %s213
      %s230 = sphi 0, %s214
    $region4: #{hexplane_vae_fused.1} parent=1 // loop_header_branch
      %25 = sbr.rel (%p23) target = $region8
    $region5: #{hexplane_vae_fused.1} parent=1 // loop_body
      %s27 = ssub.s32 %s22, 1
      %s28 = ssub.s32 %s22, 2
      %s35 = sadd.s32 1, %s30
      %p36 = scmp.ge.s32.totalorder %s35, 1
      %s37 = scalar_select %p36, 0, %s35
      %s38 = sadd.s32 1, %s29
      %s39 = scalar_select %p36, %s38, %s29
      %p40 = scmp.ge.s32.totalorder %s39, 2
      %s41 = scalar_select %p40, 0, %s39
      %s42 = ssub.s32 %s29, %s41
      %s43 = ssub.s32 %s30, %s37
      %s44 = sor.u32 %s42, %s43
      %p45 = scmp.eq.s32.totalorder %s44, 0
      %s47 = sadd.s32 %s46, 1
      %s48 = scalar_select %p45, %s46, %s47
      %p51 = pneg %p45
      %p52 = scmp.eq.s32.totalorder %s22, 1
      %p53 = por %p51, %p52
      %p54 = scmp.ne.s32.totalorder %s46, %s49
      %p55 = scmp.eq.s32.totalorder %s22, 0
      %p56 = por %p54, %p55
      %p57 = scmp.ne.s32.totalorder %s46, %s49
      %p58 = scmp.eq.s32.totalorder %s27, 1
      %p59 = por %p57, %p58
      %p60 = scmp.ne.s32.totalorder %s49, %s50
      %p61 = scmp.eq.s32.totalorder %s27, 0
      %p62 = por %p60, %p61
      %p63 = scmp.ne.s32.totalorder %s49, %s50
      %p64 = scmp.eq.s32.totalorder %s28, 1
      %p65 = por %p63, %p64
      %p67 = scmp.ne.s32.totalorder %s50, %s66
      %p68 = scmp.eq.s32.totalorder %s28, 0
      %p69 = por %p67, %p68
      %s70 = ssub.s32 %s29, %s41
      %p71 = scmp.eq.s32.totalorder %s70, 0
      %s73 = sadd.s32 %s72, 1
      %s74 = scalar_select %p71, %s72, %s73
      %p77 = pneg %p71
      %p78 = scmp.eq.s32.totalorder %s22, 1
      %p79 = por %p77, %p78
      %p80 = scmp.ne.s32.totalorder %s72, %s75
      %p81 = scmp.eq.s32.totalorder %s22, 0
      %p82 = por %p80, %p81
      %p83 = scmp.ne.s32.totalorder %s72, %s75
      %p84 = scmp.eq.s32.totalorder %s27, 1
      %p85 = por %p83, %p84
      %p86 = scmp.ne.s32.totalorder %s75, %s76
      %p87 = scmp.eq.s32.totalorder %s27, 0
      %p88 = por %p86, %p87
      %p89 = scmp.ne.s32.totalorder %s75, %s76
      %p90 = scmp.eq.s32.totalorder %s28, 1
      %p91 = por %p89, %p90
      %p93 = scmp.ne.s32.totalorder %s76, %s92
      %p94 = scmp.eq.s32.totalorder %s28, 0
      %p95 = por %p93, %p94
      %s96 = ssub.s32 %s29, %s41
      %p97 = scmp.eq.s32.totalorder %s96, 0
      %s99 = sadd.s32 %s98, 1
      %s100 = scalar_select %p97, %s98, %s99
      %p103 = pneg %p97
      %p104 = scmp.eq.s32.totalorder %s22, 1
      %p105 = por %p103, %p104
      %p106 = scmp.ne.s32.totalorder %s98, %s101
      %p107 = scmp.eq.s32.totalorder %s22, 0
      %p108 = por %p106, %p107
      %p109 = scmp.ne.s32.totalorder %s98, %s101
      %p110 = scmp.eq.s32.totalorder %s27, 1
      %p111 = por %p109, %p110
      %p112 = scmp.ne.s32.totalorder %s101, %s102
      %p113 = scmp.eq.s32.totalorder %s27, 0
      %p114 = por %p112, %p113
      %p115 = scmp.ne.s32.totalorder %s101, %s102
      %p116 = scmp.eq.s32.totalorder %s28, 1
      %p117 = por %p115, %p116
      %p119 = scmp.ne.s32.totalorder %s102, %s118
      %p120 = scmp.eq.s32.totalorder %s28, 0
      %p121 = por %p119, %p120
      %s122 = ssub.s32 %s29, %s41
      %s123 = ssub.s32 %s30, %s37
      %s124 = sor.u32 %s122, %s123
      %p125 = scmp.eq.s32.totalorder %s124, 0
      %s127 = sadd.s32 %s126, 1
      %s128 = scalar_select %p125, %s126, %s127
      %p131 = pneg %p125
      %p132 = scmp.eq.s32.totalorder %s22, 1
      %p133 = por %p131, %p132
      %p134 = scmp.ne.s32.totalorder %s126, %s129
      %p135 = scmp.eq.s32.totalorder %s22, 0
      %p136 = por %p134, %p135
      %p137 = scmp.ne.s32.totalorder %s126, %s129
      %p138 = scmp.eq.s32.totalorder %s27, 1
      %p139 = por %p137, %p138
      %p140 = scmp.ne.s32.totalorder %s129, %s130
      %p141 = scmp.eq.s32.totalorder %s27, 0
      %p142 = por %p140, %p141
      %p143 = scmp.ne.s32.totalorder %s129, %s130
      %p144 = scmp.eq.s32.totalorder %s28, 1
      %p145 = por %p143, %p144
      %p147 = scmp.ne.s32.totalorder %s130, %s146
      %p148 = scmp.eq.s32.totalorder %s28, 0
      %p149 = por %p147, %p148
      %s150 = ssub.s32 %s29, %s41
      %s151 = ssub.s32 %s30, %s37
      %s152 = sor.u32 %s150, %s151
      %p153 = scmp.eq.s32.totalorder %s152, 0
      %s155 = sadd.s32 %s154, 1
      %s156 = scalar_select %p153, %s154, %s155
      %p159 = pneg %p153
      %p160 = scmp.eq.s32.totalorder %s22, 1
      %p161 = por %p159, %p160
      %p162 = scmp.ne.s32.totalorder %s154, %s157
      %p163 = scmp.eq.s32.totalorder %s22, 0
      %p164 = por %p162, %p163
      %p165 = scmp.ne.s32.totalorder %s154, %s157
      %p166 = scmp.eq.s32.totalorder %s27, 1
      %p167 = por %p165, %p166
      %p168 = scmp.ne.s32.totalorder %s157, %s158
      %p169 = scmp.eq.s32.totalorder %s27, 0
      %p170 = por %p168, %p169
      %p171 = scmp.ne.s32.totalorder %s157, %s158
      %p172 = scmp.eq.s32.totalorder %s28, 1
      %p173 = por %p171, %p172
      %p175 = scmp.ne.s32.totalorder %s158, %s174
      %p176 = scmp.eq.s32.totalorder %s28, 0
      %p177 = por %p175, %p176
      %s178 = ssub.s32 %s29, %s41
      %s179 = ssub.s32 %s30, %s37
      %s180 = sor.u32 %s178, %s179
      %p181 = scmp.eq.s32.totalorder %s180, 0
      %s183 = sadd.s32 %s182, 1
      %s184 = scalar_select %p181, %s182, %s183
      %p187 = pneg %p181
      %p188 = scmp.eq.s32.totalorder %s22, 1
      %p189 = por %p187, %p188
      %p190 = scmp.ne.s32.totalorder %s182, %s185
      %p191 = scmp.eq.s32.totalorder %s22, 0
      %p192 = por %p190, %p191
      %p193 = scmp.ne.s32.totalorder %s182, %s185
      %p194 = scmp.eq.s32.totalorder %s27, 1
      %p195 = por %p193, %p194
      %p196 = scmp.ne.s32.totalorder %s185, %s186
      %p197 = scmp.eq.s32.totalorder %s27, 0
      %p198 = por %p196, %p197
      %p199 = scmp.ne.s32.totalorder %s185, %s186
      %p200 = scmp.eq.s32.totalorder %s28, 1
      %p201 = por %p199, %p200
      %p203 = scmp.ne.s32.totalorder %s186, %s202
      %p204 = scmp.eq.s32.totalorder %s28, 0
      %p205 = por %p203, %p204
      %s206 = ssub.s32 %s29, %s41
      %s207 = ssub.s32 %s30, %s37
      %s208 = sor.u32 %s206, %s207
      %p209 = scmp.eq.s32.totalorder %s208, 0
      %s211 = sadd.s32 %s210, 1
      %s212 = scalar_select %p209, %s210, %s211
      %p215 = pneg %p209
      %p216 = scmp.eq.s32.totalorder %s22, 1
      %p217 = por %p215, %p216
      %p218 = scmp.ne.s32.totalorder %s210, %s213
      %p219 = scmp.eq.s32.totalorder %s22, 0
      %p220 = por %p218, %p219
      %p221 = scmp.ne.s32.totalorder %s210, %s213
      %p222 = scmp.eq.s32.totalorder %s27, 1
      %p223 = por %p221, %p222
      %p224 = scmp.ne.s32.totalorder %s213, %s214
      %p225 = scmp.eq.s32.totalorder %s27, 0
      %p226 = por %p224, %p225
      %p227 = scmp.ne.s32.totalorder %s213, %s214
      %p228 = scmp.eq.s32.totalorder %s28, 1
      %p229 = por %p227, %p228
      %p231 = scmp.ne.s32.totalorder %s214, %s230
      %p232 = scmp.eq.s32.totalorder %s28, 0
      %p233 = por %p231, %p232
      %p234 = scmp.le.s32.totalorder 1, %s22
      %p235 = scmp.lt.s32.totalorder %s22, 3
      %p236 = pnand %p234, %p235
      %p237 = pneg %p236
      // Predicated region
      $region9: #{hexplane_vae_fused.1} parent=5 // pred_check
        _
      $region10: #{hexplane_vae_fused.1} parent=5 // pred_check_branch
        %239 = sbr.rel (%p236) target = $region12
      $region11: #{hexplane_vae_fused.1} parent=5 // pred_region
        %s240 = ssub.s32 %s22, 1
      $region12: #{hexplane_vae_fused.1} parent=5 // pred_fallthru
        _
      %p241 = scmp.lt.s32.totalorder %s22, 2
      // Predicated region
      $region13: #{hexplane_vae_fused.1} parent=5 // pred_check
        %p242 = pneg %p241
      $region14: #{hexplane_vae_fused.1} parent=5 // pred_check_branch
        %244 = sbr.rel (%p242) target = $region16
      $region15: #{hexplane_vae_fused.1} parent=5 // pred_region
        // Predicated region
        $region17: #{hexplane_vae_fused.1} parent=15 // pred_check
          %p245 = pneg %p56
        $region18: #{hexplane_vae_fused.1} parent=15 // pred_check_branch
          %247 = sbr.rel (%p245) target = $region20
        $region19: #{hexplane_vae_fused.1} parent=15 // pred_region
          %s248 = smul.u32 3, %s29
          %s249 = smul.u32 4, %s30
          %p250 = scmp.lt.s32.totalorder %s248, 5
          %s251 = scalar_select %p250, %s248, 5
          %p252 = scmp.lt.s32.totalorder %s249, 3
          %s253 = scalar_select %p252, %s249, 3
          %s254 = smul.addr %s251, 16
          %s255 = sadd.s32 %s253, %s254
          %s256 = smul.addr %s255, 8
          %s257 = scalar_lea.vmem %s0, %s256
          %s258 = smul.u32 3, %s29
          %s259 = smul.u32 4, %s30
        $region20: #{hexplane_vae_fused.1} parent=15 // pred_fallthru
          _
        // Predicated region
        $region21: #{hexplane_vae_fused.1} parent=15 // pred_check
          %p260 = pneg %p82
        $region22: #{hexplane_vae_fused.1} parent=15 // pred_check_branch
          %262 = sbr.rel (%p260) target = $region24
        $region23: #{hexplane_vae_fused.1} parent=15 // pred_region
          %s263 = smul.u32 3, %s29
          %p264 = scmp.lt.s32.totalorder %s263, 5
          %s265 = scalar_select %p264, %s263, 5
          %s266 = smul.addr %s265, 8
          %s267 = smul.addr %s266, 8
          %s268 = scalar_lea.vmem %s1, %s267
          %s269 = smul.u32 3, %s29
        $region24: #{hexplane_vae_fused.1} parent=15 // pred_fallthru
          _
        // Predicated region
        $region25: #{hexplane_vae_fused.1} parent=15 // pred_check
          %p270 = pneg %p108
        $region26: #{hexplane_vae_fused.1} parent=15 // pred_check_branch
          %272 = sbr.rel (%p270) target = $region28
        $region27: #{hexplane_vae_fused.1} parent=15 // pred_region
          %s273 = smul.u32 3, %s29
          %p274 = scmp.lt.s32.totalorder %s273, 5
          %s275 = scalar_select %p274, %s273, 5
          %s276 = smul.addr %s275, 8
          %s277 = smul.addr %s276, 8
          %s278 = scalar_lea.vmem %s2, %s277
          %s279 = smul.u32 3, %s29
        $region28: #{hexplane_vae_fused.1} parent=15 // pred_fallthru
          _
        // Predicated region
        $region29: #{hexplane_vae_fused.1} parent=15 // pred_check
          %p280 = pneg %p136
        $region30: #{hexplane_vae_fused.1} parent=15 // pred_check_branch
          %282 = sbr.rel (%p280) target = $region32
        $region31: #{hexplane_vae_fused.1} parent=15 // pred_region
          %s283 = sand.u32 %s126, 1
          %s284 = scalar_lea.sflag [#allocation3], %s283
          %s285 = sand.u32 %s126, 1
          %s286 = smul.addr %s285, 384
          %s287 = scalar_lea.vmem [#allocation2], %s286
          %s288 = smul.u32 3, %s29
          %s289 = smul.u32 4, %s30
          %291 = vsyncadd %s284, 0
          %s292 = smul.addr %s288, 16
          %s293 = sadd.s32 %s289, %s292
          %s294 = smul.addr %s293, 8
          %s295 = scalar_lea.hbm %s3, %s294
          %s296 = sshll.u32 %s295, 4
          %s297 = int_to_ptr.hbm [resolvable:$true] %s296
          %s298 = sshll.u32 %s287, 4
          %s299 = int_to_ptr.vmem [resolvable:$true] %s298
          %304 = dma.hbm_to_vmem [thread:$0]  %s297, 6144, %s299, %s284, 512, 512, 32
        $region32: #{hexplane_vae_fused.1} parent=15 // pred_fallthru
          _
      $region16: #{hexplane_vae_fused.1} parent=5 // pred_fallthru
        _
      %p305 = scmp.le.s32.totalorder 1, %s22
      %p306 = scmp.lt.s32.totalorder %s22, 3
      %p307 = pnand %p305, %p306
      %p308 = pneg %p307
      // Predicated region
      $region33: #{hexplane_vae_fused.1} parent=5 // pred_check
        _
      $region34: #{hexplane_vae_fused.1} parent=5 // pred_check_branch
        %310 = sbr.rel (%p307) target = $region36
      $region35: #{hexplane_vae_fused.1} parent=5 // pred_region
        %s311 = ssub.s32 %s22, 1
        %s312 = sand.u32 %s129, 1
        %s313 = scalar_lea.sflag [#allocation3], %s312
        %s314 = sand.u32 %s129, 1
        %s315 = smul.addr %s314, 384
        %s316 = scalar_lea.vmem [#allocation2], %s315
        // Predicated region
        $region37: #{hexplane_vae_fused.1} parent=35 // pred_check
          %p317 = pneg %p142
        $region38: #{hexplane_vae_fused.1} parent=35 // pred_check_branch
          %319 = sbr.rel (%p317) target = $region40
        $region39: #{hexplane_vae_fused.1} parent=35 // pred_region
          %321 = dma.done %s313, 6144
        $region40: #{hexplane_vae_fused.1} parent=35 // pred_fallthru
          _
        %s322 = smul.u32 3, %s31
        %s323 = smul.u32 4, %s32
        %p324 = scmp.lt.s32.totalorder %s322, 5
        %s325 = scalar_select %p324, %s322, 5
        %p326 = scmp.lt.s32.totalorder %s323, 3
        %s327 = scalar_select %p326, %s323, 3
        %s328 = smul.addr %s325, 16
        %s329 = sadd.s32 %s327, %s328
        %s330 = smul.addr %s329, 8
        %s331 = scalar_lea.vmem %s0, %s330
        %p332 = pneg %p62
        %p333 = pneg %p59
        %s334 = smul.u32 3, %s31
        %p335 = scmp.lt.s32.totalorder %s334, 5
        %s336 = scalar_select %p335, %s334, 5
        %s337 = smul.addr %s336, 8
        %s338 = smul.addr %s337, 8
        %s339 = scalar_lea.vmem %s1, %s338
        %p340 = pneg %p88
        %p341 = pneg %p85
        %s342 = smul.u32 3, %s31
        %p343 = scmp.lt.s32.totalorder %s342, 5
        %s344 = scalar_select %p343, %s342, 5
        %s345 = smul.addr %s344, 8
        %s346 = smul.addr %s345, 8
        %s347 = scalar_lea.vmem %s2, %s346
        %p348 = pneg %p114
        %p349 = pneg %p111
        %s350 = sand.u32 %s129, 1
        %s351 = scalar_lea.sflag [#allocation3], %s350
        %s352 = sand.u32 %s129, 1
        %s353 = smul.addr %s352, 384
        %s354 = scalar_lea.vmem [#allocation2], %s353
        %p355 = pneg %p142
        %p356 = pneg %p139
        %p357 = pneg %p170
        %p358 = pneg %p167
        %s359 = sand.u32 %s157, 1
        %s360 = scalar_lea.sflag [#allocation4], %s359
        %s361 = sand.u32 %s157, 1
        %s362 = smul.addr %s361, 384
        %s363 = scalar_lea.vmem [#allocation5], %s362
        %p364 = pneg %p198
        %p365 = pneg %p195
        %s366 = sand.u32 %s27, 1
        %s367 = scalar_lea.sflag [#allocation7], %s366
        %s368 = sand.u32 %s185, 1
        %s369 = smul.addr %s368, 384
        %s370 = scalar_lea.vmem [#allocation6], %s369
        %p371 = pneg %p226
        %p372 = pneg %p223
        %s373 = sand.u32 %s27, 1
        %s374 = scalar_lea.sflag [#allocation7], %s373
        %s375 = sand.u32 %s213, 1
        %s376 = smul.addr %s375, 384
        %s377 = scalar_lea.vmem [#allocation8], %s376
        %s378 = smul.u32 3, %s31
        %s379 = smul.u32 4, %s32
        %p380 = scmp.lt.s32.totalorder %s378, 5
        %s381 = scalar_select %p380, %s378, 5
        %p382 = scmp.lt.s32.totalorder %s379, 3
        %s383 = scalar_select %p382, %s379, 3
        %s384 = smul.addr %s381, 16
        %s385 = sadd.s32 %s383, %s384
        %s386 = smul.addr %s385, 8
        %s387 = scalar_lea.vmem %s0, %s386
        %s388 = smul.u32 3, %s31
        %s389 = smul.u32 4, %s32
        %s390 = smul.u32 3, %s31
        %p391 = scmp.lt.s32.totalorder %s390, 5
        %s392 = scalar_select %p391, %s390, 5
        %s393 = smul.addr %s392, 8
        %s394 = smul.addr %s393, 8
        %s395 = scalar_lea.vmem %s1, %s394
        %s396 = smul.u32 3, %s31
        %s397 = smul.u32 3, %s31
        %p398 = scmp.lt.s32.totalorder %s397, 5
        %s399 = scalar_select %p398, %s397, 5
        %s400 = smul.addr %s399, 8
        %s401 = smul.addr %s400, 8
        %s402 = scalar_lea.vmem %s2, %s401
        %s403 = smul.u32 3, %s31
        %s404 = smul.u32 3, %s31
        %s405 = smul.u32 4, %s32
        %s406 = smul.u32 3, %s31
        %s407 = smul.u32 4, %s32
        %s408 = smul.u32 3, %s31
        %s409 = smul.u32 4, %s32
        %s410 = smul.u32 3, %s31
        %s411 = smul.u32 4, %s32
        %v412 = vld [vmem:[%s395] sm:$0xff]
        %v413 = vld [vmem:[%s395 + $0x8] sm:$0xff]
        %v414 = vld [vmem:[%s395 + $0x10] sm:$0xff]
        %v415 = vld [vmem:[%s395 + $0x18] sm:$0xff]
        %v416 = vld [vmem:[%s395 + $0x20] sm:$0xff]
        %v417 = vld [vmem:[%s395 + $0x28] sm:$0xff]
        %v418 = vld [vmem:[%s395 + $0x30] sm:$0xff]
        %v419 = vld [vmem:[%s395 + $0x38] sm:$0xff]
        %v420 = vld [vmem:[%s387] sm:$0xff]
        %v421 = vld [vmem:[%s387 + $0x8] sm:$0xff]
        %v422 = vld [vmem:[%s387 + $0x10] sm:$0xff]
        %v423 = vld [vmem:[%s387 + $0x18] sm:$0xff]
        %v424 = vld [vmem:[%s387 + $0x20] sm:$0xff]
        %v425 = vld [vmem:[%s387 + $0x28] sm:$0xff]
        %v426 = vld [vmem:[%s387 + $0x30] sm:$0xff]
        %v427 = vld [vmem:[%s387 + $0x38] sm:$0xff]
        %v428 = vld [vmem:[%s387 + $0x40] sm:$0xff]
        %v429 = vld [vmem:[%s387 + $0x48] sm:$0xff]
        %v430 = vld [vmem:[%s387 + $0x50] sm:$0xff]
        %v431 = vld [vmem:[%s387 + $0x58] sm:$0xff]
        %v432 = vld [vmem:[%s387 + $0x60] sm:$0xff]
        %v433 = vld [vmem:[%s387 + $0x68] sm:$0xff]
        %v434 = vld [vmem:[%s387 + $0x70] sm:$0xff]
        %v435 = vld [vmem:[%s387 + $0x78] sm:$0xff]
        %v436 = vld [vmem:[%s402] sm:$0xff]
        %v437 = vld [vmem:[%s402 + $0x8] sm:$0xff]
        %v438 = vld [vmem:[%s402 + $0x10] sm:$0xff]
        %v439 = vld [vmem:[%s402 + $0x18] sm:$0xff]
        %v440 = vld [vmem:[%s402 + $0x20] sm:$0xff]
        %v441 = vld [vmem:[%s402 + $0x28] sm:$0xff]
        %v442 = vld [vmem:[%s402 + $0x30] sm:$0xff]
        %v443 = vld [vmem:[%s402 + $0x38] sm:$0xff]
        %445 = vset.pattern.permute.xlu0 0
        %446 = vperm.xlu0 %445, %v436
        %v447 = vpop.permute.xlu0 %446
        %450 = vset.pattern.permute.xlu0 0
        %451 = vperm.xlu0 %450, %v437
        %v452 = vpop.permute.xlu0 %451
        %455 = vset.pattern.permute.xlu0 0
        %456 = vperm.xlu0 %455, %v438
        %v457 = vpop.permute.xlu0 %456
        %460 = vset.pattern.permute.xlu0 0
        %461 = vperm.xlu0 %460, %v439
        %v462 = vpop.permute.xlu0 %461
        %465 = vset.pattern.permute.xlu0 0
        %466 = vperm.xlu0 %465, %v440
        %v467 = vpop.permute.xlu0 %466
        %470 = vset.pattern.permute.xlu0 0
        %471 = vperm.xlu0 %470, %v441
        %v472 = vpop.permute.xlu0 %471
        %475 = vset.pattern.permute.xlu0 0
        %476 = vperm.xlu0 %475, %v442
        %v477 = vpop.permute.xlu0 %476
        %480 = vset.pattern.permute.xlu0 0
        %481 = vperm.xlu0 %480, %v443
        %v482 = vpop.permute.xlu0 %481
        %vm484 = vcmask 261120
        %v486 = vsel %vm484, %v412, 0
        %v489 = vsel %vm484, %v413, 0
        %v492 = vsel %vm484, %v414, 0
        %v495 = vsel %vm484, %v415, 0
        %v498 = vsel %vm484, %v416, 0
        %v501 = vsel %vm484, %v417, 0
        %v504 = vsel %vm484, %v418, 0
        %v507 = vsel %vm484, %v419, 0
        %509 = vmatpush.msra.mxu0 0.0
        %510 = vmatpush.msra.mxu0 0.0
        %511 = vmatpush.msra.mxu0 0.0
        %512 = vmatpush.msra.mxu0 0.0
        %513 = vmatpush.msra.mxu0 0.0
        %514 = vmatpush.msra.mxu0 0.0
        %515 = vmatpush.msra.mxu0 0.0
        %516 = vmatpush.msra.mxu0 0.0
        %517 = vmatpush.msra.mxu0 0.0
        %518 = vmatpush.msra.mxu0 0.0
        %519 = vmatpush.msra.mxu0 0.0
        %520 = vmatpush.msra.mxu0 0.0
        %v521 = vand.u32 %v432, 4294901760
        %522 = vmatpush.msra.mxu0 %v521
        %v523 = vand.u32 %v428, 4294901760
        %524 = vmatpush.msra.mxu0 %v523
        %v525 = vand.u32 %v424, 4294901760
        %526 = vmatpush.msra.mxu0 %v525
        %v527 = vand.u32 %v420, 4294901760
        %528 = vmatpush.msra.mxu0 %v527
        %v529 = vand.u32 %v486, 4294901760
        %v530 = vsub.f32 %v486, %v529
        %v531 = vand.u32 %v530, 4294901760
        %v532 = vsub.f32 %v530, %v531
        %v533 = vand.u32 %v532, 4294901760
        %534 = vmatmul.f32.gmra.mxu0 %v533
        %v535 = vpop.f32.mrf.mxu0
        %v536 = vadd.f32 %v447, %v535
        %v537 = vand.u32 %v489, 4294901760
        %v538 = vsub.f32 %v489, %v537
        %v539 = vand.u32 %v538, 4294901760
        %v540 = vsub.f32 %v538, %v539
        %v541 = vand.u32 %v540, 4294901760
        %542 = vmatmul.f32.gmra.mxu0 %v541
        %v543 = vpop.f32.mrf.mxu0
        %v544 = vadd.f32 %v452, %v543
        %v545 = vand.u32 %v492, 4294901760
        %v546 = vsub.f32 %v492, %v545
        %v547 = vand.u32 %v546, 4294901760
        %v548 = vsub.f32 %v546, %v547
        %v549 = vand.u32 %v548, 4294901760
        %550 = vmatmul.f32.gmra.mxu0 %v549
        %v551 = vpop.f32.mrf.mxu0
        %v552 = vadd.f32 %v457, %v551
        %v553 = vand.u32 %v495, 4294901760
        %v554 = vsub.f32 %v495, %v553
        %v555 = vand.u32 %v554, 4294901760
        %v556 = vsub.f32 %v554, %v555
        %v557 = vand.u32 %v556, 4294901760
        %558 = vmatmul.f32.gmra.mxu0 %v557
        %v559 = vpop.f32.mrf.mxu0
        %v560 = vadd.f32 %v462, %v559
        %v561 = vand.u32 %v498, 4294901760
        %v562 = vsub.f32 %v498, %v561
        %v563 = vand.u32 %v562, 4294901760
        %v564 = vsub.f32 %v562, %v563
        %v565 = vand.u32 %v564, 4294901760
        %566 = vmatmul.f32.gmra.mxu0 %v565
        %v567 = vpop.f32.mrf.mxu0
        %v568 = vadd.f32 %v467, %v567
        %v569 = vand.u32 %v501, 4294901760
        %v570 = vsub.f32 %v501, %v569
        %v571 = vand.u32 %v570, 4294901760
        %v572 = vsub.f32 %v570, %v571
        %v573 = vand.u32 %v572, 4294901760
        %574 = vmatmul.f32.gmra.mxu0 %v573
        %v575 = vpop.f32.mrf.mxu0
        %v576 = vadd.f32 %v472, %v575
        %v577 = vand.u32 %v504, 4294901760
        %v578 = vsub.f32 %v504, %v577
        %v579 = vand.u32 %v578, 4294901760
        %v580 = vsub.f32 %v578, %v579
        %v581 = vand.u32 %v580, 4294901760
        %582 = vmatmul.f32.gmra.mxu0 %v581
        %v583 = vpop.f32.mrf.mxu0
        %v584 = vadd.f32 %v477, %v583
        %v585 = vand.u32 %v507, 4294901760
        %v586 = vsub.f32 %v507, %v585
        %v587 = vand.u32 %v586, 4294901760
        %v588 = vsub.f32 %v586, %v587
        %v589 = vand.u32 %v588, 4294901760
        %590 = vmatmul.f32.gmra.mxu0 %v589
        %v591 = vpop.f32.mrf.mxu0
        %v592 = vadd.f32 %v482, %v591
        %593 = vdwg.mxu0
        %594 = vmatpush.msra.mxu0 0.0
        %595 = vmatpush.msra.mxu0 0.0
        %596 = vmatpush.msra.mxu0 0.0
        %597 = vmatpush.msra.mxu0 0.0
        %598 = vmatpush.msra.mxu0 0.0
        %599 = vmatpush.msra.mxu0 0.0
        %600 = vmatpush.msra.mxu0 0.0
        %601 = vmatpush.msra.mxu0 0.0
        %602 = vmatpush.msra.mxu0 0.0
        %603 = vmatpush.msra.mxu0 0.0
        %604 = vmatpush.msra.mxu0 0.0
        %605 = vmatpush.msra.mxu0 0.0
        %v606 = vand.u32 %v432, 4294901760
        %v607 = vsub.f32 %v432, %v606
        %v608 = vand.u32 %v607, 4294901760
        %v609 = vsub.f32 %v607, %v608
        %v610 = vand.u32 %v609, 4294901760
        %611 = vmatpush.msra.mxu0 %v610
        %v612 = vand.u32 %v428, 4294901760
        %v613 = vsub.f32 %v428, %v612
        %v614 = vand.u32 %v613, 4294901760
        %v615 = vsub.f32 %v613, %v614
        %v616 = vand.u32 %v615, 4294901760
        %617 = vmatpush.msra.mxu0 %v616
        %v618 = vand.u32 %v424, 4294901760
        %v619 = vsub.f32 %v424, %v618
        %v620 = vand.u32 %v619, 4294901760
        %v621 = vsub.f32 %v619, %v620
        %v622 = vand.u32 %v621, 4294901760
        %623 = vmatpush.msra.mxu0 %v622
        %v624 = vand.u32 %v420, 4294901760
        %v625 = vsub.f32 %v420, %v624
        %v626 = vand.u32 %v625, 4294901760
        %v627 = vsub.f32 %v625, %v626
        %v628 = vand.u32 %v627, 4294901760
        %629 = vmatpush.msra.mxu0 %v628
        %v630 = vand.u32 %v486, 4294901760
        %631 = vmatmul.f32.gmra.mxu0 %v630
        %v632 = vpop.f32.mrf.mxu0
        %v633 = vadd.f32 %v536, %v632
        %v634 = vand.u32 %v489, 4294901760
        %635 = vmatmul.f32.gmra.mxu0 %v634
        %v636 = vpop.f32.mrf.mxu0
        %v637 = vadd.f32 %v544, %v636
        %v638 = vand.u32 %v492, 4294901760
        %639 = vmatmul.f32.gmra.mxu0 %v638
        %v640 = vpop.f32.mrf.mxu0
        %v641 = vadd.f32 %v552, %v640
        %v642 = vand.u32 %v495, 4294901760
        %643 = vmatmul.f32.gmra.mxu0 %v642
        %v644 = vpop.f32.mrf.mxu0
        %v645 = vadd.f32 %v560, %v644
        %v646 = vand.u32 %v498, 4294901760
        %647 = vmatmul.f32.gmra.mxu0 %v646
        %v648 = vpop.f32.mrf.mxu0
        %v649 = vadd.f32 %v568, %v648
        %v650 = vand.u32 %v501, 4294901760
        %651 = vmatmul.f32.gmra.mxu0 %v650
        %v652 = vpop.f32.mrf.mxu0
        %v653 = vadd.f32 %v576, %v652
        %v654 = vand.u32 %v504, 4294901760
        %655 = vmatmul.f32.gmra.mxu0 %v654
        %v656 = vpop.f32.mrf.mxu0
        %v657 = vadd.f32 %v584, %v656
        %v658 = vand.u32 %v507, 4294901760
        %659 = vmatmul.f32.gmra.mxu0 %v658
        %v660 = vpop.f32.mrf.mxu0
        %v661 = vadd.f32 %v592, %v660
        %662 = vdwg.mxu0
        %663 = vmatpush.msra.mxu0 0.0
        %664 = vmatpush.msra.mxu0 0.0
        %665 = vmatpush.msra.mxu0 0.0
        %666 = vmatpush.msra.mxu0 0.0
        %667 = vmatpush.msra.mxu0 0.0
        %668 = vmatpush.msra.mxu0 0.0
        %669 = vmatpush.msra.mxu0 0.0
        %670 = vmatpush.msra.mxu0 0.0
        %671 = vmatpush.msra.mxu0 0.0
        %672 = vmatpush.msra.mxu0 0.0
        %673 = vmatpush.msra.mxu0 0.0
        %674 = vmatpush.msra.mxu0 0.0
        %v675 = vand.u32 %v432, 4294901760
        %v676 = vsub.f32 %v432, %v675
        %677 = vmatpush.msra.mxu0 %v676
        %v678 = vand.u32 %v428, 4294901760
        %v679 = vsub.f32 %v428, %v678
        %680 = vmatpush.msra.mxu0 %v679
        %v681 = vand.u32 %v424, 4294901760
        %v682 = vsub.f32 %v424, %v681
        %683 = vmatpush.msra.mxu0 %v682
        %v684 = vand.u32 %v420, 4294901760
        %v685 = vsub.f32 %v420, %v684
        %686 = vmatpush.msra.mxu0 %v685
        %v687 = vand.u32 %v486, 4294901760
        %v688 = vsub.f32 %v486, %v687
        %689 = vmatmul.f32.gmra.mxu0 %v688
        %v690 = vpop.f32.mrf.mxu0
        %v691 = vadd.f32 %v633, %v690
        %v692 = vand.u32 %v489, 4294901760
        %v693 = vsub.f32 %v489, %v692
        %694 = vmatmul.f32.gmra.mxu0 %v693
        %v695 = vpop.f32.mrf.mxu0
        %v696 = vadd.f32 %v637, %v695
        %v697 = vand.u32 %v492, 4294901760
        %v698 = vsub.f32 %v492, %v697
        %699 = vmatmul.f32.gmra.mxu0 %v698
        %v700 = vpop.f32.mrf.mxu0
        %v701 = vadd.f32 %v641, %v700
        %v702 = vand.u32 %v495, 4294901760
        %v703 = vsub.f32 %v495, %v702
        %704 = vmatmul.f32.gmra.mxu0 %v703
        %v705 = vpop.f32.mrf.mxu0
        %v706 = vadd.f32 %v645, %v705
        %v707 = vand.u32 %v498, 4294901760
        %v708 = vsub.f32 %v498, %v707
        %709 = vmatmul.f32.gmra.mxu0 %v708
        %v710 = vpop.f32.mrf.mxu0
        %v711 = vadd.f32 %v649, %v710
        %v712 = vand.u32 %v501, 4294901760
        %v713 = vsub.f32 %v501, %v712
        %714 = vmatmul.f32.gmra.mxu0 %v713
        %v715 = vpop.f32.mrf.mxu0
        %v716 = vadd.f32 %v653, %v715
        %v717 = vand.u32 %v504, 4294901760
        %v718 = vsub.f32 %v504, %v717
        %719 = vmatmul.f32.gmra.mxu0 %v718
        %v720 = vpop.f32.mrf.mxu0
        %v721 = vadd.f32 %v657, %v720
        %v722 = vand.u32 %v507, 4294901760
        %v723 = vsub.f32 %v507, %v722
        %724 = vmatmul.f32.gmra.mxu0 %v723
        %v725 = vpop.f32.mrf.mxu0
        %v726 = vadd.f32 %v661, %v725
        %727 = vdwg.mxu0
        %728 = vmatpush.msra.mxu0 0.0
        %729 = vmatpush.msra.mxu0 0.0
        %730 = vmatpush.msra.mxu0 0.0
        %731 = vmatpush.msra.mxu0 0.0
        %732 = vmatpush.msra.mxu0 0.0
        %733 = vmatpush.msra.mxu0 0.0
        %734 = vmatpush.msra.mxu0 0.0
        %735 = vmatpush.msra.mxu0 0.0
        %736 = vmatpush.msra.mxu0 0.0
        %737 = vmatpush.msra.mxu0 0.0
        %738 = vmatpush.msra.mxu0 0.0
        %739 = vmatpush.msra.mxu0 0.0
        %v740 = vand.u32 %v432, 4294901760
        %741 = vmatpush.msra.mxu0 %v740
        %v742 = vand.u32 %v428, 4294901760
        %743 = vmatpush.msra.mxu0 %v742
        %v744 = vand.u32 %v424, 4294901760
        %745 = vmatpush.msra.mxu0 %v744
        %v746 = vand.u32 %v420, 4294901760
        %747 = vmatpush.msra.mxu0 %v746
        %v748 = vand.u32 %v486, 4294901760
        %v749 = vsub.f32 %v486, %v748
        %v750 = vand.u32 %v749, 4294901760
        %751 = vmatmul.f32.gmra.mxu0 %v750
        %v752 = vpop.f32.mrf.mxu0
        %v753 = vadd.f32 %v691, %v752
        %v754 = vand.u32 %v489, 4294901760
        %v755 = vsub.f32 %v489, %v754
        %v756 = vand.u32 %v755, 4294901760
        %757 = vmatmul.f32.gmra.mxu0 %v756
        %v758 = vpop.f32.mrf.mxu0
        %v759 = vadd.f32 %v696, %v758
        %v760 = vand.u32 %v492, 4294901760
        %v761 = vsub.f32 %v492, %v760
        %v762 = vand.u32 %v761, 4294901760
        %763 = vmatmul.f32.gmra.mxu0 %v762
        %v764 = vpop.f32.mrf.mxu0
        %v765 = vadd.f32 %v701, %v764
        %v766 = vand.u32 %v495, 4294901760
        %v767 = vsub.f32 %v495, %v766
        %v768 = vand.u32 %v767, 4294901760
        %769 = vmatmul.f32.gmra.mxu0 %v768
        %v770 = vpop.f32.mrf.mxu0
        %v771 = vadd.f32 %v706, %v770
        %v772 = vand.u32 %v498, 4294901760
        %v773 = vsub.f32 %v498, %v772
        %v774 = vand.u32 %v773, 4294901760
        %775 = vmatmul.f32.gmra.mxu0 %v774
        %v776 = vpop.f32.mrf.mxu0
        %v777 = vadd.f32 %v711, %v776
        %v778 = vand.u32 %v501, 4294901760
        %v779 = vsub.f32 %v501, %v778
        %v780 = vand.u32 %v779, 4294901760
        %781 = vmatmul.f32.gmra.mxu0 %v780
        %v782 = vpop.f32.mrf.mxu0
        %v783 = vadd.f32 %v716, %v782
        %v784 = vand.u32 %v504, 4294901760
        %v785 = vsub.f32 %v504, %v784
        %v786 = vand.u32 %v785, 4294901760
        %787 = vmatmul.f32.gmra.mxu0 %v786
        %v788 = vpop.f32.mrf.mxu0
        %v789 = vadd.f32 %v721, %v788
        %v790 = vand.u32 %v507, 4294901760
        %v791 = vsub.f32 %v507, %v790
        %v792 = vand.u32 %v791, 4294901760
        %793 = vmatmul.f32.gmra.mxu0 %v792
        %v794 = vpop.f32.mrf.mxu0
        %v795 = vadd.f32 %v726, %v794
        %796 = vdwg.mxu0
        %797 = vmatpush.msra.mxu0 0.0
        %798 = vmatpush.msra.mxu0 0.0
        %799 = vmatpush.msra.mxu0 0.0
        %800 = vmatpush.msra.mxu0 0.0
        %801 = vmatpush.msra.mxu0 0.0
        %802 = vmatpush.msra.mxu0 0.0
        %803 = vmatpush.msra.mxu0 0.0
        %804 = vmatpush.msra.mxu0 0.0
        %805 = vmatpush.msra.mxu0 0.0
        %806 = vmatpush.msra.mxu0 0.0
        %807 = vmatpush.msra.mxu0 0.0
        %808 = vmatpush.msra.mxu0 0.0
        %v809 = vand.u32 %v432, 4294901760
        %v810 = vsub.f32 %v432, %v809
        %v811 = vand.u32 %v810, 4294901760
        %812 = vmatpush.msra.mxu0 %v811
        %v813 = vand.u32 %v428, 4294901760
        %v814 = vsub.f32 %v428, %v813
        %v815 = vand.u32 %v814, 4294901760
        %816 = vmatpush.msra.mxu0 %v815
        %v817 = vand.u32 %v424, 4294901760
        %v818 = vsub.f32 %v424, %v817
        %v819 = vand.u32 %v818, 4294901760
        %820 = vmatpush.msra.mxu0 %v819
        %v821 = vand.u32 %v420, 4294901760
        %v822 = vsub.f32 %v420, %v821
        %v823 = vand.u32 %v822, 4294901760
        %824 = vmatpush.msra.mxu0 %v823
        %v825 = vand.u32 %v486, 4294901760
        %826 = vmatmul.f32.gmra.mxu0 %v825
        %v827 = vpop.f32.mrf.mxu0
        %v828 = vadd.f32 %v753, %v827
        %v829 = vand.u32 %v489, 4294901760
        %830 = vmatmul.f32.gmra.mxu0 %v829
        %v831 = vpop.f32.mrf.mxu0
        %v832 = vadd.f32 %v759, %v831
        %v833 = vand.u32 %v492, 4294901760
        %834 = vmatmul.f32.gmra.mxu0 %v833
        %v835 = vpop.f32.mrf.mxu0
        %v836 = vadd.f32 %v765, %v835
        %v837 = vand.u32 %v495, 4294901760
        %838 = vmatmul.f32.gmra.mxu0 %v837
        %v839 = vpop.f32.mrf.mxu0
        %v840 = vadd.f32 %v771, %v839
        %v841 = vand.u32 %v498, 4294901760
        %842 = vmatmul.f32.gmra.mxu0 %v841
        %v843 = vpop.f32.mrf.mxu0
        %v844 = vadd.f32 %v777, %v843
        %v845 = vand.u32 %v501, 4294901760
        %846 = vmatmul.f32.gmra.mxu0 %v845
        %v847 = vpop.f32.mrf.mxu0
        %v848 = vadd.f32 %v783, %v847
        %v849 = vand.u32 %v504, 4294901760
        %850 = vmatmul.f32.gmra.mxu0 %v849
        %v851 = vpop.f32.mrf.mxu0
        %v852 = vadd.f32 %v789, %v851
        %v853 = vand.u32 %v507, 4294901760
        %854 = vmatmul.f32.gmra.mxu0 %v853
        %v855 = vpop.f32.mrf.mxu0
        %v856 = vadd.f32 %v795, %v855
        %857 = vdwg.mxu0
        %858 = vmatpush.msra.mxu0 0.0
        %859 = vmatpush.msra.mxu0 0.0
        %860 = vmatpush.msra.mxu0 0.0
        %861 = vmatpush.msra.mxu0 0.0
        %862 = vmatpush.msra.mxu0 0.0
        %863 = vmatpush.msra.mxu0 0.0
        %864 = vmatpush.msra.mxu0 0.0
        %865 = vmatpush.msra.mxu0 0.0
        %866 = vmatpush.msra.mxu0 0.0
        %867 = vmatpush.msra.mxu0 0.0
        %868 = vmatpush.msra.mxu0 0.0
        %869 = vmatpush.msra.mxu0 0.0
        %v870 = vand.u32 %v432, 4294901760
        %871 = vmatpush.msra.mxu0 %v870
        %v872 = vand.u32 %v428, 4294901760
        %873 = vmatpush.msra.mxu0 %v872
        %v874 = vand.u32 %v424, 4294901760
        %875 = vmatpush.msra.mxu0 %v874
        %v876 = vand.u32 %v420, 4294901760
        %877 = vmatpush.msra.mxu0 %v876
        %v878 = vand.u32 %v486, 4294901760
        %879 = vmatmul.f32.gmra.mxu0 %v878
        %v880 = vpop.f32.mrf.mxu0
        %v881 = vadd.f32 %v828, %v880
        %v882 = vand.u32 %v489, 4294901760
        %883 = vmatmul.f32.gmra.mxu0 %v882
        %v884 = vpop.f32.mrf.mxu0
        %v885 = vadd.f32 %v832, %v884
        %v886 = vand.u32 %v492, 4294901760
        %887 = vmatmul.f32.gmra.mxu0 %v886
        %v888 = vpop.f32.mrf.mxu0
        %v889 = vadd.f32 %v836, %v888
        %v890 = vand.u32 %v495, 4294901760
        %891 = vmatmul.f32.gmra.mxu0 %v890
        %v892 = vpop.f32.mrf.mxu0
        %v893 = vadd.f32 %v840, %v892
        %v894 = vand.u32 %v498, 4294901760
        %895 = vmatmul.f32.gmra.mxu0 %v894
        %v896 = vpop.f32.mrf.mxu0
        %v897 = vadd.f32 %v844, %v896
        %v898 = vand.u32 %v501, 4294901760
        %899 = vmatmul.f32.gmra.mxu0 %v898
        %v900 = vpop.f32.mrf.mxu0
        %v901 = vadd.f32 %v848, %v900
        %v902 = vand.u32 %v504, 4294901760
        %903 = vmatmul.f32.gmra.mxu0 %v902
        %v904 = vpop.f32.mrf.mxu0
        %v905 = vadd.f32 %v852, %v904
        %v906 = vand.u32 %v507, 4294901760
        %907 = vmatmul.f32.gmra.mxu0 %v906
        %v908 = vpop.f32.mrf.mxu0
        %v909 = vadd.f32 %v856, %v908
        %910 = vdwg.mxu0
        %911 = vmatpush.msra.mxu0 0.0
        %912 = vmatpush.msra.mxu0 0.0
        %913 = vmatpush.msra.mxu0 0.0
        %914 = vmatpush.msra.mxu0 0.0
        %915 = vmatpush.msra.mxu0 0.0
        %916 = vmatpush.msra.mxu0 0.0
        %917 = vmatpush.msra.mxu0 0.0
        %918 = vmatpush.msra.mxu0 0.0
        %919 = vmatpush.msra.mxu0 0.0
        %920 = vmatpush.msra.mxu0 0.0
        %921 = vmatpush.msra.mxu0 0.0
        %922 = vmatpush.msra.mxu0 0.0
        %v923 = vand.u32 %v433, 4294901760
        %924 = vmatpush.msra.mxu0 %v923
        %v925 = vand.u32 %v429, 4294901760
        %926 = vmatpush.msra.mxu0 %v925
        %v927 = vand.u32 %v425, 4294901760
        %928 = vmatpush.msra.mxu0 %v927
        %v929 = vand.u32 %v421, 4294901760
        %930 = vmatpush.msra.mxu0 %v929
        %v931 = vand.u32 %v486, 4294901760
        %v932 = vsub.f32 %v486, %v931
        %v933 = vand.u32 %v932, 4294901760
        %v934 = vsub.f32 %v932, %v933
        %v935 = vand.u32 %v934, 4294901760
        %936 = vmatmul.f32.gmra.mxu0 %v935
        %v937 = vpop.f32.mrf.mxu0
        %v938 = vadd.f32 %v447, %v937
        %v939 = vand.u32 %v489, 4294901760
        %v940 = vsub.f32 %v489, %v939
        %v941 = vand.u32 %v940, 4294901760
        %v942 = vsub.f32 %v940, %v941
        %v943 = vand.u32 %v942, 4294901760
        %944 = vmatmul.f32.gmra.mxu0 %v943
        %v945 = vpop.f32.mrf.mxu0
        %v946 = vadd.f32 %v452, %v945
        %v947 = vand.u32 %v492, 4294901760
        %v948 = vsub.f32 %v492, %v947
        %v949 = vand.u32 %v948, 4294901760
        %v950 = vsub.f32 %v948, %v949
        %v951 = vand.u32 %v950, 4294901760
        %952 = vmatmul.f32.gmra.mxu0 %v951
        %v953 = vpop.f32.mrf.mxu0
        %v954 = vadd.f32 %v457, %v953
        %v955 = vand.u32 %v495, 4294901760
        %v956 = vsub.f32 %v495, %v955
        %v957 = vand.u32 %v956, 4294901760
        %v958 = vsub.f32 %v956, %v957
        %v959 = vand.u32 %v958, 4294901760
        %960 = vmatmul.f32.gmra.mxu0 %v959
        %v961 = vpop.f32.mrf.mxu0
        %v962 = vadd.f32 %v462, %v961
        %v963 = vand.u32 %v498, 4294901760
        %v964 = vsub.f32 %v498, %v963
        %v965 = vand.u32 %v964, 4294901760
        %v966 = vsub.f32 %v964, %v965
        %v967 = vand.u32 %v966, 4294901760
        %968 = vmatmul.f32.gmra.mxu0 %v967
        %v969 = vpop.f32.mrf.mxu0
        %v970 = vadd.f32 %v467, %v969
        %v971 = vand.u32 %v501, 4294901760
        %v972 = vsub.f32 %v501, %v971
        %v973 = vand.u32 %v972, 4294901760
        %v974 = vsub.f32 %v972, %v973
        %v975 = vand.u32 %v974, 4294901760
        %976 = vmatmul.f32.gmra.mxu0 %v975
        %v977 = vpop.f32.mrf.mxu0
        %v978 = vadd.f32 %v472, %v977
        %v979 = vand.u32 %v504, 4294901760
        %v980 = vsub.f32 %v504, %v979
        %v981 = vand.u32 %v980, 4294901760
        %v982 = vsub.f32 %v980, %v981
        %v983 = vand.u32 %v982, 4294901760
        %984 = vmatmul.f32.gmra.mxu0 %v983
        %v985 = vpop.f32.mrf.mxu0
        %v986 = vadd.f32 %v477, %v985
        %v987 = vand.u32 %v507, 4294901760
        %v988 = vsub.f32 %v507, %v987
        %v989 = vand.u32 %v988, 4294901760
        %v990 = vsub.f32 %v988, %v989
        %v991 = vand.u32 %v990, 4294901760
        %992 = vmatmul.f32.gmra.mxu0 %v991
        %v993 = vpop.f32.mrf.mxu0
        %v994 = vadd.f32 %v482, %v993
        %995 = vdwg.mxu0
        %996 = vmatpush.msra.mxu0 0.0
        %997 = vmatpush.msra.mxu0 0.0
        %998 = vmatpush.msra.mxu0 0.0
        %999 = vmatpush.msra.mxu0 0.0
        %1000 = vmatpush.msra.mxu0 0.0
        %1001 = vmatpush.msra.mxu0 0.0
        %1002 = vmatpush.msra.mxu0 0.0
        %1003 = vmatpush.msra.mxu0 0.0
        %1004 = vmatpush.msra.mxu0 0.0
        %1005 = vmatpush.msra.mxu0 0.0
        %1006 = vmatpush.msra.mxu0 0.0
        %1007 = vmatpush.msra.mxu0 0.0
        %v1008 = vand.u32 %v433, 4294901760
        %v1009 = vsub.f32 %v433, %v1008
        %v1010 = vand.u32 %v1009, 4294901760
        %v1011 = vsub.f32 %v1009, %v1010
        %v1012 = vand.u32 %v1011, 4294901760
        %1013 = vmatpush.msra.mxu0 %v1012
        %v1014 = vand.u32 %v429, 4294901760
        %v1015 = vsub.f32 %v429, %v1014
        %v1016 = vand.u32 %v1015, 4294901760
        %v1017 = vsub.f32 %v1015, %v1016
        %v1018 = vand.u32 %v1017, 4294901760
        %1019 = vmatpush.msra.mxu0 %v1018
        %v1020 = vand.u32 %v425, 4294901760
        %v1021 = vsub.f32 %v425, %v1020
        %v1022 = vand.u32 %v1021, 4294901760
        %v1023 = vsub.f32 %v1021, %v1022
        %v1024 = vand.u32 %v1023, 4294901760
        %1025 = vmatpush.msra.mxu0 %v1024
        %v1026 = vand.u32 %v421, 4294901760
        %v1027 = vsub.f32 %v421, %v1026
        %v1028 = vand.u32 %v1027, 4294901760
        %v1029 = vsub.f32 %v1027, %v1028
        %v1030 = vand.u32 %v1029, 4294901760
        %1031 = vmatpush.msra.mxu0 %v1030
        %v1032 = vand.u32 %v486, 4294901760
        %1033 = vmatmul.f32.gmra.mxu0 %v1032
        %v1034 = vpop.f32.mrf.mxu0
        %v1035 = vadd.f32 %v938, %v1034
        %v1036 = vand.u32 %v489, 4294901760
        %1037 = vmatmul.f32.gmra.mxu0 %v1036
        %v1038 = vpop.f32.mrf.mxu0
        %v1039 = vadd.f32 %v946, %v1038
        %v1040 = vand.u32 %v492, 4294901760
        %1041 = vmatmul.f32.gmra.mxu0 %v1040
        %v1042 = vpop.f32.mrf.mxu0
        %v1043 = vadd.f32 %v954, %v1042
        %v1044 = vand.u32 %v495, 4294901760
        %1045 = vmatmul.f32.gmra.mxu0 %v1044
        %v1046 = vpop.f32.mrf.mxu0
        %v1047 = vadd.f32 %v962, %v1046
        %v1048 = vand.u32 %v498, 4294901760
        %1049 = vmatmul.f32.gmra.mxu0 %v1048
        %v1050 = vpop.f32.mrf.mxu0
        %v1051 = vadd.f32 %v970, %v1050
        %v1052 = vand.u32 %v501, 4294901760
        %1053 = vmatmul.f32.gmra.mxu0 %v1052
        %v1054 = vpop.f32.mrf.mxu0
        %v1055 = vadd.f32 %v978, %v1054
        %v1056 = vand.u32 %v504, 4294901760
        %1057 = vmatmul.f32.gmra.mxu0 %v1056
        %v1058 = vpop.f32.mrf.mxu0
        %v1059 = vadd.f32 %v986, %v1058
        %v1060 = vand.u32 %v507, 4294901760
        %1061 = vmatmul.f32.gmra.mxu0 %v1060
        %v1062 = vpop.f32.mrf.mxu0
        %v1063 = vadd.f32 %v994, %v1062
        %1064 = vdwg.mxu0
        %1065 = vmatpush.msra.mxu0 0.0
        %1066 = vmatpush.msra.mxu0 0.0
        %1067 = vmatpush.msra.mxu0 0.0
        %1068 = vmatpush.msra.mxu0 0.0
        %1069 = vmatpush.msra.mxu0 0.0
        %1070 = vmatpush.msra.mxu0 0.0
        %1071 = vmatpush.msra.mxu0 0.0
        %1072 = vmatpush.msra.mxu0 0.0
        %1073 = vmatpush.msra.mxu0 0.0
        %1074 = vmatpush.msra.mxu0 0.0
        %1075 = vmatpush.msra.mxu0 0.0
        %1076 = vmatpush.msra.mxu0 0.0
        %v1077 = vand.u32 %v433, 4294901760
        %v1078 = vsub.f32 %v433, %v1077
        %1079 = vmatpush.msra.mxu0 %v1078
        %v1080 = vand.u32 %v429, 4294901760
        %v1081 = vsub.f32 %v429, %v1080
        %1082 = vmatpush.msra.mxu0 %v1081
        %v1083 = vand.u32 %v425, 4294901760
        %v1084 = vsub.f32 %v425, %v1083
        %1085 = vmatpush.msra.mxu0 %v1084
        %v1086 = vand.u32 %v421, 4294901760
        %v1087 = vsub.f32 %v421, %v1086
        %1088 = vmatpush.msra.mxu0 %v1087
        %v1089 = vand.u32 %v486, 4294901760
        %v1090 = vsub.f32 %v486, %v1089
        %1091 = vmatmul.f32.gmra.mxu0 %v1090
        %v1092 = vpop.f32.mrf.mxu0
        %v1093 = vadd.f32 %v1035, %v1092
        %v1094 = vand.u32 %v489, 4294901760
        %v1095 = vsub.f32 %v489, %v1094
        %1096 = vmatmul.f32.gmra.mxu0 %v1095
        %v1097 = vpop.f32.mrf.mxu0
        %v1098 = vadd.f32 %v1039, %v1097
        %v1099 = vand.u32 %v492, 4294901760
        %v1100 = vsub.f32 %v492, %v1099
        %1101 = vmatmul.f32.gmra.mxu0 %v1100
        %v1102 = vpop.f32.mrf.mxu0
        %v1103 = vadd.f32 %v1043, %v1102
        %v1104 = vand.u32 %v495, 4294901760
        %v1105 = vsub.f32 %v495, %v1104
        %1106 = vmatmul.f32.gmra.mxu0 %v1105
        %v1107 = vpop.f32.mrf.mxu0
        %v1108 = vadd.f32 %v1047, %v1107
        %v1109 = vand.u32 %v498, 4294901760
        %v1110 = vsub.f32 %v498, %v1109
        %1111 = vmatmul.f32.gmra.mxu0 %v1110
        %v1112 = vpop.f32.mrf.mxu0
        %v1113 = vadd.f32 %v1051, %v1112
        %v1114 = vand.u32 %v501, 4294901760
        %v1115 = vsub.f32 %v501, %v1114
        %1116 = vmatmul.f32.gmra.mxu0 %v1115
        %v1117 = vpop.f32.mrf.mxu0
        %v1118 = vadd.f32 %v1055, %v1117
        %v1119 = vand.u32 %v504, 4294901760
        %v1120 = vsub.f32 %v504, %v1119
        %1121 = vmatmul.f32.gmra.mxu0 %v1120
        %v1122 = vpop.f32.mrf.mxu0
        %v1123 = vadd.f32 %v1059, %v1122
        %v1124 = vand.u32 %v507, 4294901760
        %v1125 = vsub.f32 %v507, %v1124
        %1126 = vmatmul.f32.gmra.mxu0 %v1125
        %v1127 = vpop.f32.mrf.mxu0
        %v1128 = vadd.f32 %v1063, %v1127
        %1129 = vdwg.mxu0
        %1130 = vmatpush.msra.mxu0 0.0
        %1131 = vmatpush.msra.mxu0 0.0
        %1132 = vmatpush.msra.mxu0 0.0
        %1133 = vmatpush.msra.mxu0 0.0
        %1134 = vmatpush.msra.mxu0 0.0
        %1135 = vmatpush.msra.mxu0 0.0
        %1136 = vmatpush.msra.mxu0 0.0
        %1137 = vmatpush.msra.mxu0 0.0
        %1138 = vmatpush.msra.mxu0 0.0
        %1139 = vmatpush.msra.mxu0 0.0
        %1140 = vmatpush.msra.mxu0 0.0
        %1141 = vmatpush.msra.mxu0 0.0
        %v1142 = vand.u32 %v433, 4294901760
        %1143 = vmatpush.msra.mxu0 %v1142
        %v1144 = vand.u32 %v429, 4294901760
        %1145 = vmatpush.msra.mxu0 %v1144
        %v1146 = vand.u32 %v425, 4294901760
        %1147 = vmatpush.msra.mxu0 %v1146
        %v1148 = vand.u32 %v421, 4294901760
        %1149 = vmatpush.msra.mxu0 %v1148
        %v1150 = vand.u32 %v486, 4294901760
        %v1151 = vsub.f32 %v486, %v1150
        %v1152 = vand.u32 %v1151, 4294901760
        %1153 = vmatmul.f32.gmra.mxu0 %v1152
        %v1154 = vpop.f32.mrf.mxu0
        %v1155 = vadd.f32 %v1093, %v1154
        %v1156 = vand.u32 %v489, 4294901760
        %v1157 = vsub.f32 %v489, %v1156
        %v1158 = vand.u32 %v1157, 4294901760
        %1159 = vmatmul.f32.gmra.mxu0 %v1158
        %v1160 = vpop.f32.mrf.mxu0
        %v1161 = vadd.f32 %v1098, %v1160
        %v1162 = vand.u32 %v492, 4294901760
        %v1163 = vsub.f32 %v492, %v1162
        %v1164 = vand.u32 %v1163, 4294901760
        %1165 = vmatmul.f32.gmra.mxu0 %v1164
        %v1166 = vpop.f32.mrf.mxu0
        %v1167 = vadd.f32 %v1103, %v1166
        %v1168 = vand.u32 %v495, 4294901760
        %v1169 = vsub.f32 %v495, %v1168
        %v1170 = vand.u32 %v1169, 4294901760
        %1171 = vmatmul.f32.gmra.mxu0 %v1170
        %v1172 = vpop.f32.mrf.mxu0
        %v1173 = vadd.f32 %v1108, %v1172
        %v1174 = vand.u32 %v498, 4294901760
        %v1175 = vsub.f32 %v498, %v1174
        %v1176 = vand.u32 %v1175, 4294901760
        %1177 = vmatmul.f32.gmra.mxu0 %v1176
        %v1178 = vpop.f32.mrf.mxu0
        %v1179 = vadd.f32 %v1113, %v1178
        %v1180 = vand.u32 %v501, 4294901760
        %v1181 = vsub.f32 %v501, %v1180
        %v1182 = vand.u32 %v1181, 4294901760
        %1183 = vmatmul.f32.gmra.mxu0 %v1182
        %v1184 = vpop.f32.mrf.mxu0
        %v1185 = vadd.f32 %v1118, %v1184
        %v1186 = vand.u32 %v504, 4294901760
        %v1187 = vsub.f32 %v504, %v1186
        %v1188 = vand.u32 %v1187, 4294901760
        %1189 = vmatmul.f32.gmra.mxu0 %v1188
        %v1190 = vpop.f32.mrf.mxu0
        %v1191 = vadd.f32 %v1123, %v1190
        %v1192 = vand.u32 %v507, 4294901760
        %v1193 = vsub.f32 %v507, %v1192
        %v1194 = vand.u32 %v1193, 4294901760
        %1195 = vmatmul.f32.gmra.mxu0 %v1194
        %v1196 = vpop.f32.mrf.mxu0
        %v1197 = vadd.f32 %v1128, %v1196
        %1198 = vdwg.mxu0
        %1199 = vmatpush.msra.mxu0 0.0
        %1200 = vmatpush.msra.mxu0 0.0
        %1201 = vmatpush.msra.mxu0 0.0
        %1202 = vmatpush.msra.mxu0 0.0
        %1203 = vmatpush.msra.mxu0 0.0
        %1204 = vmatpush.msra.mxu0 0.0
        %1205 = vmatpush.msra.mxu0 0.0
        %1206 = vmatpush.msra.mxu0 0.0
        %1207 = vmatpush.msra.mxu0 0.0
        %1208 = vmatpush.msra.mxu0 0.0
        %1209 = vmatpush.msra.mxu0 0.0
        %1210 = vmatpush.msra.mxu0 0.0
        %v1211 = vand.u32 %v433, 4294901760
        %v1212 = vsub.f32 %v433, %v1211
        %v1213 = vand.u32 %v1212, 4294901760
        %1214 = vmatpush.msra.mxu0 %v1213
        %v1215 = vand.u32 %v429, 4294901760
        %v1216 = vsub.f32 %v429, %v1215
        %v1217 = vand.u32 %v1216, 4294901760
        %1218 = vmatpush.msra.mxu0 %v1217
        %v1219 = vand.u32 %v425, 4294901760
        %v1220 = vsub.f32 %v425, %v1219
        %v1221 = vand.u32 %v1220, 4294901760
        %1222 = vmatpush.msra.mxu0 %v1221
        %v1223 = vand.u32 %v421, 4294901760
        %v1224 = vsub.f32 %v421, %v1223
        %v1225 = vand.u32 %v1224, 4294901760
        %1226 = vmatpush.msra.mxu0 %v1225
        %v1227 = vand.u32 %v486, 4294901760
        %1228 = vmatmul.f32.gmra.mxu0 %v1227
        %v1229 = vpop.f32.mrf.mxu0
        %v1230 = vadd.f32 %v1155, %v1229
        %v1231 = vand.u32 %v489, 4294901760
        %1232 = vmatmul.f32.gmra.mxu0 %v1231
        %v1233 = vpop.f32.mrf.mxu0
        %v1234 = vadd.f32 %v1161, %v1233
        %v1235 = vand.u32 %v492, 4294901760
        %1236 = vmatmul.f32.gmra.mxu0 %v1235
        %v1237 = vpop.f32.mrf.mxu0
        %v1238 = vadd.f32 %v1167, %v1237
        %v1239 = vand.u32 %v495, 4294901760
        %1240 = vmatmul.f32.gmra.mxu0 %v1239
        %v1241 = vpop.f32.mrf.mxu0
        %v1242 = vadd.f32 %v1173, %v1241
        %v1243 = vand.u32 %v498, 4294901760
        %1244 = vmatmul.f32.gmra.mxu0 %v1243
        %v1245 = vpop.f32.mrf.mxu0
        %v1246 = vadd.f32 %v1179, %v1245
        %v1247 = vand.u32 %v501, 4294901760
        %1248 = vmatmul.f32.gmra.mxu0 %v1247
        %v1249 = vpop.f32.mrf.mxu0
        %v1250 = vadd.f32 %v1185, %v1249
        %v1251 = vand.u32 %v504, 4294901760
        %1252 = vmatmul.f32.gmra.mxu0 %v1251
        %v1253 = vpop.f32.mrf.mxu0
        %v1254 = vadd.f32 %v1191, %v1253
        %v1255 = vand.u32 %v507, 4294901760
        %1256 = vmatmul.f32.gmra.mxu0 %v1255
        %v1257 = vpop.f32.mrf.mxu0
        %v1258 = vadd.f32 %v1197, %v1257
        %1259 = vdwg.mxu0
        %1260 = vmatpush.msra.mxu0 0.0
        %1261 = vmatpush.msra.mxu0 0.0
        %1262 = vmatpush.msra.mxu0 0.0
        %1263 = vmatpush.msra.mxu0 0.0
        %1264 = vmatpush.msra.mxu0 0.0
        %1265 = vmatpush.msra.mxu0 0.0
        %1266 = vmatpush.msra.mxu0 0.0
        %1267 = vmatpush.msra.mxu0 0.0
        %1268 = vmatpush.msra.mxu0 0.0
        %1269 = vmatpush.msra.mxu0 0.0
        %1270 = vmatpush.msra.mxu0 0.0
        %1271 = vmatpush.msra.mxu0 0.0
        %v1272 = vand.u32 %v433, 4294901760
        %1273 = vmatpush.msra.mxu0 %v1272
        %v1274 = vand.u32 %v429, 4294901760
        %1275 = vmatpush.msra.mxu0 %v1274
        %v1276 = vand.u32 %v425, 4294901760
        %1277 = vmatpush.msra.mxu0 %v1276
        %v1278 = vand.u32 %v421, 4294901760
        %1279 = vmatpush.msra.mxu0 %v1278
        %v1280 = vand.u32 %v486, 4294901760
        %1281 = vmatmul.f32.gmra.mxu0 %v1280
        %v1282 = vpop.f32.mrf.mxu0
        %v1283 = vadd.f32 %v1230, %v1282
        %v1284 = vand.u32 %v489, 4294901760
        %1285 = vmatmul.f32.gmra.mxu0 %v1284
        %v1286 = vpop.f32.mrf.mxu0
        %v1287 = vadd.f32 %v1234, %v1286
        %v1288 = vand.u32 %v492, 4294901760
        %1289 = vmatmul.f32.gmra.mxu0 %v1288
        %v1290 = vpop.f32.mrf.mxu0
        %v1291 = vadd.f32 %v1238, %v1290
        %v1292 = vand.u32 %v495, 4294901760
        %1293 = vmatmul.f32.gmra.mxu0 %v1292
        %v1294 = vpop.f32.mrf.mxu0
        %v1295 = vadd.f32 %v1242, %v1294
        %v1296 = vand.u32 %v498, 4294901760
        %1297 = vmatmul.f32.gmra.mxu0 %v1296
        %v1298 = vpop.f32.mrf.mxu0
        %v1299 = vadd.f32 %v1246, %v1298
        %v1300 = vand.u32 %v501, 4294901760
        %1301 = vmatmul.f32.gmra.mxu0 %v1300
        %v1302 = vpop.f32.mrf.mxu0
        %v1303 = vadd.f32 %v1250, %v1302
        %v1304 = vand.u32 %v504, 4294901760
        %1305 = vmatmul.f32.gmra.mxu0 %v1304
        %v1306 = vpop.f32.mrf.mxu0
        %v1307 = vadd.f32 %v1254, %v1306
        %v1308 = vand.u32 %v507, 4294901760
        %1309 = vmatmul.f32.gmra.mxu0 %v1308
        %v1310 = vpop.f32.mrf.mxu0
        %v1311 = vadd.f32 %v1258, %v1310
        %1312 = vdwg.mxu0
        %1313 = vmatpush.msra.mxu0 0.0
        %1314 = vmatpush.msra.mxu0 0.0
        %1315 = vmatpush.msra.mxu0 0.0
        %1316 = vmatpush.msra.mxu0 0.0
        %1317 = vmatpush.msra.mxu0 0.0
        %1318 = vmatpush.msra.mxu0 0.0
        %1319 = vmatpush.msra.mxu0 0.0
        %1320 = vmatpush.msra.mxu0 0.0
        %1321 = vmatpush.msra.mxu0 0.0
        %1322 = vmatpush.msra.mxu0 0.0
        %1323 = vmatpush.msra.mxu0 0.0
        %1324 = vmatpush.msra.mxu0 0.0
        %v1325 = vand.u32 %v434, 4294901760
        %1326 = vmatpush.msra.mxu0 %v1325
        %v1327 = vand.u32 %v430, 4294901760
        %1328 = vmatpush.msra.mxu0 %v1327
        %v1329 = vand.u32 %v426, 4294901760
        %1330 = vmatpush.msra.mxu0 %v1329
        %v1331 = vand.u32 %v422, 4294901760
        %1332 = vmatpush.msra.mxu0 %v1331
        %v1333 = vand.u32 %v486, 4294901760
        %v1334 = vsub.f32 %v486, %v1333
        %v1335 = vand.u32 %v1334, 4294901760
        %v1336 = vsub.f32 %v1334, %v1335
        %v1337 = vand.u32 %v1336, 4294901760
        %1338 = vmatmul.f32.gmra.mxu0 %v1337
        %v1339 = vpop.f32.mrf.mxu0
        %v1340 = vadd.f32 %v447, %v1339
        %v1341 = vand.u32 %v489, 4294901760
        %v1342 = vsub.f32 %v489, %v1341
        %v1343 = vand.u32 %v1342, 4294901760
        %v1344 = vsub.f32 %v1342, %v1343
        %v1345 = vand.u32 %v1344, 4294901760
        %1346 = vmatmul.f32.gmra.mxu0 %v1345
        %v1347 = vpop.f32.mrf.mxu0
        %v1348 = vadd.f32 %v452, %v1347
        %v1349 = vand.u32 %v492, 4294901760
        %v1350 = vsub.f32 %v492, %v1349
        %v1351 = vand.u32 %v1350, 4294901760
        %v1352 = vsub.f32 %v1350, %v1351
        %v1353 = vand.u32 %v1352, 4294901760
        %1354 = vmatmul.f32.gmra.mxu0 %v1353
        %v1355 = vpop.f32.mrf.mxu0
        %v1356 = vadd.f32 %v457, %v1355
        %v1357 = vand.u32 %v495, 4294901760
        %v1358 = vsub.f32 %v495, %v1357
        %v1359 = vand.u32 %v1358, 4294901760
        %v1360 = vsub.f32 %v1358, %v1359
        %v1361 = vand.u32 %v1360, 4294901760
        %1362 = vmatmul.f32.gmra.mxu0 %v1361
        %v1363 = vpop.f32.mrf.mxu0
        %v1364 = vadd.f32 %v462, %v1363
        %v1365 = vand.u32 %v498, 4294901760
        %v1366 = vsub.f32 %v498, %v1365
        %v1367 = vand.u32 %v1366, 4294901760
        %v1368 = vsub.f32 %v1366, %v1367
        %v1369 = vand.u32 %v1368, 4294901760
        %1370 = vmatmul.f32.gmra.mxu0 %v1369
        %v1371 = vpop.f32.mrf.mxu0
        %v1372 = vadd.f32 %v467, %v1371
        %v1373 = vand.u32 %v501, 4294901760
        %v1374 = vsub.f32 %v501, %v1373
        %v1375 = vand.u32 %v1374, 4294901760
        %v1376 = vsub.f32 %v1374, %v1375
        %v1377 = vand.u32 %v1376, 4294901760
        %1378 = vmatmul.f32.gmra.mxu0 %v1377
        %v1379 = vpop.f32.mrf.mxu0
        %v1380 = vadd.f32 %v472, %v1379
        %v1381 = vand.u32 %v504, 4294901760
        %v1382 = vsub.f32 %v504, %v1381
        %v1383 = vand.u32 %v1382, 4294901760
        %v1384 = vsub.f32 %v1382, %v1383
        %v1385 = vand.u32 %v1384, 4294901760
        %1386 = vmatmul.f32.gmra.mxu0 %v1385
        %v1387 = vpop.f32.mrf.mxu0
        %v1388 = vadd.f32 %v477, %v1387
        %v1389 = vand.u32 %v507, 4294901760
        %v1390 = vsub.f32 %v507, %v1389
        %v1391 = vand.u32 %v1390, 4294901760
        %v1392 = vsub.f32 %v1390, %v1391
        %v1393 = vand.u32 %v1392, 4294901760
        %1394 = vmatmul.f32.gmra.mxu0 %v1393
        %v1395 = vpop.f32.mrf.mxu0
        %v1396 = vadd.f32 %v482, %v1395
        %1397 = vdwg.mxu0
        %1398 = vmatpush.msra.mxu0 0.0
        %1399 = vmatpush.msra.mxu0 0.0
        %1400 = vmatpush.msra.mxu0 0.0
        %1401 = vmatpush.msra.mxu0 0.0
        %1402 = vmatpush.msra.mxu0 0.0
        %1403 = vmatpush.msra.mxu0 0.0
        %1404 = vmatpush.msra.mxu0 0.0
        %1405 = vmatpush.msra.mxu0 0.0
        %1406 = vmatpush.msra.mxu0 0.0
        %1407 = vmatpush.msra.mxu0 0.0
        %1408 = vmatpush.msra.mxu0 0.0
        %1409 = vmatpush.msra.mxu0 0.0
        %v1410 = vand.u32 %v434, 4294901760
        %v1411 = vsub.f32 %v434, %v1410
        %v1412 = vand.u32 %v1411, 4294901760
        %v1413 = vsub.f32 %v1411, %v1412
        %v1414 = vand.u32 %v1413, 4294901760
        %1415 = vmatpush.msra.mxu0 %v1414
        %v1416 = vand.u32 %v430, 4294901760
        %v1417 = vsub.f32 %v430, %v1416
        %v1418 = vand.u32 %v1417, 4294901760
        %v1419 = vsub.f32 %v1417, %v1418
        %v1420 = vand.u32 %v1419, 4294901760
        %1421 = vmatpush.msra.mxu0 %v1420
        %v1422 = vand.u32 %v426, 4294901760
        %v1423 = vsub.f32 %v426, %v1422
        %v1424 = vand.u32 %v1423, 4294901760
        %v1425 = vsub.f32 %v1423, %v1424
        %v1426 = vand.u32 %v1425, 4294901760
        %1427 = vmatpush.msra.mxu0 %v1426
        %v1428 = vand.u32 %v422, 4294901760
        %v1429 = vsub.f32 %v422, %v1428
        %v1430 = vand.u32 %v1429, 4294901760
        %v1431 = vsub.f32 %v1429, %v1430
        %v1432 = vand.u32 %v1431, 4294901760
        %1433 = vmatpush.msra.mxu0 %v1432
        %v1434 = vand.u32 %v486, 4294901760
        %1435 = vmatmul.f32.gmra.mxu0 %v1434
        %v1436 = vpop.f32.mrf.mxu0
        %v1437 = vadd.f32 %v1340, %v1436
        %v1438 = vand.u32 %v489, 4294901760
        %1439 = vmatmul.f32.gmra.mxu0 %v1438
        %v1440 = vpop.f32.mrf.mxu0
        %v1441 = vadd.f32 %v1348, %v1440
        %v1442 = vand.u32 %v492, 4294901760
        %1443 = vmatmul.f32.gmra.mxu0 %v1442
        %v1444 = vpop.f32.mrf.mxu0
        %v1445 = vadd.f32 %v1356, %v1444
        %v1446 = vand.u32 %v495, 4294901760
        %1447 = vmatmul.f32.gmra.mxu0 %v1446
        %v1448 = vpop.f32.mrf.mxu0
        %v1449 = vadd.f32 %v1364, %v1448
        %v1450 = vand.u32 %v498, 4294901760
        %1451 = vmatmul.f32.gmra.mxu0 %v1450
        %v1452 = vpop.f32.mrf.mxu0
        %v1453 = vadd.f32 %v1372, %v1452
        %v1454 = vand.u32 %v501, 4294901760
        %1455 = vmatmul.f32.gmra.mxu0 %v1454
        %v1456 = vpop.f32.mrf.mxu0
        %v1457 = vadd.f32 %v1380, %v1456
        %v1458 = vand.u32 %v504, 4294901760
        %1459 = vmatmul.f32.gmra.mxu0 %v1458
        %v1460 = vpop.f32.mrf.mxu0
        %v1461 = vadd.f32 %v1388, %v1460
        %v1462 = vand.u32 %v507, 4294901760
        %1463 = vmatmul.f32.gmra.mxu0 %v1462
        %v1464 = vpop.f32.mrf.mxu0
        %v1465 = vadd.f32 %v1396, %v1464
        %1466 = vdwg.mxu0
        %1467 = vmatpush.msra.mxu0 0.0
        %1468 = vmatpush.msra.mxu0 0.0
        %1469 = vmatpush.msra.mxu0 0.0
        %1470 = vmatpush.msra.mxu0 0.0
        %1471 = vmatpush.msra.mxu0 0.0
        %1472 = vmatpush.msra.mxu0 0.0
        %1473 = vmatpush.msra.mxu0 0.0
        %1474 = vmatpush.msra.mxu0 0.0
        %1475 = vmatpush.msra.mxu0 0.0
        %1476 = vmatpush.msra.mxu0 0.0
        %1477 = vmatpush.msra.mxu0 0.0
        %1478 = vmatpush.msra.mxu0 0.0
        %v1479 = vand.u32 %v434, 4294901760
        %v1480 = vsub.f32 %v434, %v1479
        %1481 = vmatpush.msra.mxu0 %v1480
        %v1482 = vand.u32 %v430, 4294901760
        %v1483 = vsub.f32 %v430, %v1482
        %1484 = vmatpush.msra.mxu0 %v1483
        %v1485 = vand.u32 %v426, 4294901760
        %v1486 = vsub.f32 %v426, %v1485
        %1487 = vmatpush.msra.mxu0 %v1486
        %v1488 = vand.u32 %v422, 4294901760
        %v1489 = vsub.f32 %v422, %v1488
        %1490 = vmatpush.msra.mxu0 %v1489
        %v1491 = vand.u32 %v486, 4294901760
        %v1492 = vsub.f32 %v486, %v1491
        %1493 = vmatmul.f32.gmra.mxu0 %v1492
        %v1494 = vpop.f32.mrf.mxu0
        %v1495 = vadd.f32 %v1437, %v1494
        %v1496 = vand.u32 %v489, 4294901760
        %v1497 = vsub.f32 %v489, %v1496
        %1498 = vmatmul.f32.gmra.mxu0 %v1497
        %v1499 = vpop.f32.mrf.mxu0
        %v1500 = vadd.f32 %v1441, %v1499
        %v1501 = vand.u32 %v492, 4294901760
        %v1502 = vsub.f32 %v492, %v1501
        %1503 = vmatmul.f32.gmra.mxu0 %v1502
        %v1504 = vpop.f32.mrf.mxu0
        %v1505 = vadd.f32 %v1445, %v1504
        %v1506 = vand.u32 %v495, 4294901760
        %v1507 = vsub.f32 %v495, %v1506
        %1508 = vmatmul.f32.gmra.mxu0 %v1507
        %v1509 = vpop.f32.mrf.mxu0
        %v1510 = vadd.f32 %v1449, %v1509
        %v1511 = vand.u32 %v498, 4294901760
        %v1512 = vsub.f32 %v498, %v1511
        %1513 = vmatmul.f32.gmra.mxu0 %v1512
        %v1514 = vpop.f32.mrf.mxu0
        %v1515 = vadd.f32 %v1453, %v1514
        %v1516 = vand.u32 %v501, 4294901760
        %v1517 = vsub.f32 %v501, %v1516
        %1518 = vmatmul.f32.gmra.mxu0 %v1517
        %v1519 = vpop.f32.mrf.mxu0
        %v1520 = vadd.f32 %v1457, %v1519
        %v1521 = vand.u32 %v504, 4294901760
        %v1522 = vsub.f32 %v504, %v1521
        %1523 = vmatmul.f32.gmra.mxu0 %v1522
        %v1524 = vpop.f32.mrf.mxu0
        %v1525 = vadd.f32 %v1461, %v1524
        %v1526 = vand.u32 %v507, 4294901760
        %v1527 = vsub.f32 %v507, %v1526
        %1528 = vmatmul.f32.gmra.mxu0 %v1527
        %v1529 = vpop.f32.mrf.mxu0
        %v1530 = vadd.f32 %v1465, %v1529
        %1531 = vdwg.mxu0
        %1532 = vmatpush.msra.mxu0 0.0
        %1533 = vmatpush.msra.mxu0 0.0
        %1534 = vmatpush.msra.mxu0 0.0
        %1535 = vmatpush.msra.mxu0 0.0
        %1536 = vmatpush.msra.mxu0 0.0
        %1537 = vmatpush.msra.mxu0 0.0
        %1538 = vmatpush.msra.mxu0 0.0
        %1539 = vmatpush.msra.mxu0 0.0
        %1540 = vmatpush.msra.mxu0 0.0
        %1541 = vmatpush.msra.mxu0 0.0
        %1542 = vmatpush.msra.mxu0 0.0
        %1543 = vmatpush.msra.mxu0 0.0
        %v1544 = vand.u32 %v434, 4294901760
        %1545 = vmatpush.msra.mxu0 %v1544
        %v1546 = vand.u32 %v430, 4294901760
        %1547 = vmatpush.msra.mxu0 %v1546
        %v1548 = vand.u32 %v426, 4294901760
        %1549 = vmatpush.msra.mxu0 %v1548
        %v1550 = vand.u32 %v422, 4294901760
        %1551 = vmatpush.msra.mxu0 %v1550
        %v1552 = vand.u32 %v486, 4294901760
        %v1553 = vsub.f32 %v486, %v1552
        %v1554 = vand.u32 %v1553, 4294901760
        %1555 = vmatmul.f32.gmra.mxu0 %v1554
        %v1556 = vpop.f32.mrf.mxu0
        %v1557 = vadd.f32 %v1495, %v1556
        %v1558 = vand.u32 %v489, 4294901760
        %v1559 = vsub.f32 %v489, %v1558
        %v1560 = vand.u32 %v1559, 4294901760
        %1561 = vmatmul.f32.gmra.mxu0 %v1560
        %v1562 = vpop.f32.mrf.mxu0
        %v1563 = vadd.f32 %v1500, %v1562
        %v1564 = vand.u32 %v492, 4294901760
        %v1565 = vsub.f32 %v492, %v1564
        %v1566 = vand.u32 %v1565, 4294901760
        %1567 = vmatmul.f32.gmra.mxu0 %v1566
        %v1568 = vpop.f32.mrf.mxu0
        %v1569 = vadd.f32 %v1505, %v1568
        %v1570 = vand.u32 %v495, 4294901760
        %v1571 = vsub.f32 %v495, %v1570
        %v1572 = vand.u32 %v1571, 4294901760
        %1573 = vmatmul.f32.gmra.mxu0 %v1572
        %v1574 = vpop.f32.mrf.mxu0
        %v1575 = vadd.f32 %v1510, %v1574
        %v1576 = vand.u32 %v498, 4294901760
        %v1577 = vsub.f32 %v498, %v1576
        %v1578 = vand.u32 %v1577, 4294901760
        %1579 = vmatmul.f32.gmra.mxu0 %v1578
        %v1580 = vpop.f32.mrf.mxu0
        %v1581 = vadd.f32 %v1515, %v1580
        %v1582 = vand.u32 %v501, 4294901760
        %v1583 = vsub.f32 %v501, %v1582
        %v1584 = vand.u32 %v1583, 4294901760
        %1585 = vmatmul.f32.gmra.mxu0 %v1584
        %v1586 = vpop.f32.mrf.mxu0
        %v1587 = vadd.f32 %v1520, %v1586
        %v1588 = vand.u32 %v504, 4294901760
        %v1589 = vsub.f32 %v504, %v1588
        %v1590 = vand.u32 %v1589, 4294901760
        %1591 = vmatmul.f32.gmra.mxu0 %v1590
        %v1592 = vpop.f32.mrf.mxu0
        %v1593 = vadd.f32 %v1525, %v1592
        %v1594 = vand.u32 %v507, 4294901760
        %v1595 = vsub.f32 %v507, %v1594
        %v1596 = vand.u32 %v1595, 4294901760
        %1597 = vmatmul.f32.gmra.mxu0 %v1596
        %v1598 = vpop.f32.mrf.mxu0
        %v1599 = vadd.f32 %v1530, %v1598
        %1600 = vdwg.mxu0
        %1601 = vmatpush.msra.mxu0 0.0
        %1602 = vmatpush.msra.mxu0 0.0
        %1603 = vmatpush.msra.mxu0 0.0
        %1604 = vmatpush.msra.mxu0 0.0
        %1605 = vmatpush.msra.mxu0 0.0
        %1606 = vmatpush.msra.mxu0 0.0
        %1607 = vmatpush.msra.mxu0 0.0
        %1608 = vmatpush.msra.mxu0 0.0
        %1609 = vmatpush.msra.mxu0 0.0
        %1610 = vmatpush.msra.mxu0 0.0
        %1611 = vmatpush.msra.mxu0 0.0
        %1612 = vmatpush.msra.mxu0 0.0
        %v1613 = vand.u32 %v434, 4294901760
        %v1614 = vsub.f32 %v434, %v1613
        %v1615 = vand.u32 %v1614, 4294901760
        %1616 = vmatpush.msra.mxu0 %v1615
        %v1617 = vand.u32 %v430, 4294901760
        %v1618 = vsub.f32 %v430, %v1617
        %v1619 = vand.u32 %v1618, 4294901760
        %1620 = vmatpush.msra.mxu0 %v1619
        %v1621 = vand.u32 %v426, 4294901760
        %v1622 = vsub.f32 %v426, %v1621
        %v1623 = vand.u32 %v1622, 4294901760
        %1624 = vmatpush.msra.mxu0 %v1623
        %v1625 = vand.u32 %v422, 4294901760
        %v1626 = vsub.f32 %v422, %v1625
        %v1627 = vand.u32 %v1626, 4294901760
        %1628 = vmatpush.msra.mxu0 %v1627
        %v1629 = vand.u32 %v486, 4294901760
        %1630 = vmatmul.f32.gmra.mxu0 %v1629
        %v1631 = vpop.f32.mrf.mxu0
        %v1632 = vadd.f32 %v1557, %v1631
        %v1633 = vand.u32 %v489, 4294901760
        %1634 = vmatmul.f32.gmra.mxu0 %v1633
        %v1635 = vpop.f32.mrf.mxu0
        %v1636 = vadd.f32 %v1563, %v1635
        %v1637 = vand.u32 %v492, 4294901760
        %1638 = vmatmul.f32.gmra.mxu0 %v1637
        %v1639 = vpop.f32.mrf.mxu0
        %v1640 = vadd.f32 %v1569, %v1639
        %v1641 = vand.u32 %v495, 4294901760
        %1642 = vmatmul.f32.gmra.mxu0 %v1641
        %v1643 = vpop.f32.mrf.mxu0
        %v1644 = vadd.f32 %v1575, %v1643
        %v1645 = vand.u32 %v498, 4294901760
        %1646 = vmatmul.f32.gmra.mxu0 %v1645
        %v1647 = vpop.f32.mrf.mxu0
        %v1648 = vadd.f32 %v1581, %v1647
        %v1649 = vand.u32 %v501, 4294901760
        %1650 = vmatmul.f32.gmra.mxu0 %v1649
        %v1651 = vpop.f32.mrf.mxu0
        %v1652 = vadd.f32 %v1587, %v1651
        %v1653 = vand.u32 %v504, 4294901760
        %1654 = vmatmul.f32.gmra.mxu0 %v1653
        %v1655 = vpop.f32.mrf.mxu0
        %v1656 = vadd.f32 %v1593, %v1655
        %v1657 = vand.u32 %v507, 4294901760
        %1658 = vmatmul.f32.gmra.mxu0 %v1657
        %v1659 = vpop.f32.mrf.mxu0
        %v1660 = vadd.f32 %v1599, %v1659
        %1661 = vdwg.mxu0
        %1662 = vmatpush.msra.mxu0 0.0
        %1663 = vmatpush.msra.mxu0 0.0
        %1664 = vmatpush.msra.mxu0 0.0
        %1665 = vmatpush.msra.mxu0 0.0
        %1666 = vmatpush.msra.mxu0 0.0
        %1667 = vmatpush.msra.mxu0 0.0
        %1668 = vmatpush.msra.mxu0 0.0
        %1669 = vmatpush.msra.mxu0 0.0
        %1670 = vmatpush.msra.mxu0 0.0
        %1671 = vmatpush.msra.mxu0 0.0
        %1672 = vmatpush.msra.mxu0 0.0
        %1673 = vmatpush.msra.mxu0 0.0
        %v1674 = vand.u32 %v434, 4294901760
        %1675 = vmatpush.msra.mxu0 %v1674
        %v1676 = vand.u32 %v430, 4294901760
        %1677 = vmatpush.msra.mxu0 %v1676
        %v1678 = vand.u32 %v426, 4294901760
        %1679 = vmatpush.msra.mxu0 %v1678
        %v1680 = vand.u32 %v422, 4294901760
        %1681 = vmatpush.msra.mxu0 %v1680
        %v1682 = vand.u32 %v486, 4294901760
        %1683 = vmatmul.f32.gmra.mxu0 %v1682
        %v1684 = vpop.f32.mrf.mxu0
        %v1685 = vadd.f32 %v1632, %v1684
        %v1686 = vand.u32 %v489, 4294901760
        %1687 = vmatmul.f32.gmra.mxu0 %v1686
        %v1688 = vpop.f32.mrf.mxu0
        %v1689 = vadd.f32 %v1636, %v1688
        %v1690 = vand.u32 %v492, 4294901760
        %1691 = vmatmul.f32.gmra.mxu0 %v1690
        %v1692 = vpop.f32.mrf.mxu0
        %v1693 = vadd.f32 %v1640, %v1692
        %v1694 = vand.u32 %v495, 4294901760
        %1695 = vmatmul.f32.gmra.mxu0 %v1694
        %v1696 = vpop.f32.mrf.mxu0
        %v1697 = vadd.f32 %v1644, %v1696
        %v1698 = vand.u32 %v498, 4294901760
        %1699 = vmatmul.f32.gmra.mxu0 %v1698
        %v1700 = vpop.f32.mrf.mxu0
        %v1701 = vadd.f32 %v1648, %v1700
        %v1702 = vand.u32 %v501, 4294901760
        %1703 = vmatmul.f32.gmra.mxu0 %v1702
        %v1704 = vpop.f32.mrf.mxu0
        %v1705 = vadd.f32 %v1652, %v1704
        %v1706 = vand.u32 %v504, 4294901760
        %1707 = vmatmul.f32.gmra.mxu0 %v1706
        %v1708 = vpop.f32.mrf.mxu0
        %v1709 = vadd.f32 %v1656, %v1708
        %v1710 = vand.u32 %v507, 4294901760
        %1711 = vmatmul.f32.gmra.mxu0 %v1710
        %v1712 = vpop.f32.mrf.mxu0
        %v1713 = vadd.f32 %v1660, %v1712
        %1714 = vdwg.mxu0
        %1715 = vmatpush.msra.mxu0 0.0
        %1716 = vmatpush.msra.mxu0 0.0
        %1717 = vmatpush.msra.mxu0 0.0
        %1718 = vmatpush.msra.mxu0 0.0
        %1719 = vmatpush.msra.mxu0 0.0
        %1720 = vmatpush.msra.mxu0 0.0
        %1721 = vmatpush.msra.mxu0 0.0
        %1722 = vmatpush.msra.mxu0 0.0
        %1723 = vmatpush.msra.mxu0 0.0
        %1724 = vmatpush.msra.mxu0 0.0
        %1725 = vmatpush.msra.mxu0 0.0
        %1726 = vmatpush.msra.mxu0 0.0
        %v1727 = vand.u32 %v435, 4294901760
        %1728 = vmatpush.msra.mxu0 %v1727
        %v1729 = vand.u32 %v431, 4294901760
        %1730 = vmatpush.msra.mxu0 %v1729
        %v1731 = vand.u32 %v427, 4294901760
        %1732 = vmatpush.msra.mxu0 %v1731
        %v1733 = vand.u32 %v423, 4294901760
        %1734 = vmatpush.msra.mxu0 %v1733
        %v1735 = vand.u32 %v486, 4294901760
        %v1736 = vsub.f32 %v486, %v1735
        %v1737 = vand.u32 %v1736, 4294901760
        %v1738 = vsub.f32 %v1736, %v1737
        %v1739 = vand.u32 %v1738, 4294901760
        %1740 = vmatmul.f32.gmra.mxu0 %v1739
        %v1741 = vpop.f32.mrf.mxu0
        %v1742 = vadd.f32 %v447, %v1741
        %v1743 = vand.u32 %v489, 4294901760
        %v1744 = vsub.f32 %v489, %v1743
        %v1745 = vand.u32 %v1744, 4294901760
        %v1746 = vsub.f32 %v1744, %v1745
        %v1747 = vand.u32 %v1746, 4294901760
        %1748 = vmatmul.f32.gmra.mxu0 %v1747
        %v1749 = vpop.f32.mrf.mxu0
        %v1750 = vadd.f32 %v452, %v1749
        %v1751 = vand.u32 %v492, 4294901760
        %v1752 = vsub.f32 %v492, %v1751
        %v1753 = vand.u32 %v1752, 4294901760
        %v1754 = vsub.f32 %v1752, %v1753
        %v1755 = vand.u32 %v1754, 4294901760
        %1756 = vmatmul.f32.gmra.mxu0 %v1755
        %v1757 = vpop.f32.mrf.mxu0
        %v1758 = vadd.f32 %v457, %v1757
        %v1759 = vand.u32 %v495, 4294901760
        %v1760 = vsub.f32 %v495, %v1759
        %v1761 = vand.u32 %v1760, 4294901760
        %v1762 = vsub.f32 %v1760, %v1761
        %v1763 = vand.u32 %v1762, 4294901760
        %1764 = vmatmul.f32.gmra.mxu0 %v1763
        %v1765 = vpop.f32.mrf.mxu0
        %v1766 = vadd.f32 %v462, %v1765
        %v1767 = vand.u32 %v498, 4294901760
        %v1768 = vsub.f32 %v498, %v1767
        %v1769 = vand.u32 %v1768, 4294901760
        %v1770 = vsub.f32 %v1768, %v1769
        %v1771 = vand.u32 %v1770, 4294901760
        %1772 = vmatmul.f32.gmra.mxu0 %v1771
        %v1773 = vpop.f32.mrf.mxu0
        %v1774 = vadd.f32 %v467, %v1773
        %v1775 = vand.u32 %v501, 4294901760
        %v1776 = vsub.f32 %v501, %v1775
        %v1777 = vand.u32 %v1776, 4294901760
        %v1778 = vsub.f32 %v1776, %v1777
        %v1779 = vand.u32 %v1778, 4294901760
        %1780 = vmatmul.f32.gmra.mxu0 %v1779
        %v1781 = vpop.f32.mrf.mxu0
        %v1782 = vadd.f32 %v472, %v1781
        %v1783 = vand.u32 %v504, 4294901760
        %v1784 = vsub.f32 %v504, %v1783
        %v1785 = vand.u32 %v1784, 4294901760
        %v1786 = vsub.f32 %v1784, %v1785
        %v1787 = vand.u32 %v1786, 4294901760
        %1788 = vmatmul.f32.gmra.mxu0 %v1787
        %v1789 = vpop.f32.mrf.mxu0
        %v1790 = vadd.f32 %v477, %v1789
        %v1791 = vand.u32 %v507, 4294901760
        %v1792 = vsub.f32 %v507, %v1791
        %v1793 = vand.u32 %v1792, 4294901760
        %v1794 = vsub.f32 %v1792, %v1793
        %v1795 = vand.u32 %v1794, 4294901760
        %1796 = vmatmul.f32.gmra.mxu0 %v1795
        %v1797 = vpop.f32.mrf.mxu0
        %v1798 = vadd.f32 %v482, %v1797
        %1799 = vdwg.mxu0
        %1800 = vmatpush.msra.mxu0 0.0
        %1801 = vmatpush.msra.mxu0 0.0
        %1802 = vmatpush.msra.mxu0 0.0
        %1803 = vmatpush.msra.mxu0 0.0
        %1804 = vmatpush.msra.mxu0 0.0
        %1805 = vmatpush.msra.mxu0 0.0
        %1806 = vmatpush.msra.mxu0 0.0
        %1807 = vmatpush.msra.mxu0 0.0
        %1808 = vmatpush.msra.mxu0 0.0
        %1809 = vmatpush.msra.mxu0 0.0
        %1810 = vmatpush.msra.mxu0 0.0
        %1811 = vmatpush.msra.mxu0 0.0
        %v1812 = vand.u32 %v435, 4294901760
        %v1813 = vsub.f32 %v435, %v1812
        %v1814 = vand.u32 %v1813, 4294901760
        %v1815 = vsub.f32 %v1813, %v1814
        %v1816 = vand.u32 %v1815, 4294901760
        %1817 = vmatpush.msra.mxu0 %v1816
        %v1818 = vand.u32 %v431, 4294901760
        %v1819 = vsub.f32 %v431, %v1818
        %v1820 = vand.u32 %v1819, 4294901760
        %v1821 = vsub.f32 %v1819, %v1820
        %v1822 = vand.u32 %v1821, 4294901760
        %1823 = vmatpush.msra.mxu0 %v1822
        %v1824 = vand.u32 %v427, 4294901760
        %v1825 = vsub.f32 %v427, %v1824
        %v1826 = vand.u32 %v1825, 4294901760
        %v1827 = vsub.f32 %v1825, %v1826
        %v1828 = vand.u32 %v1827, 4294901760
        %1829 = vmatpush.msra.mxu0 %v1828
        %v1830 = vand.u32 %v423, 4294901760
        %v1831 = vsub.f32 %v423, %v1830
        %v1832 = vand.u32 %v1831, 4294901760
        %v1833 = vsub.f32 %v1831, %v1832
        %v1834 = vand.u32 %v1833, 4294901760
        %1835 = vmatpush.msra.mxu0 %v1834
        %v1836 = vand.u32 %v486, 4294901760
        %1837 = vmatmul.f32.gmra.mxu0 %v1836
        %v1838 = vpop.f32.mrf.mxu0
        %v1839 = vadd.f32 %v1742, %v1838
        %v1840 = vand.u32 %v489, 4294901760
        %1841 = vmatmul.f32.gmra.mxu0 %v1840
        %v1842 = vpop.f32.mrf.mxu0
        %v1843 = vadd.f32 %v1750, %v1842
        %v1844 = vand.u32 %v492, 4294901760
        %1845 = vmatmul.f32.gmra.mxu0 %v1844
        %v1846 = vpop.f32.mrf.mxu0
        %v1847 = vadd.f32 %v1758, %v1846
        %v1848 = vand.u32 %v495, 4294901760
        %1849 = vmatmul.f32.gmra.mxu0 %v1848
        %v1850 = vpop.f32.mrf.mxu0
        %v1851 = vadd.f32 %v1766, %v1850
        %v1852 = vand.u32 %v498, 4294901760
        %1853 = vmatmul.f32.gmra.mxu0 %v1852
        %v1854 = vpop.f32.mrf.mxu0
        %v1855 = vadd.f32 %v1774, %v1854
        %v1856 = vand.u32 %v501, 4294901760
        %1857 = vmatmul.f32.gmra.mxu0 %v1856
        %v1858 = vpop.f32.mrf.mxu0
        %v1859 = vadd.f32 %v1782, %v1858
        %v1860 = vand.u32 %v504, 4294901760
        %1861 = vmatmul.f32.gmra.mxu0 %v1860
        %v1862 = vpop.f32.mrf.mxu0
        %v1863 = vadd.f32 %v1790, %v1862
        %v1864 = vand.u32 %v507, 4294901760
        %1865 = vmatmul.f32.gmra.mxu0 %v1864
        %v1866 = vpop.f32.mrf.mxu0
        %v1867 = vadd.f32 %v1798, %v1866
        %1868 = vdwg.mxu0
        %1869 = vmatpush.msra.mxu0 0.0
        %1870 = vmatpush.msra.mxu0 0.0
        %1871 = vmatpush.msra.mxu0 0.0
        %1872 = vmatpush.msra.mxu0 0.0
        %1873 = vmatpush.msra.mxu0 0.0
        %1874 = vmatpush.msra.mxu0 0.0
        %1875 = vmatpush.msra.mxu0 0.0
        %1876 = vmatpush.msra.mxu0 0.0
        %1877 = vmatpush.msra.mxu0 0.0
        %1878 = vmatpush.msra.mxu0 0.0
        %1879 = vmatpush.msra.mxu0 0.0
        %1880 = vmatpush.msra.mxu0 0.0
        %v1881 = vand.u32 %v435, 4294901760
        %v1882 = vsub.f32 %v435, %v1881
        %1883 = vmatpush.msra.mxu0 %v1882
        %v1884 = vand.u32 %v431, 4294901760
        %v1885 = vsub.f32 %v431, %v1884
        %1886 = vmatpush.msra.mxu0 %v1885
        %v1887 = vand.u32 %v427, 4294901760
        %v1888 = vsub.f32 %v427, %v1887
        %1889 = vmatpush.msra.mxu0 %v1888
        %v1890 = vand.u32 %v423, 4294901760
        %v1891 = vsub.f32 %v423, %v1890
        %1892 = vmatpush.msra.mxu0 %v1891
        %v1893 = vand.u32 %v486, 4294901760
        %v1894 = vsub.f32 %v486, %v1893
        %1895 = vmatmul.f32.gmra.mxu0 %v1894
        %v1896 = vpop.f32.mrf.mxu0
        %v1897 = vadd.f32 %v1839, %v1896
        %v1898 = vand.u32 %v489, 4294901760
        %v1899 = vsub.f32 %v489, %v1898
        %1900 = vmatmul.f32.gmra.mxu0 %v1899
        %v1901 = vpop.f32.mrf.mxu0
        %v1902 = vadd.f32 %v1843, %v1901
        %v1903 = vand.u32 %v492, 4294901760
        %v1904 = vsub.f32 %v492, %v1903
        %1905 = vmatmul.f32.gmra.mxu0 %v1904
        %v1906 = vpop.f32.mrf.mxu0
        %v1907 = vadd.f32 %v1847, %v1906
        %v1908 = vand.u32 %v495, 4294901760
        %v1909 = vsub.f32 %v495, %v1908
        %1910 = vmatmul.f32.gmra.mxu0 %v1909
        %v1911 = vpop.f32.mrf.mxu0
        %v1912 = vadd.f32 %v1851, %v1911
        %v1913 = vand.u32 %v498, 4294901760
        %v1914 = vsub.f32 %v498, %v1913
        %1915 = vmatmul.f32.gmra.mxu0 %v1914
        %v1916 = vpop.f32.mrf.mxu0
        %v1917 = vadd.f32 %v1855, %v1916
        %v1918 = vand.u32 %v501, 4294901760
        %v1919 = vsub.f32 %v501, %v1918
        %1920 = vmatmul.f32.gmra.mxu0 %v1919
        %v1921 = vpop.f32.mrf.mxu0
        %v1922 = vadd.f32 %v1859, %v1921
        %v1923 = vand.u32 %v504, 4294901760
        %v1924 = vsub.f32 %v504, %v1923
        %1925 = vmatmul.f32.gmra.mxu0 %v1924
        %v1926 = vpop.f32.mrf.mxu0
        %v1927 = vadd.f32 %v1863, %v1926
        %v1928 = vand.u32 %v507, 4294901760
        %v1929 = vsub.f32 %v507, %v1928
        %1930 = vmatmul.f32.gmra.mxu0 %v1929
        %v1931 = vpop.f32.mrf.mxu0
        %v1932 = vadd.f32 %v1867, %v1931
        %1933 = vdwg.mxu0
        %1934 = vmatpush.msra.mxu0 0.0
        %1935 = vmatpush.msra.mxu0 0.0
        %1936 = vmatpush.msra.mxu0 0.0
        %1937 = vmatpush.msra.mxu0 0.0
        %1938 = vmatpush.msra.mxu0 0.0
        %1939 = vmatpush.msra.mxu0 0.0
        %1940 = vmatpush.msra.mxu0 0.0
        %1941 = vmatpush.msra.mxu0 0.0
        %1942 = vmatpush.msra.mxu0 0.0
        %1943 = vmatpush.msra.mxu0 0.0
        %1944 = vmatpush.msra.mxu0 0.0
        %1945 = vmatpush.msra.mxu0 0.0
        %v1946 = vand.u32 %v435, 4294901760
        %1947 = vmatpush.msra.mxu0 %v1946
        %v1948 = vand.u32 %v431, 4294901760
        %1949 = vmatpush.msra.mxu0 %v1948
        %v1950 = vand.u32 %v427, 4294901760
        %1951 = vmatpush.msra.mxu0 %v1950
        %v1952 = vand.u32 %v423, 4294901760
        %1953 = vmatpush.msra.mxu0 %v1952
        %v1954 = vand.u32 %v486, 4294901760
        %v1955 = vsub.f32 %v486, %v1954
        %v1956 = vand.u32 %v1955, 4294901760
        %1957 = vmatmul.f32.gmra.mxu0 %v1956
        %v1958 = vpop.f32.mrf.mxu0
        %v1959 = vadd.f32 %v1897, %v1958
        %v1960 = vand.u32 %v489, 4294901760
        %v1961 = vsub.f32 %v489, %v1960
        %v1962 = vand.u32 %v1961, 4294901760
        %1963 = vmatmul.f32.gmra.mxu0 %v1962
        %v1964 = vpop.f32.mrf.mxu0
        %v1965 = vadd.f32 %v1902, %v1964
        %v1966 = vand.u32 %v492, 4294901760
        %v1967 = vsub.f32 %v492, %v1966
        %v1968 = vand.u32 %v1967, 4294901760
        %1969 = vmatmul.f32.gmra.mxu0 %v1968
        %v1970 = vpop.f32.mrf.mxu0
        %v1971 = vadd.f32 %v1907, %v1970
        %v1972 = vand.u32 %v495, 4294901760
        %v1973 = vsub.f32 %v495, %v1972
        %v1974 = vand.u32 %v1973, 4294901760
        %1975 = vmatmul.f32.gmra.mxu0 %v1974
        %v1976 = vpop.f32.mrf.mxu0
        %v1977 = vadd.f32 %v1912, %v1976
        %v1978 = vand.u32 %v498, 4294901760
        %v1979 = vsub.f32 %v498, %v1978
        %v1980 = vand.u32 %v1979, 4294901760
        %1981 = vmatmul.f32.gmra.mxu0 %v1980
        %v1982 = vpop.f32.mrf.mxu0
        %v1983 = vadd.f32 %v1917, %v1982
        %v1984 = vand.u32 %v501, 4294901760
        %v1985 = vsub.f32 %v501, %v1984
        %v1986 = vand.u32 %v1985, 4294901760
        %1987 = vmatmul.f32.gmra.mxu0 %v1986
        %v1988 = vpop.f32.mrf.mxu0
        %v1989 = vadd.f32 %v1922, %v1988
        %v1990 = vand.u32 %v504, 4294901760
        %v1991 = vsub.f32 %v504, %v1990
        %v1992 = vand.u32 %v1991, 4294901760
        %1993 = vmatmul.f32.gmra.mxu0 %v1992
        %v1994 = vpop.f32.mrf.mxu0
        %v1995 = vadd.f32 %v1927, %v1994
        %v1996 = vand.u32 %v507, 4294901760
        %v1997 = vsub.f32 %v507, %v1996
        %v1998 = vand.u32 %v1997, 4294901760
        %1999 = vmatmul.f32.gmra.mxu0 %v1998
        %v2000 = vpop.f32.mrf.mxu0
        %v2001 = vadd.f32 %v1932, %v2000
        %2002 = vdwg.mxu0
        %2003 = vmatpush.msra.mxu0 0.0
        %2004 = vmatpush.msra.mxu0 0.0
        %2005 = vmatpush.msra.mxu0 0.0
        %2006 = vmatpush.msra.mxu0 0.0
        %2007 = vmatpush.msra.mxu0 0.0
        %2008 = vmatpush.msra.mxu0 0.0
        %2009 = vmatpush.msra.mxu0 0.0
        %2010 = vmatpush.msra.mxu0 0.0
        %2011 = vmatpush.msra.mxu0 0.0
        %2012 = vmatpush.msra.mxu0 0.0
        %2013 = vmatpush.msra.mxu0 0.0
        %2014 = vmatpush.msra.mxu0 0.0
        %v2015 = vand.u32 %v435, 4294901760
        %v2016 = vsub.f32 %v435, %v2015
        %v2017 = vand.u32 %v2016, 4294901760
        %2018 = vmatpush.msra.mxu0 %v2017
        %v2019 = vand.u32 %v431, 4294901760
        %v2020 = vsub.f32 %v431, %v2019
        %v2021 = vand.u32 %v2020, 4294901760
        %2022 = vmatpush.msra.mxu0 %v2021
        %v2023 = vand.u32 %v427, 4294901760
        %v2024 = vsub.f32 %v427, %v2023
        %v2025 = vand.u32 %v2024, 4294901760
        %2026 = vmatpush.msra.mxu0 %v2025
        %v2027 = vand.u32 %v423, 4294901760
        %v2028 = vsub.f32 %v423, %v2027
        %v2029 = vand.u32 %v2028, 4294901760
        %2030 = vmatpush.msra.mxu0 %v2029
        %v2031 = vand.u32 %v486, 4294901760
        %2032 = vmatmul.f32.gmra.mxu0 %v2031
        %v2033 = vpop.f32.mrf.mxu0
        %v2034 = vadd.f32 %v1959, %v2033
        %v2035 = vand.u32 %v489, 4294901760
        %2036 = vmatmul.f32.gmra.mxu0 %v2035
        %v2037 = vpop.f32.mrf.mxu0
        %v2038 = vadd.f32 %v1965, %v2037
        %v2039 = vand.u32 %v492, 4294901760
        %2040 = vmatmul.f32.gmra.mxu0 %v2039
        %v2041 = vpop.f32.mrf.mxu0
        %v2042 = vadd.f32 %v1971, %v2041
        %v2043 = vand.u32 %v495, 4294901760
        %2044 = vmatmul.f32.gmra.mxu0 %v2043
        %v2045 = vpop.f32.mrf.mxu0
        %v2046 = vadd.f32 %v1977, %v2045
        %v2047 = vand.u32 %v498, 4294901760
        %2048 = vmatmul.f32.gmra.mxu0 %v2047
        %v2049 = vpop.f32.mrf.mxu0
        %v2050 = vadd.f32 %v1983, %v2049
        %v2051 = vand.u32 %v501, 4294901760
        %2052 = vmatmul.f32.gmra.mxu0 %v2051
        %v2053 = vpop.f32.mrf.mxu0
        %v2054 = vadd.f32 %v1989, %v2053
        %v2055 = vand.u32 %v504, 4294901760
        %2056 = vmatmul.f32.gmra.mxu0 %v2055
        %v2057 = vpop.f32.mrf.mxu0
        %v2058 = vadd.f32 %v1995, %v2057
        %v2059 = vand.u32 %v507, 4294901760
        %2060 = vmatmul.f32.gmra.mxu0 %v2059
        %v2061 = vpop.f32.mrf.mxu0
        %v2062 = vadd.f32 %v2001, %v2061
        %2063 = vdwg.mxu0
        %2064 = vmatpush.msra.mxu0 0.0
        %2065 = vmatpush.msra.mxu0 0.0
        %2066 = vmatpush.msra.mxu0 0.0
        %2067 = vmatpush.msra.mxu0 0.0
        %2068 = vmatpush.msra.mxu0 0.0
        %2069 = vmatpush.msra.mxu0 0.0
        %2070 = vmatpush.msra.mxu0 0.0
        %2071 = vmatpush.msra.mxu0 0.0
        %2072 = vmatpush.msra.mxu0 0.0
        %2073 = vmatpush.msra.mxu0 0.0
        %2074 = vmatpush.msra.mxu0 0.0
        %2075 = vmatpush.msra.mxu0 0.0
        %v2076 = vand.u32 %v435, 4294901760
        %2077 = vmatpush.msra.mxu0 %v2076
        %v2078 = vand.u32 %v431, 4294901760
        %2079 = vmatpush.msra.mxu0 %v2078
        %v2080 = vand.u32 %v427, 4294901760
        %2081 = vmatpush.msra.mxu0 %v2080
        %v2082 = vand.u32 %v423, 4294901760
        %2083 = vmatpush.msra.mxu0 %v2082
        %v2084 = vand.u32 %v486, 4294901760
        %2085 = vmatmul.f32.gmra.mxu0 %v2084
        %v2086 = vpop.f32.mrf.mxu0
        %v2087 = vadd.f32 %v2034, %v2086
        %v2088 = vand.u32 %v489, 4294901760
        %2089 = vmatmul.f32.gmra.mxu0 %v2088
        %v2090 = vpop.f32.mrf.mxu0
        %v2091 = vadd.f32 %v2038, %v2090
        %v2092 = vand.u32 %v492, 4294901760
        %2093 = vmatmul.f32.gmra.mxu0 %v2092
        %v2094 = vpop.f32.mrf.mxu0
        %v2095 = vadd.f32 %v2042, %v2094
        %v2096 = vand.u32 %v495, 4294901760
        %2097 = vmatmul.f32.gmra.mxu0 %v2096
        %v2098 = vpop.f32.mrf.mxu0
        %v2099 = vadd.f32 %v2046, %v2098
        %v2100 = vand.u32 %v498, 4294901760
        %2101 = vmatmul.f32.gmra.mxu0 %v2100
        %v2102 = vpop.f32.mrf.mxu0
        %v2103 = vadd.f32 %v2050, %v2102
        %v2104 = vand.u32 %v501, 4294901760
        %2105 = vmatmul.f32.gmra.mxu0 %v2104
        %v2106 = vpop.f32.mrf.mxu0
        %v2107 = vadd.f32 %v2054, %v2106
        %v2108 = vand.u32 %v504, 4294901760
        %2109 = vmatmul.f32.gmra.mxu0 %v2108
        %v2110 = vpop.f32.mrf.mxu0
        %v2111 = vadd.f32 %v2058, %v2110
        %v2112 = vand.u32 %v507, 4294901760
        %2113 = vmatmul.f32.gmra.mxu0 %v2112
        %v2114 = vpop.f32.mrf.mxu0
        %v2115 = vadd.f32 %v2062, %v2114
        %2116 = vdwg.mxu0
        %2117 = vst [vmem:[%s370] sm:$0xff] %v881
        %2118 = vst [vmem:[%s370 + $0x8] sm:$0xff] %v1283
        %2119 = vst [vmem:[%s370 + $0x10] sm:$0xff] %v1685
        %2120 = vst [vmem:[%s370 + $0x18] sm:$0xff] %v2087
        %2121 = vst [vmem:[%s370 + $0x20] sm:$0xff] %v885
        %2122 = vst [vmem:[%s370 + $0x28] sm:$0xff] %v1287
        %2123 = vst [vmem:[%s370 + $0x30] sm:$0xff] %v1689
        %2124 = vst [vmem:[%s370 + $0x38] sm:$0xff] %v2091
        %2125 = vst [vmem:[%s370 + $0x40] sm:$0xff] %v889
        %2126 = vst [vmem:[%s370 + $0x48] sm:$0xff] %v1291
        %2127 = vst [vmem:[%s370 + $0x50] sm:$0xff] %v1693
        %2128 = vst [vmem:[%s370 + $0x58] sm:$0xff] %v2095
        %2129 = vst [vmem:[%s370 + $0x60] sm:$0xff] %v893
        %2130 = vst [vmem:[%s370 + $0x68] sm:$0xff] %v1295
        %2131 = vst [vmem:[%s370 + $0x70] sm:$0xff] %v1697
        %2132 = vst [vmem:[%s370 + $0x78] sm:$0xff] %v2099
        %2133 = vst [vmem:[%s377] sm:$0xff] %v897
        %2134 = vst [vmem:[%s377 + $0x8] sm:$0xff] %v1299
        %2135 = vst [vmem:[%s377 + $0x10] sm:$0xff] %v1701
        %2136 = vst [vmem:[%s377 + $0x18] sm:$0xff] %v2103
        %2137 = vst [vmem:[%s377 + $0x20] sm:$0xff] %v901
        %2138 = vst [vmem:[%s377 + $0x28] sm:$0xff] %v1303
        %2139 = vst [vmem:[%s377 + $0x30] sm:$0xff] %v1705
        %2140 = vst [vmem:[%s377 + $0x38] sm:$0xff] %v2107
        %2141 = vst [vmem:[%s377 + $0x40] sm:$0xff] %v905
        %2142 = vst [vmem:[%s377 + $0x48] sm:$0xff] %v1307
        %2143 = vst [vmem:[%s377 + $0x50] sm:$0xff] %v1709
        %2144 = vst [vmem:[%s377 + $0x58] sm:$0xff] %v2111
        %2145 = vst [vmem:[%s377 + $0x60] sm:$0xff] %v909
        %2146 = vst [vmem:[%s377 + $0x68] sm:$0xff] %v1311
        %2147 = vst [vmem:[%s377 + $0x70] sm:$0xff] %v1713
        %2148 = vst [vmem:[%s377 + $0x78] sm:$0xff] %v2115
        %v2149 = vld [vmem:[%s316] sm:$0xff]
        %v2150 = vld [vmem:[%s316 + $0x8] sm:$0xff]
        %v2151 = vld [vmem:[%s316 + $0x10] sm:$0xff]
        %v2152 = vld [vmem:[%s316 + $0x18] sm:$0xff]
        %v2153 = vld [vmem:[%s316 + $0x20] sm:$0xff]
        %v2154 = vld [vmem:[%s316 + $0x28] sm:$0xff]
        %v2155 = vld [vmem:[%s316 + $0x30] sm:$0xff]
        %v2156 = vld [vmem:[%s316 + $0x38] sm:$0xff]
        %v2157 = vld [vmem:[%s316 + $0x40] sm:$0xff]
        %v2158 = vld [vmem:[%s316 + $0x48] sm:$0xff]
        %v2159 = vld [vmem:[%s316 + $0x50] sm:$0xff]
        %v2160 = vld [vmem:[%s316 + $0x58] sm:$0xff]
        %v2161 = vld [vmem:[%s316 + $0x60] sm:$0xff]
        %v2162 = vld [vmem:[%s316 + $0x68] sm:$0xff]
        %v2163 = vld [vmem:[%s316 + $0x70] sm:$0xff]
        %v2164 = vld [vmem:[%s316 + $0x78] sm:$0xff]
        %v2165 = vmul.f32 %v897, 0.5
        %v2166 = vmul.f32 %v1299, 0.5
        %v2167 = vmul.f32 %v1701, 0.5
        %v2168 = vmul.f32 %v2103, 0.5
        %v2169 = vmul.f32 %v901, 0.5
        %v2170 = vmul.f32 %v1303, 0.5
        %v2171 = vmul.f32 %v1705, 0.5
        %v2172 = vmul.f32 %v2107, 0.5
        %v2173 = vmul.f32 %v905, 0.5
        %v2174 = vmul.f32 %v1307, 0.5
        %v2175 = vmul.f32 %v1709, 0.5
        %v2176 = vmul.f32 %v2111, 0.5
        %v2177 = vmul.f32 %v909, 0.5
        %v2178 = vmul.f32 %v1311, 0.5
        %v2179 = vmul.f32 %v1713, 0.5
        %v2180 = vmul.f32 %v2115, 0.5
        %v2181 = vmul.f32 %v2165, 1.442695
        %v2182 = vpow.pop %v2181
        %v2183 = vmul.f32 %v2166, 1.442695
        %v2184 = vpow.pop %v2183
        %v2185 = vmul.f32 %v2167, 1.442695
        %v2186 = vpow.pop %v2185
        %v2187 = vmul.f32 %v2168, 1.442695
        %v2188 = vpow.pop %v2187
        %v2189 = vmul.f32 %v2169, 1.442695
        %v2190 = vpow.pop %v2189
        %v2191 = vmul.f32 %v2170, 1.442695
        %v2192 = vpow.pop %v2191
        %v2193 = vmul.f32 %v2171, 1.442695
        %v2194 = vpow.pop %v2193
        %v2195 = vmul.f32 %v2172, 1.442695
        %v2196 = vpow.pop %v2195
        %v2197 = vmul.f32 %v2173, 1.442695
        %v2198 = vpow.pop %v2197
        %v2199 = vmul.f32 %v2174, 1.442695
        %v2200 = vpow.pop %v2199
        %v2201 = vmul.f32 %v2175, 1.442695
        %v2202 = vpow.pop %v2201
        %v2203 = vmul.f32 %v2176, 1.442695
        %v2204 = vpow.pop %v2203
        %v2205 = vmul.f32 %v2177, 1.442695
        %v2206 = vpow.pop %v2205
        %v2207 = vmul.f32 %v2178, 1.442695
        %v2208 = vpow.pop %v2207
        %v2209 = vmul.f32 %v2179, 1.442695
        %v2210 = vpow.pop %v2209
        %v2211 = vmul.f32 %v2180, 1.442695
        %v2212 = vpow.pop %v2211
        %v2213 = vmul.f32 %v2149, %v2182
        %v2214 = vmul.f32 %v2150, %v2184
        %v2215 = vmul.f32 %v2151, %v2186
        %v2216 = vmul.f32 %v2152, %v2188
        %v2217 = vmul.f32 %v2153, %v2190
        %v2218 = vmul.f32 %v2154, %v2192
        %v2219 = vmul.f32 %v2155, %v2194
        %v2220 = vmul.f32 %v2156, %v2196
        %v2221 = vmul.f32 %v2157, %v2198
        %v2222 = vmul.f32 %v2158, %v2200
        %v2223 = vmul.f32 %v2159, %v2202
        %v2224 = vmul.f32 %v2160, %v2204
        %v2225 = vmul.f32 %v2161, %v2206
        %v2226 = vmul.f32 %v2162, %v2208
        %v2227 = vmul.f32 %v2163, %v2210
        %v2228 = vmul.f32 %v2164, %v2212
        %v2229 = vadd.f32 %v881, %v2213
        %v2230 = vadd.f32 %v1283, %v2214
        %v2231 = vadd.f32 %v1685, %v2215
        %v2232 = vadd.f32 %v2087, %v2216
        %v2233 = vadd.f32 %v885, %v2217
        %v2234 = vadd.f32 %v1287, %v2218
        %v2235 = vadd.f32 %v1689, %v2219
        %v2236 = vadd.f32 %v2091, %v2220
        %v2237 = vadd.f32 %v889, %v2221
        %v2238 = vadd.f32 %v1291, %v2222
        %v2239 = vadd.f32 %v1693, %v2223
        %v2240 = vadd.f32 %v2095, %v2224
        %v2241 = vadd.f32 %v893, %v2225
        %v2242 = vadd.f32 %v1295, %v2226
        %v2243 = vadd.f32 %v1697, %v2227
        %v2244 = vadd.f32 %v2099, %v2228
        %2245 = vst [vmem:[%s363] sm:$0xff] %v2229
        %2246 = vst [vmem:[%s363 + $0x8] sm:$0xff] %v2230
        %2247 = vst [vmem:[%s363 + $0x10] sm:$0xff] %v2231
        %2248 = vst [vmem:[%s363 + $0x18] sm:$0xff] %v2232
        %2249 = vst [vmem:[%s363 + $0x20] sm:$0xff] %v2233
        %2250 = vst [vmem:[%s363 + $0x28] sm:$0xff] %v2234
        %2251 = vst [vmem:[%s363 + $0x30] sm:$0xff] %v2235
        %2252 = vst [vmem:[%s363 + $0x38] sm:$0xff] %v2236
        %2253 = vst [vmem:[%s363 + $0x40] sm:$0xff] %v2237
        %2254 = vst [vmem:[%s363 + $0x48] sm:$0xff] %v2238
        %2255 = vst [vmem:[%s363 + $0x50] sm:$0xff] %v2239
        %2256 = vst [vmem:[%s363 + $0x58] sm:$0xff] %v2240
        %2257 = vst [vmem:[%s363 + $0x60] sm:$0xff] %v2241
        %2258 = vst [vmem:[%s363 + $0x68] sm:$0xff] %v2242
        %2259 = vst [vmem:[%s363 + $0x70] sm:$0xff] %v2243
        %2260 = vst [vmem:[%s363 + $0x78] sm:$0xff] %v2244
        %s2261 = scalar_lea.vmem %s395, 64
        %v2262 = vld [vmem:[%s2261] sm:$0xff]
        %v2263 = vld [vmem:[%s2261 + $0x8] sm:$0xff]
        %v2264 = vld [vmem:[%s2261 + $0x10] sm:$0xff]
        %v2265 = vld [vmem:[%s2261 + $0x18] sm:$0xff]
        %v2266 = vld [vmem:[%s2261 + $0x20] sm:$0xff]
        %v2267 = vld [vmem:[%s2261 + $0x28] sm:$0xff]
        %v2268 = vld [vmem:[%s2261 + $0x30] sm:$0xff]
        %v2269 = vld [vmem:[%s2261 + $0x38] sm:$0xff]
        %s2270 = scalar_lea.vmem %s387, 128
        %v2271 = vld [vmem:[%s2270] sm:$0xff]
        %v2272 = vld [vmem:[%s2270 + $0x8] sm:$0xff]
        %v2273 = vld [vmem:[%s2270 + $0x10] sm:$0xff]
        %v2274 = vld [vmem:[%s2270 + $0x18] sm:$0xff]
        %v2275 = vld [vmem:[%s2270 + $0x20] sm:$0xff]
        %v2276 = vld [vmem:[%s2270 + $0x28] sm:$0xff]
        %v2277 = vld [vmem:[%s2270 + $0x30] sm:$0xff]
        %v2278 = vld [vmem:[%s2270 + $0x38] sm:$0xff]
        %v2279 = vld [vmem:[%s2270 + $0x40] sm:$0xff]
        %v2280 = vld [vmem:[%s2270 + $0x48] sm:$0xff]
        %v2281 = vld [vmem:[%s2270 + $0x50] sm:$0xff]
        %v2282 = vld [vmem:[%s2270 + $0x58] sm:$0xff]
        %v2283 = vld [vmem:[%s2270 + $0x60] sm:$0xff]
        %v2284 = vld [vmem:[%s2270 + $0x68] sm:$0xff]
        %v2285 = vld [vmem:[%s2270 + $0x70] sm:$0xff]
        %v2286 = vld [vmem:[%s2270 + $0x78] sm:$0xff]
        %s2287 = scalar_lea.vmem %s402, 64
        %v2288 = vld [vmem:[%s2287] sm:$0xff]
        %v2289 = vld [vmem:[%s2287 + $0x8] sm:$0xff]
        %v2290 = vld [vmem:[%s2287 + $0x10] sm:$0xff]
        %v2291 = vld [vmem:[%s2287 + $0x18] sm:$0xff]
        %v2292 = vld [vmem:[%s2287 + $0x20] sm:$0xff]
        %v2293 = vld [vmem:[%s2287 + $0x28] sm:$0xff]
        %v2294 = vld [vmem:[%s2287 + $0x30] sm:$0xff]
        %v2295 = vld [vmem:[%s2287 + $0x38] sm:$0xff]
        %2297 = vset.pattern.permute.xlu0 0
        %2298 = vperm.xlu0 %2297, %v2288
        %v2299 = vpop.permute.xlu0 %2298
        %2302 = vset.pattern.permute.xlu0 0
        %2303 = vperm.xlu0 %2302, %v2289
        %v2304 = vpop.permute.xlu0 %2303
        %2307 = vset.pattern.permute.xlu0 0
        %2308 = vperm.xlu0 %2307, %v2290
        %v2309 = vpop.permute.xlu0 %2308
        %2312 = vset.pattern.permute.xlu0 0
        %2313 = vperm.xlu0 %2312, %v2291
        %v2314 = vpop.permute.xlu0 %2313
        %2317 = vset.pattern.permute.xlu0 0
        %2318 = vperm.xlu0 %2317, %v2292
        %v2319 = vpop.permute.xlu0 %2318
        %2322 = vset.pattern.permute.xlu0 0
        %2323 = vperm.xlu0 %2322, %v2293
        %v2324 = vpop.permute.xlu0 %2323
        %2327 = vset.pattern.permute.xlu0 0
        %2328 = vperm.xlu0 %2327, %v2294
        %v2329 = vpop.permute.xlu0 %2328
        %2332 = vset.pattern.permute.xlu0 0
        %2333 = vperm.xlu0 %2332, %v2295
        %v2334 = vpop.permute.xlu0 %2333
        %v2337 = vsel %vm484, %v2262, 0
        %v2340 = vsel %vm484, %v2263, 0
        %v2343 = vsel %vm484, %v2264, 0
        %v2346 = vsel %vm484, %v2265, 0
        %v2349 = vsel %vm484, %v2266, 0
        %v2352 = vsel %vm484, %v2267, 0
        %v2355 = vsel %vm484, %v2268, 0
        %v2358 = vsel %vm484, %v2269, 0
        %2360 = vmatpush.msra.mxu0 0.0
        %2361 = vmatpush.msra.mxu0 0.0
        %2362 = vmatpush.msra.mxu0 0.0
        %2363 = vmatpush.msra.mxu0 0.0
        %2364 = vmatpush.msra.mxu0 0.0
        %2365 = vmatpush.msra.mxu0 0.0
        %2366 = vmatpush.msra.mxu0 0.0
        %2367 = vmatpush.msra.mxu0 0.0
        %2368 = vmatpush.msra.mxu0 0.0
        %2369 = vmatpush.msra.mxu0 0.0
        %2370 = vmatpush.msra.mxu0 0.0
        %2371 = vmatpush.msra.mxu0 0.0
        %v2372 = vand.u32 %v2283, 4294901760
        %2373 = vmatpush.msra.mxu0 %v2372
        %v2374 = vand.u32 %v2279, 4294901760
        %2375 = vmatpush.msra.mxu0 %v2374
        %v2376 = vand.u32 %v2275, 4294901760
        %2377 = vmatpush.msra.mxu0 %v2376
        %v2378 = vand.u32 %v2271, 4294901760
        %2379 = vmatpush.msra.mxu0 %v2378
        %v2380 = vand.u32 %v2337, 4294901760
        %v2381 = vsub.f32 %v2337, %v2380
        %v2382 = vand.u32 %v2381, 4294901760
        %v2383 = vsub.f32 %v2381, %v2382
        %v2384 = vand.u32 %v2383, 4294901760
        %2385 = vmatmul.f32.gmra.mxu0 %v2384
        %v2386 = vpop.f32.mrf.mxu0
        %v2387 = vadd.f32 %v2299, %v2386
        %v2388 = vand.u32 %v2340, 4294901760
        %v2389 = vsub.f32 %v2340, %v2388
        %v2390 = vand.u32 %v2389, 4294901760
        %v2391 = vsub.f32 %v2389, %v2390
        %v2392 = vand.u32 %v2391, 4294901760
        %2393 = vmatmul.f32.gmra.mxu0 %v2392
        %v2394 = vpop.f32.mrf.mxu0
        %v2395 = vadd.f32 %v2304, %v2394
        %v2396 = vand.u32 %v2343, 4294901760
        %v2397 = vsub.f32 %v2343, %v2396
        %v2398 = vand.u32 %v2397, 4294901760
        %v2399 = vsub.f32 %v2397, %v2398
        %v2400 = vand.u32 %v2399, 4294901760
        %2401 = vmatmul.f32.gmra.mxu0 %v2400
        %v2402 = vpop.f32.mrf.mxu0
        %v2403 = vadd.f32 %v2309, %v2402
        %v2404 = vand.u32 %v2346, 4294901760
        %v2405 = vsub.f32 %v2346, %v2404
        %v2406 = vand.u32 %v2405, 4294901760
        %v2407 = vsub.f32 %v2405, %v2406
        %v2408 = vand.u32 %v2407, 4294901760
        %2409 = vmatmul.f32.gmra.mxu0 %v2408
        %v2410 = vpop.f32.mrf.mxu0
        %v2411 = vadd.f32 %v2314, %v2410
        %v2412 = vand.u32 %v2349, 4294901760
        %v2413 = vsub.f32 %v2349, %v2412
        %v2414 = vand.u32 %v2413, 4294901760
        %v2415 = vsub.f32 %v2413, %v2414
        %v2416 = vand.u32 %v2415, 4294901760
        %2417 = vmatmul.f32.gmra.mxu0 %v2416
        %v2418 = vpop.f32.mrf.mxu0
        %v2419 = vadd.f32 %v2319, %v2418
        %v2420 = vand.u32 %v2352, 4294901760
        %v2421 = vsub.f32 %v2352, %v2420
        %v2422 = vand.u32 %v2421, 4294901760
        %v2423 = vsub.f32 %v2421, %v2422
        %v2424 = vand.u32 %v2423, 4294901760
        %2425 = vmatmul.f32.gmra.mxu0 %v2424
        %v2426 = vpop.f32.mrf.mxu0
        %v2427 = vadd.f32 %v2324, %v2426
        %v2428 = vand.u32 %v2355, 4294901760
        %v2429 = vsub.f32 %v2355, %v2428
        %v2430 = vand.u32 %v2429, 4294901760
        %v2431 = vsub.f32 %v2429, %v2430
        %v2432 = vand.u32 %v2431, 4294901760
        %2433 = vmatmul.f32.gmra.mxu0 %v2432
        %v2434 = vpop.f32.mrf.mxu0
        %v2435 = vadd.f32 %v2329, %v2434
        %v2436 = vand.u32 %v2358, 4294901760
        %v2437 = vsub.f32 %v2358, %v2436
        %v2438 = vand.u32 %v2437, 4294901760
        %v2439 = vsub.f32 %v2437, %v2438
        %v2440 = vand.u32 %v2439, 4294901760
        %2441 = vmatmul.f32.gmra.mxu0 %v2440
        %v2442 = vpop.f32.mrf.mxu0
        %v2443 = vadd.f32 %v2334, %v2442
        %2444 = vdwg.mxu0
        %2445 = vmatpush.msra.mxu0 0.0
        %2446 = vmatpush.msra.mxu0 0.0
        %2447 = vmatpush.msra.mxu0 0.0
        %2448 = vmatpush.msra.mxu0 0.0
        %2449 = vmatpush.msra.mxu0 0.0
        %2450 = vmatpush.msra.mxu0 0.0
        %2451 = vmatpush.msra.mxu0 0.0
        %2452 = vmatpush.msra.mxu0 0.0
        %2453 = vmatpush.msra.mxu0 0.0
        %2454 = vmatpush.msra.mxu0 0.0
        %2455 = vmatpush.msra.mxu0 0.0
        %2456 = vmatpush.msra.mxu0 0.0
        %v2457 = vand.u32 %v2283, 4294901760
        %v2458 = vsub.f32 %v2283, %v2457
        %v2459 = vand.u32 %v2458, 4294901760
        %v2460 = vsub.f32 %v2458, %v2459
        %v2461 = vand.u32 %v2460, 4294901760
        %2462 = vmatpush.msra.mxu0 %v2461
        %v2463 = vand.u32 %v2279, 4294901760
        %v2464 = vsub.f32 %v2279, %v2463
        %v2465 = vand.u32 %v2464, 4294901760
        %v2466 = vsub.f32 %v2464, %v2465
        %v2467 = vand.u32 %v2466, 4294901760
        %2468 = vmatpush.msra.mxu0 %v2467
        %v2469 = vand.u32 %v2275, 4294901760
        %v2470 = vsub.f32 %v2275, %v2469
        %v2471 = vand.u32 %v2470, 4294901760
        %v2472 = vsub.f32 %v2470, %v2471
        %v2473 = vand.u32 %v2472, 4294901760
        %2474 = vmatpush.msra.mxu0 %v2473
        %v2475 = vand.u32 %v2271, 4294901760
        %v2476 = vsub.f32 %v2271, %v2475
        %v2477 = vand.u32 %v2476, 4294901760
        %v2478 = vsub.f32 %v2476, %v2477
        %v2479 = vand.u32 %v2478, 4294901760
        %2480 = vmatpush.msra.mxu0 %v2479
        %v2481 = vand.u32 %v2337, 4294901760
        %2482 = vmatmul.f32.gmra.mxu0 %v2481
        %v2483 = vpop.f32.mrf.mxu0
        %v2484 = vadd.f32 %v2387, %v2483
        %v2485 = vand.u32 %v2340, 4294901760
        %2486 = vmatmul.f32.gmra.mxu0 %v2485
        %v2487 = vpop.f32.mrf.mxu0
        %v2488 = vadd.f32 %v2395, %v2487
        %v2489 = vand.u32 %v2343, 4294901760
        %2490 = vmatmul.f32.gmra.mxu0 %v2489
        %v2491 = vpop.f32.mrf.mxu0
        %v2492 = vadd.f32 %v2403, %v2491
        %v2493 = vand.u32 %v2346, 4294901760
        %2494 = vmatmul.f32.gmra.mxu0 %v2493
        %v2495 = vpop.f32.mrf.mxu0
        %v2496 = vadd.f32 %v2411, %v2495
        %v2497 = vand.u32 %v2349, 4294901760
        %2498 = vmatmul.f32.gmra.mxu0 %v2497
        %v2499 = vpop.f32.mrf.mxu0
        %v2500 = vadd.f32 %v2419, %v2499
        %v2501 = vand.u32 %v2352, 4294901760
        %2502 = vmatmul.f32.gmra.mxu0 %v2501
        %v2503 = vpop.f32.mrf.mxu0
        %v2504 = vadd.f32 %v2427, %v2503
        %v2505 = vand.u32 %v2355, 4294901760
        %2506 = vmatmul.f32.gmra.mxu0 %v2505
        %v2507 = vpop.f32.mrf.mxu0
        %v2508 = vadd.f32 %v2435, %v2507
        %v2509 = vand.u32 %v2358, 4294901760
        %2510 = vmatmul.f32.gmra.mxu0 %v2509
        %v2511 = vpop.f32.mrf.mxu0
        %v2512 = vadd.f32 %v2443, %v2511
        %2513 = vdwg.mxu0
        %2514 = vmatpush.msra.mxu0 0.0
        %2515 = vmatpush.msra.mxu0 0.0
        %2516 = vmatpush.msra.mxu0 0.0
        %2517 = vmatpush.msra.mxu0 0.0
        %2518 = vmatpush.msra.mxu0 0.0
        %2519 = vmatpush.msra.mxu0 0.0
        %2520 = vmatpush.msra.mxu0 0.0
        %2521 = vmatpush.msra.mxu0 0.0
        %2522 = vmatpush.msra.mxu0 0.0
        %2523 = vmatpush.msra.mxu0 0.0
        %2524 = vmatpush.msra.mxu0 0.0
        %2525 = vmatpush.msra.mxu0 0.0
        %v2526 = vand.u32 %v2283, 4294901760
        %v2527 = vsub.f32 %v2283, %v2526
        %2528 = vmatpush.msra.mxu0 %v2527
        %v2529 = vand.u32 %v2279, 4294901760
        %v2530 = vsub.f32 %v2279, %v2529
        %2531 = vmatpush.msra.mxu0 %v2530
        %v2532 = vand.u32 %v2275, 4294901760
        %v2533 = vsub.f32 %v2275, %v2532
        %2534 = vmatpush.msra.mxu0 %v2533
        %v2535 = vand.u32 %v2271, 4294901760
        %v2536 = vsub.f32 %v2271, %v2535
        %2537 = vmatpush.msra.mxu0 %v2536
        %v2538 = vand.u32 %v2337, 4294901760
        %v2539 = vsub.f32 %v2337, %v2538
        %2540 = vmatmul.f32.gmra.mxu0 %v2539
        %v2541 = vpop.f32.mrf.mxu0
        %v2542 = vadd.f32 %v2484, %v2541
        %v2543 = vand.u32 %v2340, 4294901760
        %v2544 = vsub.f32 %v2340, %v2543
        %2545 = vmatmul.f32.gmra.mxu0 %v2544
        %v2546 = vpop.f32.mrf.mxu0
        %v2547 = vadd.f32 %v2488, %v2546
        %v2548 = vand.u32 %v2343, 4294901760
        %v2549 = vsub.f32 %v2343, %v2548
        %2550 = vmatmul.f32.gmra.mxu0 %v2549
        %v2551 = vpop.f32.mrf.mxu0
        %v2552 = vadd.f32 %v2492, %v2551
        %v2553 = vand.u32 %v2346, 4294901760
        %v2554 = vsub.f32 %v2346, %v2553
        %2555 = vmatmul.f32.gmra.mxu0 %v2554
        %v2556 = vpop.f32.mrf.mxu0
        %v2557 = vadd.f32 %v2496, %v2556
        %v2558 = vand.u32 %v2349, 4294901760
        %v2559 = vsub.f32 %v2349, %v2558
        %2560 = vmatmul.f32.gmra.mxu0 %v2559
        %v2561 = vpop.f32.mrf.mxu0
        %v2562 = vadd.f32 %v2500, %v2561
        %v2563 = vand.u32 %v2352, 4294901760
        %v2564 = vsub.f32 %v2352, %v2563
        %2565 = vmatmul.f32.gmra.mxu0 %v2564
        %v2566 = vpop.f32.mrf.mxu0
        %v2567 = vadd.f32 %v2504, %v2566
        %v2568 = vand.u32 %v2355, 4294901760
        %v2569 = vsub.f32 %v2355, %v2568
        %2570 = vmatmul.f32.gmra.mxu0 %v2569
        %v2571 = vpop.f32.mrf.mxu0
        %v2572 = vadd.f32 %v2508, %v2571
        %v2573 = vand.u32 %v2358, 4294901760
        %v2574 = vsub.f32 %v2358, %v2573
        %2575 = vmatmul.f32.gmra.mxu0 %v2574
        %v2576 = vpop.f32.mrf.mxu0
        %v2577 = vadd.f32 %v2512, %v2576
        %2578 = vdwg.mxu0
        %2579 = vmatpush.msra.mxu0 0.0
        %2580 = vmatpush.msra.mxu0 0.0
        %2581 = vmatpush.msra.mxu0 0.0
        %2582 = vmatpush.msra.mxu0 0.0
        %2583 = vmatpush.msra.mxu0 0.0
        %2584 = vmatpush.msra.mxu0 0.0
        %2585 = vmatpush.msra.mxu0 0.0
        %2586 = vmatpush.msra.mxu0 0.0
        %2587 = vmatpush.msra.mxu0 0.0
        %2588 = vmatpush.msra.mxu0 0.0
        %2589 = vmatpush.msra.mxu0 0.0
        %2590 = vmatpush.msra.mxu0 0.0
        %v2591 = vand.u32 %v2283, 4294901760
        %2592 = vmatpush.msra.mxu0 %v2591
        %v2593 = vand.u32 %v2279, 4294901760
        %2594 = vmatpush.msra.mxu0 %v2593
        %v2595 = vand.u32 %v2275, 4294901760
        %2596 = vmatpush.msra.mxu0 %v2595
        %v2597 = vand.u32 %v2271, 4294901760
        %2598 = vmatpush.msra.mxu0 %v2597
        %v2599 = vand.u32 %v2337, 4294901760
        %v2600 = vsub.f32 %v2337, %v2599
        %v2601 = vand.u32 %v2600, 4294901760
        %2602 = vmatmul.f32.gmra.mxu0 %v2601
        %v2603 = vpop.f32.mrf.mxu0
        %v2604 = vadd.f32 %v2542, %v2603
        %v2605 = vand.u32 %v2340, 4294901760
        %v2606 = vsub.f32 %v2340, %v2605
        %v2607 = vand.u32 %v2606, 4294901760
        %2608 = vmatmul.f32.gmra.mxu0 %v2607
        %v2609 = vpop.f32.mrf.mxu0
        %v2610 = vadd.f32 %v2547, %v2609
        %v2611 = vand.u32 %v2343, 4294901760
        %v2612 = vsub.f32 %v2343, %v2611
        %v2613 = vand.u32 %v2612, 4294901760
        %2614 = vmatmul.f32.gmra.mxu0 %v2613
        %v2615 = vpop.f32.mrf.mxu0
        %v2616 = vadd.f32 %v2552, %v2615
        %v2617 = vand.u32 %v2346, 4294901760
        %v2618 = vsub.f32 %v2346, %v2617
        %v2619 = vand.u32 %v2618, 4294901760
        %2620 = vmatmul.f32.gmra.mxu0 %v2619
        %v2621 = vpop.f32.mrf.mxu0
        %v2622 = vadd.f32 %v2557, %v2621
        %v2623 = vand.u32 %v2349, 4294901760
        %v2624 = vsub.f32 %v2349, %v2623
        %v2625 = vand.u32 %v2624, 4294901760
        %2626 = vmatmul.f32.gmra.mxu0 %v2625
        %v2627 = vpop.f32.mrf.mxu0
        %v2628 = vadd.f32 %v2562, %v2627
        %v2629 = vand.u32 %v2352, 4294901760
        %v2630 = vsub.f32 %v2352, %v2629
        %v2631 = vand.u32 %v2630, 4294901760
        %2632 = vmatmul.f32.gmra.mxu0 %v2631
        %v2633 = vpop.f32.mrf.mxu0
        %v2634 = vadd.f32 %v2567, %v2633
        %v2635 = vand.u32 %v2355, 4294901760
        %v2636 = vsub.f32 %v2355, %v2635
        %v2637 = vand.u32 %v2636, 4294901760
        %2638 = vmatmul.f32.gmra.mxu0 %v2637
        %v2639 = vpop.f32.mrf.mxu0
        %v2640 = vadd.f32 %v2572, %v2639
        %v2641 = vand.u32 %v2358, 4294901760
        %v2642 = vsub.f32 %v2358, %v2641
        %v2643 = vand.u32 %v2642, 4294901760
        %2644 = vmatmul.f32.gmra.mxu0 %v2643
        %v2645 = vpop.f32.mrf.mxu0
        %v2646 = vadd.f32 %v2577, %v2645
        %2647 = vdwg.mxu0
        %2648 = vmatpush.msra.mxu0 0.0
        %2649 = vmatpush.msra.mxu0 0.0
        %2650 = vmatpush.msra.mxu0 0.0
        %2651 = vmatpush.msra.mxu0 0.0
        %2652 = vmatpush.msra.mxu0 0.0
        %2653 = vmatpush.msra.mxu0 0.0
        %2654 = vmatpush.msra.mxu0 0.0
        %2655 = vmatpush.msra.mxu0 0.0
        %2656 = vmatpush.msra.mxu0 0.0
        %2657 = vmatpush.msra.mxu0 0.0
        %2658 = vmatpush.msra.mxu0 0.0
        %2659 = vmatpush.msra.mxu0 0.0
        %v2660 = vand.u32 %v2283, 4294901760
        %v2661 = vsub.f32 %v2283, %v2660
        %v2662 = vand.u32 %v2661, 4294901760
        %2663 = vmatpush.msra.mxu0 %v2662
        %v2664 = vand.u32 %v2279, 4294901760
        %v2665 = vsub.f32 %v2279, %v2664
        %v2666 = vand.u32 %v2665, 4294901760
        %2667 = vmatpush.msra.mxu0 %v2666
        %v2668 = vand.u32 %v2275, 4294901760
        %v2669 = vsub.f32 %v2275, %v2668
        %v2670 = vand.u32 %v2669, 4294901760
        %2671 = vmatpush.msra.mxu0 %v2670
        %v2672 = vand.u32 %v2271, 4294901760
        %v2673 = vsub.f32 %v2271, %v2672
        %v2674 = vand.u32 %v2673, 4294901760
        %2675 = vmatpush.msra.mxu0 %v2674
        %v2676 = vand.u32 %v2337, 4294901760
        %2677 = vmatmul.f32.gmra.mxu0 %v2676
        %v2678 = vpop.f32.mrf.mxu0
        %v2679 = vadd.f32 %v2604, %v2678
        %v2680 = vand.u32 %v2340, 4294901760
        %2681 = vmatmul.f32.gmra.mxu0 %v2680
        %v2682 = vpop.f32.mrf.mxu0
        %v2683 = vadd.f32 %v2610, %v2682
        %v2684 = vand.u32 %v2343, 4294901760
        %2685 = vmatmul.f32.gmra.mxu0 %v2684
        %v2686 = vpop.f32.mrf.mxu0
        %v2687 = vadd.f32 %v2616, %v2686
        %v2688 = vand.u32 %v2346, 4294901760
        %2689 = vmatmul.f32.gmra.mxu0 %v2688
        %v2690 = vpop.f32.mrf.mxu0
        %v2691 = vadd.f32 %v2622, %v2690
        %v2692 = vand.u32 %v2349, 4294901760
        %2693 = vmatmul.f32.gmra.mxu0 %v2692
        %v2694 = vpop.f32.mrf.mxu0
        %v2695 = vadd.f32 %v2628, %v2694
        %v2696 = vand.u32 %v2352, 4294901760
        %2697 = vmatmul.f32.gmra.mxu0 %v2696
        %v2698 = vpop.f32.mrf.mxu0
        %v2699 = vadd.f32 %v2634, %v2698
        %v2700 = vand.u32 %v2355, 4294901760
        %2701 = vmatmul.f32.gmra.mxu0 %v2700
        %v2702 = vpop.f32.mrf.mxu0
        %v2703 = vadd.f32 %v2640, %v2702
        %v2704 = vand.u32 %v2358, 4294901760
        %2705 = vmatmul.f32.gmra.mxu0 %v2704
        %v2706 = vpop.f32.mrf.mxu0
        %v2707 = vadd.f32 %v2646, %v2706
        %2708 = vdwg.mxu0
        %2709 = vmatpush.msra.mxu0 0.0
        %2710 = vmatpush.msra.mxu0 0.0
        %2711 = vmatpush.msra.mxu0 0.0
        %2712 = vmatpush.msra.mxu0 0.0
        %2713 = vmatpush.msra.mxu0 0.0
        %2714 = vmatpush.msra.mxu0 0.0
        %2715 = vmatpush.msra.mxu0 0.0
        %2716 = vmatpush.msra.mxu0 0.0
        %2717 = vmatpush.msra.mxu0 0.0
        %2718 = vmatpush.msra.mxu0 0.0
        %2719 = vmatpush.msra.mxu0 0.0
        %2720 = vmatpush.msra.mxu0 0.0
        %v2721 = vand.u32 %v2283, 4294901760
        %2722 = vmatpush.msra.mxu0 %v2721
        %v2723 = vand.u32 %v2279, 4294901760
        %2724 = vmatpush.msra.mxu0 %v2723
        %v2725 = vand.u32 %v2275, 4294901760
        %2726 = vmatpush.msra.mxu0 %v2725
        %v2727 = vand.u32 %v2271, 4294901760
        %2728 = vmatpush.msra.mxu0 %v2727
        %v2729 = vand.u32 %v2337, 4294901760
        %2730 = vmatmul.f32.gmra.mxu0 %v2729
        %v2731 = vpop.f32.mrf.mxu0
        %v2732 = vadd.f32 %v2679, %v2731
        %v2733 = vand.u32 %v2340, 4294901760
        %2734 = vmatmul.f32.gmra.mxu0 %v2733
        %v2735 = vpop.f32.mrf.mxu0
        %v2736 = vadd.f32 %v2683, %v2735
        %v2737 = vand.u32 %v2343, 4294901760
        %2738 = vmatmul.f32.gmra.mxu0 %v2737
        %v2739 = vpop.f32.mrf.mxu0
        %v2740 = vadd.f32 %v2687, %v2739
        %v2741 = vand.u32 %v2346, 4294901760
        %2742 = vmatmul.f32.gmra.mxu0 %v2741
        %v2743 = vpop.f32.mrf.mxu0
        %v2744 = vadd.f32 %v2691, %v2743
        %v2745 = vand.u32 %v2349, 4294901760
        %2746 = vmatmul.f32.gmra.mxu0 %v2745
        %v2747 = vpop.f32.mrf.mxu0
        %v2748 = vadd.f32 %v2695, %v2747
        %v2749 = vand.u32 %v2352, 4294901760
        %2750 = vmatmul.f32.gmra.mxu0 %v2749
        %v2751 = vpop.f32.mrf.mxu0
        %v2752 = vadd.f32 %v2699, %v2751
        %v2753 = vand.u32 %v2355, 4294901760
        %2754 = vmatmul.f32.gmra.mxu0 %v2753
        %v2755 = vpop.f32.mrf.mxu0
        %v2756 = vadd.f32 %v2703, %v2755
        %v2757 = vand.u32 %v2358, 4294901760
        %2758 = vmatmul.f32.gmra.mxu0 %v2757
        %v2759 = vpop.f32.mrf.mxu0
        %v2760 = vadd.f32 %v2707, %v2759
        %2761 = vdwg.mxu0
        %2762 = vmatpush.msra.mxu0 0.0
        %2763 = vmatpush.msra.mxu0 0.0
        %2764 = vmatpush.msra.mxu0 0.0
        %2765 = vmatpush.msra.mxu0 0.0
        %2766 = vmatpush.msra.mxu0 0.0
        %2767 = vmatpush.msra.mxu0 0.0
        %2768 = vmatpush.msra.mxu0 0.0
        %2769 = vmatpush.msra.mxu0 0.0
        %2770 = vmatpush.msra.mxu0 0.0
        %2771 = vmatpush.msra.mxu0 0.0
        %2772 = vmatpush.msra.mxu0 0.0
        %2773 = vmatpush.msra.mxu0 0.0
        %v2774 = vand.u32 %v2284, 4294901760
        %2775 = vmatpush.msra.mxu0 %v2774
        %v2776 = vand.u32 %v2280, 4294901760
        %2777 = vmatpush.msra.mxu0 %v2776
        %v2778 = vand.u32 %v2276, 4294901760
        %2779 = vmatpush.msra.mxu0 %v2778
        %v2780 = vand.u32 %v2272, 4294901760
        %2781 = vmatpush.msra.mxu0 %v2780
        %v2782 = vand.u32 %v2337, 4294901760
        %v2783 = vsub.f32 %v2337, %v2782
        %v2784 = vand.u32 %v2783, 4294901760
        %v2785 = vsub.f32 %v2783, %v2784
        %v2786 = vand.u32 %v2785, 4294901760
        %2787 = vmatmul.f32.gmra.mxu0 %v2786
        %v2788 = vpop.f32.mrf.mxu0
        %v2789 = vadd.f32 %v2299, %v2788
        %v2790 = vand.u32 %v2340, 4294901760
        %v2791 = vsub.f32 %v2340, %v2790
        %v2792 = vand.u32 %v2791, 4294901760
        %v2793 = vsub.f32 %v2791, %v2792
        %v2794 = vand.u32 %v2793, 4294901760
        %2795 = vmatmul.f32.gmra.mxu0 %v2794
        %v2796 = vpop.f32.mrf.mxu0
        %v2797 = vadd.f32 %v2304, %v2796
        %v2798 = vand.u32 %v2343, 4294901760
        %v2799 = vsub.f32 %v2343, %v2798
        %v2800 = vand.u32 %v2799, 4294901760
        %v2801 = vsub.f32 %v2799, %v2800
        %v2802 = vand.u32 %v2801, 4294901760
        %2803 = vmatmul.f32.gmra.mxu0 %v2802
        %v2804 = vpop.f32.mrf.mxu0
        %v2805 = vadd.f32 %v2309, %v2804
        %v2806 = vand.u32 %v2346, 4294901760
        %v2807 = vsub.f32 %v2346, %v2806
        %v2808 = vand.u32 %v2807, 4294901760
        %v2809 = vsub.f32 %v2807, %v2808
        %v2810 = vand.u32 %v2809, 4294901760
        %2811 = vmatmul.f32.gmra.mxu0 %v2810
        %v2812 = vpop.f32.mrf.mxu0
        %v2813 = vadd.f32 %v2314, %v2812
        %v2814 = vand.u32 %v2349, 4294901760
        %v2815 = vsub.f32 %v2349, %v2814
        %v2816 = vand.u32 %v2815, 4294901760
        %v2817 = vsub.f32 %v2815, %v2816
        %v2818 = vand.u32 %v2817, 4294901760
        %2819 = vmatmul.f32.gmra.mxu0 %v2818
        %v2820 = vpop.f32.mrf.mxu0
        %v2821 = vadd.f32 %v2319, %v2820
        %v2822 = vand.u32 %v2352, 4294901760
        %v2823 = vsub.f32 %v2352, %v2822
        %v2824 = vand.u32 %v2823, 4294901760
        %v2825 = vsub.f32 %v2823, %v2824
        %v2826 = vand.u32 %v2825, 4294901760
        %2827 = vmatmul.f32.gmra.mxu0 %v2826
        %v2828 = vpop.f32.mrf.mxu0
        %v2829 = vadd.f32 %v2324, %v2828
        %v2830 = vand.u32 %v2355, 4294901760
        %v2831 = vsub.f32 %v2355, %v2830
        %v2832 = vand.u32 %v2831, 4294901760
        %v2833 = vsub.f32 %v2831, %v2832
        %v2834 = vand.u32 %v2833, 4294901760
        %2835 = vmatmul.f32.gmra.mxu0 %v2834
        %v2836 = vpop.f32.mrf.mxu0
        %v2837 = vadd.f32 %v2329, %v2836
        %v2838 = vand.u32 %v2358, 4294901760
        %v2839 = vsub.f32 %v2358, %v2838
        %v2840 = vand.u32 %v2839, 4294901760
        %v2841 = vsub.f32 %v2839, %v2840
        %v2842 = vand.u32 %v2841, 4294901760
        %2843 = vmatmul.f32.gmra.mxu0 %v2842
        %v2844 = vpop.f32.mrf.mxu0
        %v2845 = vadd.f32 %v2334, %v2844
        %2846 = vdwg.mxu0
        %2847 = vmatpush.msra.mxu0 0.0
        %2848 = vmatpush.msra.mxu0 0.0
        %2849 = vmatpush.msra.mxu0 0.0
        %2850 = vmatpush.msra.mxu0 0.0
        %2851 = vmatpush.msra.mxu0 0.0
        %2852 = vmatpush.msra.mxu0 0.0
        %2853 = vmatpush.msra.mxu0 0.0
        %2854 = vmatpush.msra.mxu0 0.0
        %2855 = vmatpush.msra.mxu0 0.0
        %2856 = vmatpush.msra.mxu0 0.0
        %2857 = vmatpush.msra.mxu0 0.0
        %2858 = vmatpush.msra.mxu0 0.0
        %v2859 = vand.u32 %v2284, 4294901760
        %v2860 = vsub.f32 %v2284, %v2859
        %v2861 = vand.u32 %v2860, 4294901760
        %v2862 = vsub.f32 %v2860, %v2861
        %v2863 = vand.u32 %v2862, 4294901760
        %2864 = vmatpush.msra.mxu0 %v2863
        %v2865 = vand.u32 %v2280, 4294901760
        %v2866 = vsub.f32 %v2280, %v2865
        %v2867 = vand.u32 %v2866, 4294901760
        %v2868 = vsub.f32 %v2866, %v2867
        %v2869 = vand.u32 %v2868, 4294901760
        %2870 = vmatpush.msra.mxu0 %v2869
        %v2871 = vand.u32 %v2276, 4294901760
        %v2872 = vsub.f32 %v2276, %v2871
        %v2873 = vand.u32 %v2872, 4294901760
        %v2874 = vsub.f32 %v2872, %v2873
        %v2875 = vand.u32 %v2874, 4294901760
        %2876 = vmatpush.msra.mxu0 %v2875
        %v2877 = vand.u32 %v2272, 4294901760
        %v2878 = vsub.f32 %v2272, %v2877
        %v2879 = vand.u32 %v2878, 4294901760
        %v2880 = vsub.f32 %v2878, %v2879
        %v2881 = vand.u32 %v2880, 4294901760
        %2882 = vmatpush.msra.mxu0 %v2881
        %v2883 = vand.u32 %v2337, 4294901760
        %2884 = vmatmul.f32.gmra.mxu0 %v2883
        %v2885 = vpop.f32.mrf.mxu0
        %v2886 = vadd.f32 %v2789, %v2885
        %v2887 = vand.u32 %v2340, 4294901760
        %2888 = vmatmul.f32.gmra.mxu0 %v2887
        %v2889 = vpop.f32.mrf.mxu0
        %v2890 = vadd.f32 %v2797, %v2889
        %v2891 = vand.u32 %v2343, 4294901760
        %2892 = vmatmul.f32.gmra.mxu0 %v2891
        %v2893 = vpop.f32.mrf.mxu0
        %v2894 = vadd.f32 %v2805, %v2893
        %v2895 = vand.u32 %v2346, 4294901760
        %2896 = vmatmul.f32.gmra.mxu0 %v2895
        %v2897 = vpop.f32.mrf.mxu0
        %v2898 = vadd.f32 %v2813, %v2897
        %v2899 = vand.u32 %v2349, 4294901760
        %2900 = vmatmul.f32.gmra.mxu0 %v2899
        %v2901 = vpop.f32.mrf.mxu0
        %v2902 = vadd.f32 %v2821, %v2901
        %v2903 = vand.u32 %v2352, 4294901760
        %2904 = vmatmul.f32.gmra.mxu0 %v2903
        %v2905 = vpop.f32.mrf.mxu0
        %v2906 = vadd.f32 %v2829, %v2905
        %v2907 = vand.u32 %v2355, 4294901760
        %2908 = vmatmul.f32.gmra.mxu0 %v2907
        %v2909 = vpop.f32.mrf.mxu0
        %v2910 = vadd.f32 %v2837, %v2909
        %v2911 = vand.u32 %v2358, 4294901760
        %2912 = vmatmul.f32.gmra.mxu0 %v2911
        %v2913 = vpop.f32.mrf.mxu0
        %v2914 = vadd.f32 %v2845, %v2913
        %2915 = vdwg.mxu0
        %2916 = vmatpush.msra.mxu0 0.0
        %2917 = vmatpush.msra.mxu0 0.0
        %2918 = vmatpush.msra.mxu0 0.0
        %2919 = vmatpush.msra.mxu0 0.0
        %2920 = vmatpush.msra.mxu0 0.0
        %2921 = vmatpush.msra.mxu0 0.0
        %2922 = vmatpush.msra.mxu0 0.0
        %2923 = vmatpush.msra.mxu0 0.0
        %2924 = vmatpush.msra.mxu0 0.0
        %2925 = vmatpush.msra.mxu0 0.0
        %2926 = vmatpush.msra.mxu0 0.0
        %2927 = vmatpush.msra.mxu0 0.0
        %v2928 = vand.u32 %v2284, 4294901760
        %v2929 = vsub.f32 %v2284, %v2928
        %2930 = vmatpush.msra.mxu0 %v2929
        %v2931 = vand.u32 %v2280, 4294901760
        %v2932 = vsub.f32 %v2280, %v2931
        %2933 = vmatpush.msra.mxu0 %v2932
        %v2934 = vand.u32 %v2276, 4294901760
        %v2935 = vsub.f32 %v2276, %v2934
        %2936 = vmatpush.msra.mxu0 %v2935
        %v2937 = vand.u32 %v2272, 4294901760
        %v2938 = vsub.f32 %v2272, %v2937
        %2939 = vmatpush.msra.mxu0 %v2938
        %v2940 = vand.u32 %v2337, 4294901760
        %v2941 = vsub.f32 %v2337, %v2940
        %2942 = vmatmul.f32.gmra.mxu0 %v2941
        %v2943 = vpop.f32.mrf.mxu0
        %v2944 = vadd.f32 %v2886, %v2943
        %v2945 = vand.u32 %v2340, 4294901760
        %v2946 = vsub.f32 %v2340, %v2945
        %2947 = vmatmul.f32.gmra.mxu0 %v2946
        %v2948 = vpop.f32.mrf.mxu0
        %v2949 = vadd.f32 %v2890, %v2948
        %v2950 = vand.u32 %v2343, 4294901760
        %v2951 = vsub.f32 %v2343, %v2950
        %2952 = vmatmul.f32.gmra.mxu0 %v2951
        %v2953 = vpop.f32.mrf.mxu0
        %v2954 = vadd.f32 %v2894, %v2953
        %v2955 = vand.u32 %v2346, 4294901760
        %v2956 = vsub.f32 %v2346, %v2955
        %2957 = vmatmul.f32.gmra.mxu0 %v2956
        %v2958 = vpop.f32.mrf.mxu0
        %v2959 = vadd.f32 %v2898, %v2958
        %v2960 = vand.u32 %v2349, 4294901760
        %v2961 = vsub.f32 %v2349, %v2960
        %2962 = vmatmul.f32.gmra.mxu0 %v2961
        %v2963 = vpop.f32.mrf.mxu0
        %v2964 = vadd.f32 %v2902, %v2963
        %v2965 = vand.u32 %v2352, 4294901760
        %v2966 = vsub.f32 %v2352, %v2965
        %2967 = vmatmul.f32.gmra.mxu0 %v2966
        %v2968 = vpop.f32.mrf.mxu0
        %v2969 = vadd.f32 %v2906, %v2968
        %v2970 = vand.u32 %v2355, 4294901760
        %v2971 = vsub.f32 %v2355, %v2970
        %2972 = vmatmul.f32.gmra.mxu0 %v2971
        %v2973 = vpop.f32.mrf.mxu0
        %v2974 = vadd.f32 %v2910, %v2973
        %v2975 = vand.u32 %v2358, 4294901760
        %v2976 = vsub.f32 %v2358, %v2975
        %2977 = vmatmul.f32.gmra.mxu0 %v2976
        %v2978 = vpop.f32.mrf.mxu0
        %v2979 = vadd.f32 %v2914, %v2978
        %2980 = vdwg.mxu0
        %2981 = vmatpush.msra.mxu0 0.0
        %2982 = vmatpush.msra.mxu0 0.0
        %2983 = vmatpush.msra.mxu0 0.0
        %2984 = vmatpush.msra.mxu0 0.0
        %2985 = vmatpush.msra.mxu0 0.0
        %2986 = vmatpush.msra.mxu0 0.0
        %2987 = vmatpush.msra.mxu0 0.0
        %2988 = vmatpush.msra.mxu0 0.0
        %2989 = vmatpush.msra.mxu0 0.0
        %2990 = vmatpush.msra.mxu0 0.0
        %2991 = vmatpush.msra.mxu0 0.0
        %2992 = vmatpush.msra.mxu0 0.0
        %v2993 = vand.u32 %v2284, 4294901760
        %2994 = vmatpush.msra.mxu0 %v2993
        %v2995 = vand.u32 %v2280, 4294901760
        %2996 = vmatpush.msra.mxu0 %v2995
        %v2997 = vand.u32 %v2276, 4294901760
        %2998 = vmatpush.msra.mxu0 %v2997
        %v2999 = vand.u32 %v2272, 4294901760
        %3000 = vmatpush.msra.mxu0 %v2999
        %v3001 = vand.u32 %v2337, 4294901760
        %v3002 = vsub.f32 %v2337, %v3001
        %v3003 = vand.u32 %v3002, 4294901760
        %3004 = vmatmul.f32.gmra.mxu0 %v3003
        %v3005 = vpop.f32.mrf.mxu0
        %v3006 = vadd.f32 %v2944, %v3005
        %v3007 = vand.u32 %v2340, 4294901760
        %v3008 = vsub.f32 %v2340, %v3007
        %v3009 = vand.u32 %v3008, 4294901760
        %3010 = vmatmul.f32.gmra.mxu0 %v3009
        %v3011 = vpop.f32.mrf.mxu0
        %v3012 = vadd.f32 %v2949, %v3011
        %v3013 = vand.u32 %v2343, 4294901760
        %v3014 = vsub.f32 %v2343, %v3013
        %v3015 = vand.u32 %v3014, 4294901760
        %3016 = vmatmul.f32.gmra.mxu0 %v3015
        %v3017 = vpop.f32.mrf.mxu0
        %v3018 = vadd.f32 %v2954, %v3017
        %v3019 = vand.u32 %v2346, 4294901760
        %v3020 = vsub.f32 %v2346, %v3019
        %v3021 = vand.u32 %v3020, 4294901760
        %3022 = vmatmul.f32.gmra.mxu0 %v3021
        %v3023 = vpop.f32.mrf.mxu0
        %v3024 = vadd.f32 %v2959, %v3023
        %v3025 = vand.u32 %v2349, 4294901760
        %v3026 = vsub.f32 %v2349, %v3025
        %v3027 = vand.u32 %v3026, 4294901760
        %3028 = vmatmul.f32.gmra.mxu0 %v3027
        %v3029 = vpop.f32.mrf.mxu0
        %v3030 = vadd.f32 %v2964, %v3029
        %v3031 = vand.u32 %v2352, 4294901760
        %v3032 = vsub.f32 %v2352, %v3031
        %v3033 = vand.u32 %v3032, 4294901760
        %3034 = vmatmul.f32.gmra.mxu0 %v3033
        %v3035 = vpop.f32.mrf.mxu0
        %v3036 = vadd.f32 %v2969, %v3035
        %v3037 = vand.u32 %v2355, 4294901760
        %v3038 = vsub.f32 %v2355, %v3037
        %v3039 = vand.u32 %v3038, 4294901760
        %3040 = vmatmul.f32.gmra.mxu0 %v3039
        %v3041 = vpop.f32.mrf.mxu0
        %v3042 = vadd.f32 %v2974, %v3041
        %v3043 = vand.u32 %v2358, 4294901760
        %v3044 = vsub.f32 %v2358, %v3043
        %v3045 = vand.u32 %v3044, 4294901760
        %3046 = vmatmul.f32.gmra.mxu0 %v3045
        %v3047 = vpop.f32.mrf.mxu0
        %v3048 = vadd.f32 %v2979, %v3047
        %3049 = vdwg.mxu0
        %3050 = vmatpush.msra.mxu0 0.0
        %3051 = vmatpush.msra.mxu0 0.0
        %3052 = vmatpush.msra.mxu0 0.0
        %3053 = vmatpush.msra.mxu0 0.0
        %3054 = vmatpush.msra.mxu0 0.0
        %3055 = vmatpush.msra.mxu0 0.0
        %3056 = vmatpush.msra.mxu0 0.0
        %3057 = vmatpush.msra.mxu0 0.0
        %3058 = vmatpush.msra.mxu0 0.0
        %3059 = vmatpush.msra.mxu0 0.0
        %3060 = vmatpush.msra.mxu0 0.0
        %3061 = vmatpush.msra.mxu0 0.0
        %v3062 = vand.u32 %v2284, 4294901760
        %v3063 = vsub.f32 %v2284, %v3062
        %v3064 = vand.u32 %v3063, 4294901760
        %3065 = vmatpush.msra.mxu0 %v3064
        %v3066 = vand.u32 %v2280, 4294901760
        %v3067 = vsub.f32 %v2280, %v3066
        %v3068 = vand.u32 %v3067, 4294901760
        %3069 = vmatpush.msra.mxu0 %v3068
        %v3070 = vand.u32 %v2276, 4294901760
        %v3071 = vsub.f32 %v2276, %v3070
        %v3072 = vand.u32 %v3071, 4294901760
        %3073 = vmatpush.msra.mxu0 %v3072
        %v3074 = vand.u32 %v2272, 4294901760
        %v3075 = vsub.f32 %v2272, %v3074
        %v3076 = vand.u32 %v3075, 4294901760
        %3077 = vmatpush.msra.mxu0 %v3076
        %v3078 = vand.u32 %v2337, 4294901760
        %3079 = vmatmul.f32.gmra.mxu0 %v3078
        %v3080 = vpop.f32.mrf.mxu0
        %v3081 = vadd.f32 %v3006, %v3080
        %v3082 = vand.u32 %v2340, 4294901760
        %3083 = vmatmul.f32.gmra.mxu0 %v3082
        %v3084 = vpop.f32.mrf.mxu0
        %v3085 = vadd.f32 %v3012, %v3084
        %v3086 = vand.u32 %v2343, 4294901760
        %3087 = vmatmul.f32.gmra.mxu0 %v3086
        %v3088 = vpop.f32.mrf.mxu0
        %v3089 = vadd.f32 %v3018, %v3088
        %v3090 = vand.u32 %v2346, 4294901760
        %3091 = vmatmul.f32.gmra.mxu0 %v3090
        %v3092 = vpop.f32.mrf.mxu0
        %v3093 = vadd.f32 %v3024, %v3092
        %v3094 = vand.u32 %v2349, 4294901760
        %3095 = vmatmul.f32.gmra.mxu0 %v3094
        %v3096 = vpop.f32.mrf.mxu0
        %v3097 = vadd.f32 %v3030, %v3096
        %v3098 = vand.u32 %v2352, 4294901760
        %3099 = vmatmul.f32.gmra.mxu0 %v3098
        %v3100 = vpop.f32.mrf.mxu0
        %v3101 = vadd.f32 %v3036, %v3100
        %v3102 = vand.u32 %v2355, 4294901760
        %3103 = vmatmul.f32.gmra.mxu0 %v3102
        %v3104 = vpop.f32.mrf.mxu0
        %v3105 = vadd.f32 %v3042, %v3104
        %v3106 = vand.u32 %v2358, 4294901760
        %3107 = vmatmul.f32.gmra.mxu0 %v3106
        %v3108 = vpop.f32.mrf.mxu0
        %v3109 = vadd.f32 %v3048, %v3108
        %3110 = vdwg.mxu0
        %3111 = vmatpush.msra.mxu0 0.0
        %3112 = vmatpush.msra.mxu0 0.0
        %3113 = vmatpush.msra.mxu0 0.0
        %3114 = vmatpush.msra.mxu0 0.0
        %3115 = vmatpush.msra.mxu0 0.0
        %3116 = vmatpush.msra.mxu0 0.0
        %3117 = vmatpush.msra.mxu0 0.0
        %3118 = vmatpush.msra.mxu0 0.0
        %3119 = vmatpush.msra.mxu0 0.0
        %3120 = vmatpush.msra.mxu0 0.0
        %3121 = vmatpush.msra.mxu0 0.0
        %3122 = vmatpush.msra.mxu0 0.0
        %v3123 = vand.u32 %v2284, 4294901760
        %3124 = vmatpush.msra.mxu0 %v3123
        %v3125 = vand.u32 %v2280, 4294901760
        %3126 = vmatpush.msra.mxu0 %v3125
        %v3127 = vand.u32 %v2276, 4294901760
        %3128 = vmatpush.msra.mxu0 %v3127
        %v3129 = vand.u32 %v2272, 4294901760
        %3130 = vmatpush.msra.mxu0 %v3129
        %v3131 = vand.u32 %v2337, 4294901760
        %3132 = vmatmul.f32.gmra.mxu0 %v3131
        %v3133 = vpop.f32.mrf.mxu0
        %v3134 = vadd.f32 %v3081, %v3133
        %v3135 = vand.u32 %v2340, 4294901760
        %3136 = vmatmul.f32.gmra.mxu0 %v3135
        %v3137 = vpop.f32.mrf.mxu0
        %v3138 = vadd.f32 %v3085, %v3137
        %v3139 = vand.u32 %v2343, 4294901760
        %3140 = vmatmul.f32.gmra.mxu0 %v3139
        %v3141 = vpop.f32.mrf.mxu0
        %v3142 = vadd.f32 %v3089, %v3141
        %v3143 = vand.u32 %v2346, 4294901760
        %3144 = vmatmul.f32.gmra.mxu0 %v3143
        %v3145 = vpop.f32.mrf.mxu0
        %v3146 = vadd.f32 %v3093, %v3145
        %v3147 = vand.u32 %v2349, 4294901760
        %3148 = vmatmul.f32.gmra.mxu0 %v3147
        %v3149 = vpop.f32.mrf.mxu0
        %v3150 = vadd.f32 %v3097, %v3149
        %v3151 = vand.u32 %v2352, 4294901760
        %3152 = vmatmul.f32.gmra.mxu0 %v3151
        %v3153 = vpop.f32.mrf.mxu0
        %v3154 = vadd.f32 %v3101, %v3153
        %v3155 = vand.u32 %v2355, 4294901760
        %3156 = vmatmul.f32.gmra.mxu0 %v3155
        %v3157 = vpop.f32.mrf.mxu0
        %v3158 = vadd.f32 %v3105, %v3157
        %v3159 = vand.u32 %v2358, 4294901760
        %3160 = vmatmul.f32.gmra.mxu0 %v3159
        %v3161 = vpop.f32.mrf.mxu0
        %v3162 = vadd.f32 %v3109, %v3161
        %3163 = vdwg.mxu0
        %3164 = vmatpush.msra.mxu0 0.0
        %3165 = vmatpush.msra.mxu0 0.0
        %3166 = vmatpush.msra.mxu0 0.0
        %3167 = vmatpush.msra.mxu0 0.0
        %3168 = vmatpush.msra.mxu0 0.0
        %3169 = vmatpush.msra.mxu0 0.0
        %3170 = vmatpush.msra.mxu0 0.0
        %3171 = vmatpush.msra.mxu0 0.0
        %3172 = vmatpush.msra.mxu0 0.0
        %3173 = vmatpush.msra.mxu0 0.0
        %3174 = vmatpush.msra.mxu0 0.0
        %3175 = vmatpush.msra.mxu0 0.0
        %v3176 = vand.u32 %v2285, 4294901760
        %3177 = vmatpush.msra.mxu0 %v3176
        %v3178 = vand.u32 %v2281, 4294901760
        %3179 = vmatpush.msra.mxu0 %v3178
        %v3180 = vand.u32 %v2277, 4294901760
        %3181 = vmatpush.msra.mxu0 %v3180
        %v3182 = vand.u32 %v2273, 4294901760
        %3183 = vmatpush.msra.mxu0 %v3182
        %v3184 = vand.u32 %v2337, 4294901760
        %v3185 = vsub.f32 %v2337, %v3184
        %v3186 = vand.u32 %v3185, 4294901760
        %v3187 = vsub.f32 %v3185, %v3186
        %v3188 = vand.u32 %v3187, 4294901760
        %3189 = vmatmul.f32.gmra.mxu0 %v3188
        %v3190 = vpop.f32.mrf.mxu0
        %v3191 = vadd.f32 %v2299, %v3190
        %v3192 = vand.u32 %v2340, 4294901760
        %v3193 = vsub.f32 %v2340, %v3192
        %v3194 = vand.u32 %v3193, 4294901760
        %v3195 = vsub.f32 %v3193, %v3194
        %v3196 = vand.u32 %v3195, 4294901760
        %3197 = vmatmul.f32.gmra.mxu0 %v3196
        %v3198 = vpop.f32.mrf.mxu0
        %v3199 = vadd.f32 %v2304, %v3198
        %v3200 = vand.u32 %v2343, 4294901760
        %v3201 = vsub.f32 %v2343, %v3200
        %v3202 = vand.u32 %v3201, 4294901760
        %v3203 = vsub.f32 %v3201, %v3202
        %v3204 = vand.u32 %v3203, 4294901760
        %3205 = vmatmul.f32.gmra.mxu0 %v3204
        %v3206 = vpop.f32.mrf.mxu0
        %v3207 = vadd.f32 %v2309, %v3206
        %v3208 = vand.u32 %v2346, 4294901760
        %v3209 = vsub.f32 %v2346, %v3208
        %v3210 = vand.u32 %v3209, 4294901760
        %v3211 = vsub.f32 %v3209, %v3210
        %v3212 = vand.u32 %v3211, 4294901760
        %3213 = vmatmul.f32.gmra.mxu0 %v3212
        %v3214 = vpop.f32.mrf.mxu0
        %v3215 = vadd.f32 %v2314, %v3214
        %v3216 = vand.u32 %v2349, 4294901760
        %v3217 = vsub.f32 %v2349, %v3216
        %v3218 = vand.u32 %v3217, 4294901760
        %v3219 = vsub.f32 %v3217, %v3218
        %v3220 = vand.u32 %v3219, 4294901760
        %3221 = vmatmul.f32.gmra.mxu0 %v3220
        %v3222 = vpop.f32.mrf.mxu0
        %v3223 = vadd.f32 %v2319, %v3222
        %v3224 = vand.u32 %v2352, 4294901760
        %v3225 = vsub.f32 %v2352, %v3224
        %v3226 = vand.u32 %v3225, 4294901760
        %v3227 = vsub.f32 %v3225, %v3226
        %v3228 = vand.u32 %v3227, 4294901760
        %3229 = vmatmul.f32.gmra.mxu0 %v3228
        %v3230 = vpop.f32.mrf.mxu0
        %v3231 = vadd.f32 %v2324, %v3230
        %v3232 = vand.u32 %v2355, 4294901760
        %v3233 = vsub.f32 %v2355, %v3232
        %v3234 = vand.u32 %v3233, 4294901760
        %v3235 = vsub.f32 %v3233, %v3234
        %v3236 = vand.u32 %v3235, 4294901760
        %3237 = vmatmul.f32.gmra.mxu0 %v3236
        %v3238 = vpop.f32.mrf.mxu0
        %v3239 = vadd.f32 %v2329, %v3238
        %v3240 = vand.u32 %v2358, 4294901760
        %v3241 = vsub.f32 %v2358, %v3240
        %v3242 = vand.u32 %v3241, 4294901760
        %v3243 = vsub.f32 %v3241, %v3242
        %v3244 = vand.u32 %v3243, 4294901760
        %3245 = vmatmul.f32.gmra.mxu0 %v3244
        %v3246 = vpop.f32.mrf.mxu0
        %v3247 = vadd.f32 %v2334, %v3246
        %3248 = vdwg.mxu0
        %3249 = vmatpush.msra.mxu0 0.0
        %3250 = vmatpush.msra.mxu0 0.0
        %3251 = vmatpush.msra.mxu0 0.0
        %3252 = vmatpush.msra.mxu0 0.0
        %3253 = vmatpush.msra.mxu0 0.0
        %3254 = vmatpush.msra.mxu0 0.0
        %3255 = vmatpush.msra.mxu0 0.0
        %3256 = vmatpush.msra.mxu0 0.0
        %3257 = vmatpush.msra.mxu0 0.0
        %3258 = vmatpush.msra.mxu0 0.0
        %3259 = vmatpush.msra.mxu0 0.0
        %3260 = vmatpush.msra.mxu0 0.0
        %v3261 = vand.u32 %v2285, 4294901760
        %v3262 = vsub.f32 %v2285, %v3261
        %v3263 = vand.u32 %v3262, 4294901760
        %v3264 = vsub.f32 %v3262, %v3263
        %v3265 = vand.u32 %v3264, 4294901760
        %3266 = vmatpush.msra.mxu0 %v3265
        %v3267 = vand.u32 %v2281, 4294901760
        %v3268 = vsub.f32 %v2281, %v3267
        %v3269 = vand.u32 %v3268, 4294901760
        %v3270 = vsub.f32 %v3268, %v3269
        %v3271 = vand.u32 %v3270, 4294901760
        %3272 = vmatpush.msra.mxu0 %v3271
        %v3273 = vand.u32 %v2277, 4294901760
        %v3274 = vsub.f32 %v2277, %v3273
        %v3275 = vand.u32 %v3274, 4294901760
        %v3276 = vsub.f32 %v3274, %v3275
        %v3277 = vand.u32 %v3276, 4294901760
        %3278 = vmatpush.msra.mxu0 %v3277
        %v3279 = vand.u32 %v2273, 4294901760
        %v3280 = vsub.f32 %v2273, %v3279
        %v3281 = vand.u32 %v3280, 4294901760
        %v3282 = vsub.f32 %v3280, %v3281
        %v3283 = vand.u32 %v3282, 4294901760
        %3284 = vmatpush.msra.mxu0 %v3283
        %v3285 = vand.u32 %v2337, 4294901760
        %3286 = vmatmul.f32.gmra.mxu0 %v3285
        %v3287 = vpop.f32.mrf.mxu0
        %v3288 = vadd.f32 %v3191, %v3287
        %v3289 = vand.u32 %v2340, 4294901760
        %3290 = vmatmul.f32.gmra.mxu0 %v3289
        %v3291 = vpop.f32.mrf.mxu0
        %v3292 = vadd.f32 %v3199, %v3291
        %v3293 = vand.u32 %v2343, 4294901760
        %3294 = vmatmul.f32.gmra.mxu0 %v3293
        %v3295 = vpop.f32.mrf.mxu0
        %v3296 = vadd.f32 %v3207, %v3295
        %v3297 = vand.u32 %v2346, 4294901760
        %3298 = vmatmul.f32.gmra.mxu0 %v3297
        %v3299 = vpop.f32.mrf.mxu0
        %v3300 = vadd.f32 %v3215, %v3299
        %v3301 = vand.u32 %v2349, 4294901760
        %3302 = vmatmul.f32.gmra.mxu0 %v3301
        %v3303 = vpop.f32.mrf.mxu0
        %v3304 = vadd.f32 %v3223, %v3303
        %v3305 = vand.u32 %v2352, 4294901760
        %3306 = vmatmul.f32.gmra.mxu0 %v3305
        %v3307 = vpop.f32.mrf.mxu0
        %v3308 = vadd.f32 %v3231, %v3307
        %v3309 = vand.u32 %v2355, 4294901760
        %3310 = vmatmul.f32.gmra.mxu0 %v3309
        %v3311 = vpop.f32.mrf.mxu0
        %v3312 = vadd.f32 %v3239, %v3311
        %v3313 = vand.u32 %v2358, 4294901760
        %3314 = vmatmul.f32.gmra.mxu0 %v3313
        %v3315 = vpop.f32.mrf.mxu0
        %v3316 = vadd.f32 %v3247, %v3315
        %3317 = vdwg.mxu0
        %3318 = vmatpush.msra.mxu0 0.0
        %3319 = vmatpush.msra.mxu0 0.0
        %3320 = vmatpush.msra.mxu0 0.0
        %3321 = vmatpush.msra.mxu0 0.0
        %3322 = vmatpush.msra.mxu0 0.0
        %3323 = vmatpush.msra.mxu0 0.0
        %3324 = vmatpush.msra.mxu0 0.0
        %3325 = vmatpush.msra.mxu0 0.0
        %3326 = vmatpush.msra.mxu0 0.0
        %3327 = vmatpush.msra.mxu0 0.0
        %3328 = vmatpush.msra.mxu0 0.0
        %3329 = vmatpush.msra.mxu0 0.0
        %v3330 = vand.u32 %v2285, 4294901760
        %v3331 = vsub.f32 %v2285, %v3330
        %3332 = vmatpush.msra.mxu0 %v3331
        %v3333 = vand.u32 %v2281, 4294901760
        %v3334 = vsub.f32 %v2281, %v3333
        %3335 = vmatpush.msra.mxu0 %v3334
        %v3336 = vand.u32 %v2277, 4294901760
        %v3337 = vsub.f32 %v2277, %v3336
        %3338 = vmatpush.msra.mxu0 %v3337
        %v3339 = vand.u32 %v2273, 4294901760
        %v3340 = vsub.f32 %v2273, %v3339
        %3341 = vmatpush.msra.mxu0 %v3340
        %v3342 = vand.u32 %v2337, 4294901760
        %v3343 = vsub.f32 %v2337, %v3342
        %3344 = vmatmul.f32.gmra.mxu0 %v3343
        %v3345 = vpop.f32.mrf.mxu0
        %v3346 = vadd.f32 %v3288, %v3345
        %v3347 = vand.u32 %v2340, 4294901760
        %v3348 = vsub.f32 %v2340, %v3347
        %3349 = vmatmul.f32.gmra.mxu0 %v3348
        %v3350 = vpop.f32.mrf.mxu0
        %v3351 = vadd.f32 %v3292, %v3350
        %v3352 = vand.u32 %v2343, 4294901760
        %v3353 = vsub.f32 %v2343, %v3352
        %3354 = vmatmul.f32.gmra.mxu0 %v3353
        %v3355 = vpop.f32.mrf.mxu0
        %v3356 = vadd.f32 %v3296, %v3355
        %v3357 = vand.u32 %v2346, 4294901760
        %v3358 = vsub.f32 %v2346, %v3357
        %3359 = vmatmul.f32.gmra.mxu0 %v3358
        %v3360 = vpop.f32.mrf.mxu0
        %v3361 = vadd.f32 %v3300, %v3360
        %v3362 = vand.u32 %v2349, 4294901760
        %v3363 = vsub.f32 %v2349, %v3362
        %3364 = vmatmul.f32.gmra.mxu0 %v3363
        %v3365 = vpop.f32.mrf.mxu0
        %v3366 = vadd.f32 %v3304, %v3365
        %v3367 = vand.u32 %v2352, 4294901760
        %v3368 = vsub.f32 %v2352, %v3367
        %3369 = vmatmul.f32.gmra.mxu0 %v3368
        %v3370 = vpop.f32.mrf.mxu0
        %v3371 = vadd.f32 %v3308, %v3370
        %v3372 = vand.u32 %v2355, 4294901760
        %v3373 = vsub.f32 %v2355, %v3372
        %3374 = vmatmul.f32.gmra.mxu0 %v3373
        %v3375 = vpop.f32.mrf.mxu0
        %v3376 = vadd.f32 %v3312, %v3375
        %v3377 = vand.u32 %v2358, 4294901760
        %v3378 = vsub.f32 %v2358, %v3377
        %3379 = vmatmul.f32.gmra.mxu0 %v3378
        %v3380 = vpop.f32.mrf.mxu0
        %v3381 = vadd.f32 %v3316, %v3380
        %3382 = vdwg.mxu0
        %3383 = vmatpush.msra.mxu0 0.0
        %3384 = vmatpush.msra.mxu0 0.0
        %3385 = vmatpush.msra.mxu0 0.0
        %3386 = vmatpush.msra.mxu0 0.0
        %3387 = vmatpush.msra.mxu0 0.0
        %3388 = vmatpush.msra.mxu0 0.0
        %3389 = vmatpush.msra.mxu0 0.0
        %3390 = vmatpush.msra.mxu0 0.0
        %3391 = vmatpush.msra.mxu0 0.0
        %3392 = vmatpush.msra.mxu0 0.0
        %3393 = vmatpush.msra.mxu0 0.0
        %3394 = vmatpush.msra.mxu0 0.0
        %v3395 = vand.u32 %v2285, 4294901760
        %3396 = vmatpush.msra.mxu0 %v3395
        %v3397 = vand.u32 %v2281, 4294901760
        %3398 = vmatpush.msra.mxu0 %v3397
        %v3399 = vand.u32 %v2277, 4294901760
        %3400 = vmatpush.msra.mxu0 %v3399
        %v3401 = vand.u32 %v2273, 4294901760
        %3402 = vmatpush.msra.mxu0 %v3401
        %v3403 = vand.u32 %v2337, 4294901760
        %v3404 = vsub.f32 %v2337, %v3403
        %v3405 = vand.u32 %v3404, 4294901760
        %3406 = vmatmul.f32.gmra.mxu0 %v3405
        %v3407 = vpop.f32.mrf.mxu0
        %v3408 = vadd.f32 %v3346, %v3407
        %v3409 = vand.u32 %v2340, 4294901760
        %v3410 = vsub.f32 %v2340, %v3409
        %v3411 = vand.u32 %v3410, 4294901760
        %3412 = vmatmul.f32.gmra.mxu0 %v3411
        %v3413 = vpop.f32.mrf.mxu0
        %v3414 = vadd.f32 %v3351, %v3413
        %v3415 = vand.u32 %v2343, 4294901760
        %v3416 = vsub.f32 %v2343, %v3415
        %v3417 = vand.u32 %v3416, 4294901760
        %3418 = vmatmul.f32.gmra.mxu0 %v3417
        %v3419 = vpop.f32.mrf.mxu0
        %v3420 = vadd.f32 %v3356, %v3419
        %v3421 = vand.u32 %v2346, 4294901760
        %v3422 = vsub.f32 %v2346, %v3421
        %v3423 = vand.u32 %v3422, 4294901760
        %3424 = vmatmul.f32.gmra.mxu0 %v3423
        %v3425 = vpop.f32.mrf.mxu0
        %v3426 = vadd.f32 %v3361, %v3425
        %v3427 = vand.u32 %v2349, 4294901760
        %v3428 = vsub.f32 %v2349, %v3427
        %v3429 = vand.u32 %v3428, 4294901760
        %3430 = vmatmul.f32.gmra.mxu0 %v3429
        %v3431 = vpop.f32.mrf.mxu0
        %v3432 = vadd.f32 %v3366, %v3431
        %v3433 = vand.u32 %v2352, 4294901760
        %v3434 = vsub.f32 %v2352, %v3433
        %v3435 = vand.u32 %v3434, 4294901760
        %3436 = vmatmul.f32.gmra.mxu0 %v3435
        %v3437 = vpop.f32.mrf.mxu0
        %v3438 = vadd.f32 %v3371, %v3437
        %v3439 = vand.u32 %v2355, 4294901760
        %v3440 = vsub.f32 %v2355, %v3439
        %v3441 = vand.u32 %v3440, 4294901760
        %3442 = vmatmul.f32.gmra.mxu0 %v3441
        %v3443 = vpop.f32.mrf.mxu0
        %v3444 = vadd.f32 %v3376, %v3443
        %v3445 = vand.u32 %v2358, 4294901760
        %v3446 = vsub.f32 %v2358, %v3445
        %v3447 = vand.u32 %v3446, 4294901760
        %3448 = vmatmul.f32.gmra.mxu0 %v3447
        %v3449 = vpop.f32.mrf.mxu0
        %v3450 = vadd.f32 %v3381, %v3449
        %3451 = vdwg.mxu0
        %3452 = vmatpush.msra.mxu0 0.0
        %3453 = vmatpush.msra.mxu0 0.0
        %3454 = vmatpush.msra.mxu0 0.0
        %3455 = vmatpush.msra.mxu0 0.0
        %3456 = vmatpush.msra.mxu0 0.0
        %3457 = vmatpush.msra.mxu0 0.0
        %3458 = vmatpush.msra.mxu0 0.0
        %3459 = vmatpush.msra.mxu0 0.0
        %3460 = vmatpush.msra.mxu0 0.0
        %3461 = vmatpush.msra.mxu0 0.0
        %3462 = vmatpush.msra.mxu0 0.0
        %3463 = vmatpush.msra.mxu0 0.0
        %v3464 = vand.u32 %v2285, 4294901760
        %v3465 = vsub.f32 %v2285, %v3464
        %v3466 = vand.u32 %v3465, 4294901760
        %3467 = vmatpush.msra.mxu0 %v3466
        %v3468 = vand.u32 %v2281, 4294901760
        %v3469 = vsub.f32 %v2281, %v3468
        %v3470 = vand.u32 %v3469, 4294901760
        %3471 = vmatpush.msra.mxu0 %v3470
        %v3472 = vand.u32 %v2277, 4294901760
        %v3473 = vsub.f32 %v2277, %v3472
        %v3474 = vand.u32 %v3473, 4294901760
        %3475 = vmatpush.msra.mxu0 %v3474
        %v3476 = vand.u32 %v2273, 4294901760
        %v3477 = vsub.f32 %v2273, %v3476
        %v3478 = vand.u32 %v3477, 4294901760
        %3479 = vmatpush.msra.mxu0 %v3478
        %v3480 = vand.u32 %v2337, 4294901760
        %3481 = vmatmul.f32.gmra.mxu0 %v3480
        %v3482 = vpop.f32.mrf.mxu0
        %v3483 = vadd.f32 %v3408, %v3482
        %v3484 = vand.u32 %v2340, 4294901760
        %3485 = vmatmul.f32.gmra.mxu0 %v3484
        %v3486 = vpop.f32.mrf.mxu0
        %v3487 = vadd.f32 %v3414, %v3486
        %v3488 = vand.u32 %v2343, 4294901760
        %3489 = vmatmul.f32.gmra.mxu0 %v3488
        %v3490 = vpop.f32.mrf.mxu0
        %v3491 = vadd.f32 %v3420, %v3490
        %v3492 = vand.u32 %v2346, 4294901760
        %3493 = vmatmul.f32.gmra.mxu0 %v3492
        %v3494 = vpop.f32.mrf.mxu0
        %v3495 = vadd.f32 %v3426, %v3494
        %v3496 = vand.u32 %v2349, 4294901760
        %3497 = vmatmul.f32.gmra.mxu0 %v3496
        %v3498 = vpop.f32.mrf.mxu0
        %v3499 = vadd.f32 %v3432, %v3498
        %v3500 = vand.u32 %v2352, 4294901760
        %3501 = vmatmul.f32.gmra.mxu0 %v3500
        %v3502 = vpop.f32.mrf.mxu0
        %v3503 = vadd.f32 %v3438, %v3502
        %v3504 = vand.u32 %v2355, 4294901760
        %3505 = vmatmul.f32.gmra.mxu0 %v3504
        %v3506 = vpop.f32.mrf.mxu0
        %v3507 = vadd.f32 %v3444, %v3506
        %v3508 = vand.u32 %v2358, 4294901760
        %3509 = vmatmul.f32.gmra.mxu0 %v3508
        %v3510 = vpop.f32.mrf.mxu0
        %v3511 = vadd.f32 %v3450, %v3510
        %3512 = vdwg.mxu0
        %3513 = vmatpush.msra.mxu0 0.0
        %3514 = vmatpush.msra.mxu0 0.0
        %3515 = vmatpush.msra.mxu0 0.0
        %3516 = vmatpush.msra.mxu0 0.0
        %3517 = vmatpush.msra.mxu0 0.0
        %3518 = vmatpush.msra.mxu0 0.0
        %3519 = vmatpush.msra.mxu0 0.0
        %3520 = vmatpush.msra.mxu0 0.0
        %3521 = vmatpush.msra.mxu0 0.0
        %3522 = vmatpush.msra.mxu0 0.0
        %3523 = vmatpush.msra.mxu0 0.0
        %3524 = vmatpush.msra.mxu0 0.0
        %v3525 = vand.u32 %v2285, 4294901760
        %3526 = vmatpush.msra.mxu0 %v3525
        %v3527 = vand.u32 %v2281, 4294901760
        %3528 = vmatpush.msra.mxu0 %v3527
        %v3529 = vand.u32 %v2277, 4294901760
        %3530 = vmatpush.msra.mxu0 %v3529
        %v3531 = vand.u32 %v2273, 4294901760
        %3532 = vmatpush.msra.mxu0 %v3531
        %v3533 = vand.u32 %v2337, 4294901760
        %3534 = vmatmul.f32.gmra.mxu0 %v3533
        %v3535 = vpop.f32.mrf.mxu0
        %v3536 = vadd.f32 %v3483, %v3535
        %v3537 = vand.u32 %v2340, 4294901760
        %3538 = vmatmul.f32.gmra.mxu0 %v3537
        %v3539 = vpop.f32.mrf.mxu0
        %v3540 = vadd.f32 %v3487, %v3539
        %v3541 = vand.u32 %v2343, 4294901760
        %3542 = vmatmul.f32.gmra.mxu0 %v3541
        %v3543 = vpop.f32.mrf.mxu0
        %v3544 = vadd.f32 %v3491, %v3543
        %v3545 = vand.u32 %v2346, 4294901760
        %3546 = vmatmul.f32.gmra.mxu0 %v3545
        %v3547 = vpop.f32.mrf.mxu0
        %v3548 = vadd.f32 %v3495, %v3547
        %v3549 = vand.u32 %v2349, 4294901760
        %3550 = vmatmul.f32.gmra.mxu0 %v3549
        %v3551 = vpop.f32.mrf.mxu0
        %v3552 = vadd.f32 %v3499, %v3551
        %v3553 = vand.u32 %v2352, 4294901760
        %3554 = vmatmul.f32.gmra.mxu0 %v3553
        %v3555 = vpop.f32.mrf.mxu0
        %v3556 = vadd.f32 %v3503, %v3555
        %v3557 = vand.u32 %v2355, 4294901760
        %3558 = vmatmul.f32.gmra.mxu0 %v3557
        %v3559 = vpop.f32.mrf.mxu0
        %v3560 = vadd.f32 %v3507, %v3559
        %v3561 = vand.u32 %v2358, 4294901760
        %3562 = vmatmul.f32.gmra.mxu0 %v3561
        %v3563 = vpop.f32.mrf.mxu0
        %v3564 = vadd.f32 %v3511, %v3563
        %3565 = vdwg.mxu0
        %3566 = vmatpush.msra.mxu0 0.0
        %3567 = vmatpush.msra.mxu0 0.0
        %3568 = vmatpush.msra.mxu0 0.0
        %3569 = vmatpush.msra.mxu0 0.0
        %3570 = vmatpush.msra.mxu0 0.0
        %3571 = vmatpush.msra.mxu0 0.0
        %3572 = vmatpush.msra.mxu0 0.0
        %3573 = vmatpush.msra.mxu0 0.0
        %3574 = vmatpush.msra.mxu0 0.0
        %3575 = vmatpush.msra.mxu0 0.0
        %3576 = vmatpush.msra.mxu0 0.0
        %3577 = vmatpush.msra.mxu0 0.0
        %v3578 = vand.u32 %v2286, 4294901760
        %3579 = vmatpush.msra.mxu0 %v3578
        %v3580 = vand.u32 %v2282, 4294901760
        %3581 = vmatpush.msra.mxu0 %v3580
        %v3582 = vand.u32 %v2278, 4294901760
        %3583 = vmatpush.msra.mxu0 %v3582
        %v3584 = vand.u32 %v2274, 4294901760
        %3585 = vmatpush.msra.mxu0 %v3584
        %v3586 = vand.u32 %v2337, 4294901760
        %v3587 = vsub.f32 %v2337, %v3586
        %v3588 = vand.u32 %v3587, 4294901760
        %v3589 = vsub.f32 %v3587, %v3588
        %v3590 = vand.u32 %v3589, 4294901760
        %3591 = vmatmul.f32.gmra.mxu0 %v3590
        %v3592 = vpop.f32.mrf.mxu0
        %v3593 = vadd.f32 %v2299, %v3592
        %v3594 = vand.u32 %v2340, 4294901760
        %v3595 = vsub.f32 %v2340, %v3594
        %v3596 = vand.u32 %v3595, 4294901760
        %v3597 = vsub.f32 %v3595, %v3596
        %v3598 = vand.u32 %v3597, 4294901760
        %3599 = vmatmul.f32.gmra.mxu0 %v3598
        %v3600 = vpop.f32.mrf.mxu0
        %v3601 = vadd.f32 %v2304, %v3600
        %v3602 = vand.u32 %v2343, 4294901760
        %v3603 = vsub.f32 %v2343, %v3602
        %v3604 = vand.u32 %v3603, 4294901760
        %v3605 = vsub.f32 %v3603, %v3604
        %v3606 = vand.u32 %v3605, 4294901760
        %3607 = vmatmul.f32.gmra.mxu0 %v3606
        %v3608 = vpop.f32.mrf.mxu0
        %v3609 = vadd.f32 %v2309, %v3608
        %v3610 = vand.u32 %v2346, 4294901760
        %v3611 = vsub.f32 %v2346, %v3610
        %v3612 = vand.u32 %v3611, 4294901760
        %v3613 = vsub.f32 %v3611, %v3612
        %v3614 = vand.u32 %v3613, 4294901760
        %3615 = vmatmul.f32.gmra.mxu0 %v3614
        %v3616 = vpop.f32.mrf.mxu0
        %v3617 = vadd.f32 %v2314, %v3616
        %v3618 = vand.u32 %v2349, 4294901760
        %v3619 = vsub.f32 %v2349, %v3618
        %v3620 = vand.u32 %v3619, 4294901760
        %v3621 = vsub.f32 %v3619, %v3620
        %v3622 = vand.u32 %v3621, 4294901760
        %3623 = vmatmul.f32.gmra.mxu0 %v3622
        %v3624 = vpop.f32.mrf.mxu0
        %v3625 = vadd.f32 %v2319, %v3624
        %v3626 = vand.u32 %v2352, 4294901760
        %v3627 = vsub.f32 %v2352, %v3626
        %v3628 = vand.u32 %v3627, 4294901760
        %v3629 = vsub.f32 %v3627, %v3628
        %v3630 = vand.u32 %v3629, 4294901760
        %3631 = vmatmul.f32.gmra.mxu0 %v3630
        %v3632 = vpop.f32.mrf.mxu0
        %v3633 = vadd.f32 %v2324, %v3632
        %v3634 = vand.u32 %v2355, 4294901760
        %v3635 = vsub.f32 %v2355, %v3634
        %v3636 = vand.u32 %v3635, 4294901760
        %v3637 = vsub.f32 %v3635, %v3636
        %v3638 = vand.u32 %v3637, 4294901760
        %3639 = vmatmul.f32.gmra.mxu0 %v3638
        %v3640 = vpop.f32.mrf.mxu0
        %v3641 = vadd.f32 %v2329, %v3640
        %v3642 = vand.u32 %v2358, 4294901760
        %v3643 = vsub.f32 %v2358, %v3642
        %v3644 = vand.u32 %v3643, 4294901760
        %v3645 = vsub.f32 %v3643, %v3644
        %v3646 = vand.u32 %v3645, 4294901760
        %3647 = vmatmul.f32.gmra.mxu0 %v3646
        %v3648 = vpop.f32.mrf.mxu0
        %v3649 = vadd.f32 %v2334, %v3648
        %3650 = vdwg.mxu0
        %3651 = vmatpush.msra.mxu0 0.0
        %3652 = vmatpush.msra.mxu0 0.0
        %3653 = vmatpush.msra.mxu0 0.0
        %3654 = vmatpush.msra.mxu0 0.0
        %3655 = vmatpush.msra.mxu0 0.0
        %3656 = vmatpush.msra.mxu0 0.0
        %3657 = vmatpush.msra.mxu0 0.0
        %3658 = vmatpush.msra.mxu0 0.0
        %3659 = vmatpush.msra.mxu0 0.0
        %3660 = vmatpush.msra.mxu0 0.0
        %3661 = vmatpush.msra.mxu0 0.0
        %3662 = vmatpush.msra.mxu0 0.0
        %v3663 = vand.u32 %v2286, 4294901760
        %v3664 = vsub.f32 %v2286, %v3663
        %v3665 = vand.u32 %v3664, 4294901760
        %v3666 = vsub.f32 %v3664, %v3665
        %v3667 = vand.u32 %v3666, 4294901760
        %3668 = vmatpush.msra.mxu0 %v3667
        %v3669 = vand.u32 %v2282, 4294901760
        %v3670 = vsub.f32 %v2282, %v3669
        %v3671 = vand.u32 %v3670, 4294901760
        %v3672 = vsub.f32 %v3670, %v3671
        %v3673 = vand.u32 %v3672, 4294901760
        %3674 = vmatpush.msra.mxu0 %v3673
        %v3675 = vand.u32 %v2278, 4294901760
        %v3676 = vsub.f32 %v2278, %v3675
        %v3677 = vand.u32 %v3676, 4294901760
        %v3678 = vsub.f32 %v3676, %v3677
        %v3679 = vand.u32 %v3678, 4294901760
        %3680 = vmatpush.msra.mxu0 %v3679
        %v3681 = vand.u32 %v2274, 4294901760
        %v3682 = vsub.f32 %v2274, %v3681
        %v3683 = vand.u32 %v3682, 4294901760
        %v3684 = vsub.f32 %v3682, %v3683
        %v3685 = vand.u32 %v3684, 4294901760
        %3686 = vmatpush.msra.mxu0 %v3685
        %v3687 = vand.u32 %v2337, 4294901760
        %3688 = vmatmul.f32.gmra.mxu0 %v3687
        %v3689 = vpop.f32.mrf.mxu0
        %v3690 = vadd.f32 %v3593, %v3689
        %v3691 = vand.u32 %v2340, 4294901760
        %3692 = vmatmul.f32.gmra.mxu0 %v3691
        %v3693 = vpop.f32.mrf.mxu0
        %v3694 = vadd.f32 %v3601, %v3693
        %v3695 = vand.u32 %v2343, 4294901760
        %3696 = vmatmul.f32.gmra.mxu0 %v3695
        %v3697 = vpop.f32.mrf.mxu0
        %v3698 = vadd.f32 %v3609, %v3697
        %v3699 = vand.u32 %v2346, 4294901760
        %3700 = vmatmul.f32.gmra.mxu0 %v3699
        %v3701 = vpop.f32.mrf.mxu0
        %v3702 = vadd.f32 %v3617, %v3701
        %v3703 = vand.u32 %v2349, 4294901760
        %3704 = vmatmul.f32.gmra.mxu0 %v3703
        %v3705 = vpop.f32.mrf.mxu0
        %v3706 = vadd.f32 %v3625, %v3705
        %v3707 = vand.u32 %v2352, 4294901760
        %3708 = vmatmul.f32.gmra.mxu0 %v3707
        %v3709 = vpop.f32.mrf.mxu0
        %v3710 = vadd.f32 %v3633, %v3709
        %v3711 = vand.u32 %v2355, 4294901760
        %3712 = vmatmul.f32.gmra.mxu0 %v3711
        %v3713 = vpop.f32.mrf.mxu0
        %v3714 = vadd.f32 %v3641, %v3713
        %v3715 = vand.u32 %v2358, 4294901760
        %3716 = vmatmul.f32.gmra.mxu0 %v3715
        %v3717 = vpop.f32.mrf.mxu0
        %v3718 = vadd.f32 %v3649, %v3717
        %3719 = vdwg.mxu0
        %3720 = vmatpush.msra.mxu0 0.0
        %3721 = vmatpush.msra.mxu0 0.0
        %3722 = vmatpush.msra.mxu0 0.0
        %3723 = vmatpush.msra.mxu0 0.0
        %3724 = vmatpush.msra.mxu0 0.0
        %3725 = vmatpush.msra.mxu0 0.0
        %3726 = vmatpush.msra.mxu0 0.0
        %3727 = vmatpush.msra.mxu0 0.0
        %3728 = vmatpush.msra.mxu0 0.0
        %3729 = vmatpush.msra.mxu0 0.0
        %3730 = vmatpush.msra.mxu0 0.0
        %3731 = vmatpush.msra.mxu0 0.0
        %v3732 = vand.u32 %v2286, 4294901760
        %v3733 = vsub.f32 %v2286, %v3732
        %3734 = vmatpush.msra.mxu0 %v3733
        %v3735 = vand.u32 %v2282, 4294901760
        %v3736 = vsub.f32 %v2282, %v3735
        %3737 = vmatpush.msra.mxu0 %v3736
        %v3738 = vand.u32 %v2278, 4294901760
        %v3739 = vsub.f32 %v2278, %v3738
        %3740 = vmatpush.msra.mxu0 %v3739
        %v3741 = vand.u32 %v2274, 4294901760
        %v3742 = vsub.f32 %v2274, %v3741
        %3743 = vmatpush.msra.mxu0 %v3742
        %v3744 = vand.u32 %v2337, 4294901760
        %v3745 = vsub.f32 %v2337, %v3744
        %3746 = vmatmul.f32.gmra.mxu0 %v3745
        %v3747 = vpop.f32.mrf.mxu0
        %v3748 = vadd.f32 %v3690, %v3747
        %v3749 = vand.u32 %v2340, 4294901760
        %v3750 = vsub.f32 %v2340, %v3749
        %3751 = vmatmul.f32.gmra.mxu0 %v3750
        %v3752 = vpop.f32.mrf.mxu0
        %v3753 = vadd.f32 %v3694, %v3752
        %v3754 = vand.u32 %v2343, 4294901760
        %v3755 = vsub.f32 %v2343, %v3754
        %3756 = vmatmul.f32.gmra.mxu0 %v3755
        %v3757 = vpop.f32.mrf.mxu0
        %v3758 = vadd.f32 %v3698, %v3757
        %v3759 = vand.u32 %v2346, 4294901760
        %v3760 = vsub.f32 %v2346, %v3759
        %3761 = vmatmul.f32.gmra.mxu0 %v3760
        %v3762 = vpop.f32.mrf.mxu0
        %v3763 = vadd.f32 %v3702, %v3762
        %v3764 = vand.u32 %v2349, 4294901760
        %v3765 = vsub.f32 %v2349, %v3764
        %3766 = vmatmul.f32.gmra.mxu0 %v3765
        %v3767 = vpop.f32.mrf.mxu0
        %v3768 = vadd.f32 %v3706, %v3767
        %v3769 = vand.u32 %v2352, 4294901760
        %v3770 = vsub.f32 %v2352, %v3769
        %3771 = vmatmul.f32.gmra.mxu0 %v3770
        %v3772 = vpop.f32.mrf.mxu0
        %v3773 = vadd.f32 %v3710, %v3772
        %v3774 = vand.u32 %v2355, 4294901760
        %v3775 = vsub.f32 %v2355, %v3774
        %3776 = vmatmul.f32.gmra.mxu0 %v3775
        %v3777 = vpop.f32.mrf.mxu0
        %v3778 = vadd.f32 %v3714, %v3777
        %v3779 = vand.u32 %v2358, 4294901760
        %v3780 = vsub.f32 %v2358, %v3779
        %3781 = vmatmul.f32.gmra.mxu0 %v3780
        %v3782 = vpop.f32.mrf.mxu0
        %v3783 = vadd.f32 %v3718, %v3782
        %3784 = vdwg.mxu0
        %3785 = vmatpush.msra.mxu0 0.0
        %3786 = vmatpush.msra.mxu0 0.0
        %3787 = vmatpush.msra.mxu0 0.0
        %3788 = vmatpush.msra.mxu0 0.0
        %3789 = vmatpush.msra.mxu0 0.0
        %3790 = vmatpush.msra.mxu0 0.0
        %3791 = vmatpush.msra.mxu0 0.0
        %3792 = vmatpush.msra.mxu0 0.0
        %3793 = vmatpush.msra.mxu0 0.0
        %3794 = vmatpush.msra.mxu0 0.0
        %3795 = vmatpush.msra.mxu0 0.0
        %3796 = vmatpush.msra.mxu0 0.0
        %v3797 = vand.u32 %v2286, 4294901760
        %3798 = vmatpush.msra.mxu0 %v3797
        %v3799 = vand.u32 %v2282, 4294901760
        %3800 = vmatpush.msra.mxu0 %v3799
        %v3801 = vand.u32 %v2278, 4294901760
        %3802 = vmatpush.msra.mxu0 %v3801
        %v3803 = vand.u32 %v2274, 4294901760
        %3804 = vmatpush.msra.mxu0 %v3803
        %v3805 = vand.u32 %v2337, 4294901760
        %v3806 = vsub.f32 %v2337, %v3805
        %v3807 = vand.u32 %v3806, 4294901760
        %3808 = vmatmul.f32.gmra.mxu0 %v3807
        %v3809 = vpop.f32.mrf.mxu0
        %v3810 = vadd.f32 %v3748, %v3809
        %v3811 = vand.u32 %v2340, 4294901760
        %v3812 = vsub.f32 %v2340, %v3811
        %v3813 = vand.u32 %v3812, 4294901760
        %3814 = vmatmul.f32.gmra.mxu0 %v3813
        %v3815 = vpop.f32.mrf.mxu0
        %v3816 = vadd.f32 %v3753, %v3815
        %v3817 = vand.u32 %v2343, 4294901760
        %v3818 = vsub.f32 %v2343, %v3817
        %v3819 = vand.u32 %v3818, 4294901760
        %3820 = vmatmul.f32.gmra.mxu0 %v3819
        %v3821 = vpop.f32.mrf.mxu0
        %v3822 = vadd.f32 %v3758, %v3821
        %v3823 = vand.u32 %v2346, 4294901760
        %v3824 = vsub.f32 %v2346, %v3823
        %v3825 = vand.u32 %v3824, 4294901760
        %3826 = vmatmul.f32.gmra.mxu0 %v3825
        %v3827 = vpop.f32.mrf.mxu0
        %v3828 = vadd.f32 %v3763, %v3827
        %v3829 = vand.u32 %v2349, 4294901760
        %v3830 = vsub.f32 %v2349, %v3829
        %v3831 = vand.u32 %v3830, 4294901760
        %3832 = vmatmul.f32.gmra.mxu0 %v3831
        %v3833 = vpop.f32.mrf.mxu0
        %v3834 = vadd.f32 %v3768, %v3833
        %v3835 = vand.u32 %v2352, 4294901760
        %v3836 = vsub.f32 %v2352, %v3835
        %v3837 = vand.u32 %v3836, 4294901760
        %3838 = vmatmul.f32.gmra.mxu0 %v3837
        %v3839 = vpop.f32.mrf.mxu0
        %v3840 = vadd.f32 %v3773, %v3839
        %v3841 = vand.u32 %v2355, 4294901760
        %v3842 = vsub.f32 %v2355, %v3841
        %v3843 = vand.u32 %v3842, 4294901760
        %3844 = vmatmul.f32.gmra.mxu0 %v3843
        %v3845 = vpop.f32.mrf.mxu0
        %v3846 = vadd.f32 %v3778, %v3845
        %v3847 = vand.u32 %v2358, 4294901760
        %v3848 = vsub.f32 %v2358, %v3847
        %v3849 = vand.u32 %v3848, 4294901760
        %3850 = vmatmul.f32.gmra.mxu0 %v3849
        %v3851 = vpop.f32.mrf.mxu0
        %v3852 = vadd.f32 %v3783, %v3851
        %3853 = vdwg.mxu0
        %3854 = vmatpush.msra.mxu0 0.0
        %3855 = vmatpush.msra.mxu0 0.0
        %3856 = vmatpush.msra.mxu0 0.0
        %3857 = vmatpush.msra.mxu0 0.0
        %3858 = vmatpush.msra.mxu0 0.0
        %3859 = vmatpush.msra.mxu0 0.0
        %3860 = vmatpush.msra.mxu0 0.0
        %3861 = vmatpush.msra.mxu0 0.0
        %3862 = vmatpush.msra.mxu0 0.0
        %3863 = vmatpush.msra.mxu0 0.0
        %3864 = vmatpush.msra.mxu0 0.0
        %3865 = vmatpush.msra.mxu0 0.0
        %v3866 = vand.u32 %v2286, 4294901760
        %v3867 = vsub.f32 %v2286, %v3866
        %v3868 = vand.u32 %v3867, 4294901760
        %3869 = vmatpush.msra.mxu0 %v3868
        %v3870 = vand.u32 %v2282, 4294901760
        %v3871 = vsub.f32 %v2282, %v3870
        %v3872 = vand.u32 %v3871, 4294901760
        %3873 = vmatpush.msra.mxu0 %v3872
        %v3874 = vand.u32 %v2278, 4294901760
        %v3875 = vsub.f32 %v2278, %v3874
        %v3876 = vand.u32 %v3875, 4294901760
        %3877 = vmatpush.msra.mxu0 %v3876
        %v3878 = vand.u32 %v2274, 4294901760
        %v3879 = vsub.f32 %v2274, %v3878
        %v3880 = vand.u32 %v3879, 4294901760
        %3881 = vmatpush.msra.mxu0 %v3880
        %v3882 = vand.u32 %v2337, 4294901760
        %3883 = vmatmul.f32.gmra.mxu0 %v3882
        %v3884 = vpop.f32.mrf.mxu0
        %v3885 = vadd.f32 %v3810, %v3884
        %v3886 = vand.u32 %v2340, 4294901760
        %3887 = vmatmul.f32.gmra.mxu0 %v3886
        %v3888 = vpop.f32.mrf.mxu0
        %v3889 = vadd.f32 %v3816, %v3888
        %v3890 = vand.u32 %v2343, 4294901760
        %3891 = vmatmul.f32.gmra.mxu0 %v3890
        %v3892 = vpop.f32.mrf.mxu0
        %v3893 = vadd.f32 %v3822, %v3892
        %v3894 = vand.u32 %v2346, 4294901760
        %3895 = vmatmul.f32.gmra.mxu0 %v3894
        %v3896 = vpop.f32.mrf.mxu0
        %v3897 = vadd.f32 %v3828, %v3896
        %v3898 = vand.u32 %v2349, 4294901760
        %3899 = vmatmul.f32.gmra.mxu0 %v3898
        %v3900 = vpop.f32.mrf.mxu0
        %v3901 = vadd.f32 %v3834, %v3900
        %v3902 = vand.u32 %v2352, 4294901760
        %3903 = vmatmul.f32.gmra.mxu0 %v3902
        %v3904 = vpop.f32.mrf.mxu0
        %v3905 = vadd.f32 %v3840, %v3904
        %v3906 = vand.u32 %v2355, 4294901760
        %3907 = vmatmul.f32.gmra.mxu0 %v3906
        %v3908 = vpop.f32.mrf.mxu0
        %v3909 = vadd.f32 %v3846, %v3908
        %v3910 = vand.u32 %v2358, 4294901760
        %3911 = vmatmul.f32.gmra.mxu0 %v3910
        %v3912 = vpop.f32.mrf.mxu0
        %v3913 = vadd.f32 %v3852, %v3912
        %3914 = vdwg.mxu0
        %3915 = vmatpush.msra.mxu0 0.0
        %3916 = vmatpush.msra.mxu0 0.0
        %3917 = vmatpush.msra.mxu0 0.0
        %3918 = vmatpush.msra.mxu0 0.0
        %3919 = vmatpush.msra.mxu0 0.0
        %3920 = vmatpush.msra.mxu0 0.0
        %3921 = vmatpush.msra.mxu0 0.0
        %3922 = vmatpush.msra.mxu0 0.0
        %3923 = vmatpush.msra.mxu0 0.0
        %3924 = vmatpush.msra.mxu0 0.0
        %3925 = vmatpush.msra.mxu0 0.0
        %3926 = vmatpush.msra.mxu0 0.0
        %v3927 = vand.u32 %v2286, 4294901760
        %3928 = vmatpush.msra.mxu0 %v3927
        %v3929 = vand.u32 %v2282, 4294901760
        %3930 = vmatpush.msra.mxu0 %v3929
        %v3931 = vand.u32 %v2278, 4294901760
        %3932 = vmatpush.msra.mxu0 %v3931
        %v3933 = vand.u32 %v2274, 4294901760
        %3934 = vmatpush.msra.mxu0 %v3933
        %v3935 = vand.u32 %v2337, 4294901760
        %3936 = vmatmul.f32.gmra.mxu0 %v3935
        %v3937 = vpop.f32.mrf.mxu0
        %v3938 = vadd.f32 %v3885, %v3937
        %v3939 = vand.u32 %v2340, 4294901760
        %3940 = vmatmul.f32.gmra.mxu0 %v3939
        %v3941 = vpop.f32.mrf.mxu0
        %v3942 = vadd.f32 %v3889, %v3941
        %v3943 = vand.u32 %v2343, 4294901760
        %3944 = vmatmul.f32.gmra.mxu0 %v3943
        %v3945 = vpop.f32.mrf.mxu0
        %v3946 = vadd.f32 %v3893, %v3945
        %v3947 = vand.u32 %v2346, 4294901760
        %3948 = vmatmul.f32.gmra.mxu0 %v3947
        %v3949 = vpop.f32.mrf.mxu0
        %v3950 = vadd.f32 %v3897, %v3949
        %v3951 = vand.u32 %v2349, 4294901760
        %3952 = vmatmul.f32.gmra.mxu0 %v3951
        %v3953 = vpop.f32.mrf.mxu0
        %v3954 = vadd.f32 %v3901, %v3953
        %v3955 = vand.u32 %v2352, 4294901760
        %3956 = vmatmul.f32.gmra.mxu0 %v3955
        %v3957 = vpop.f32.mrf.mxu0
        %v3958 = vadd.f32 %v3905, %v3957
        %v3959 = vand.u32 %v2355, 4294901760
        %3960 = vmatmul.f32.gmra.mxu0 %v3959
        %v3961 = vpop.f32.mrf.mxu0
        %v3962 = vadd.f32 %v3909, %v3961
        %v3963 = vand.u32 %v2358, 4294901760
        %3964 = vmatmul.f32.gmra.mxu0 %v3963
        %v3965 = vpop.f32.mrf.mxu0
        %v3966 = vadd.f32 %v3913, %v3965
        %3967 = vdwg.mxu0
        %s3968 = scalar_lea.vmem %s370, 128 [#allocation6]
        %3969 = vst [vmem:[%s3968] sm:$0xff] %v2732
        %3970 = vst [vmem:[%s3968 + $0x8] sm:$0xff] %v3134
        %3971 = vst [vmem:[%s3968 + $0x10] sm:$0xff] %v3536
        %3972 = vst [vmem:[%s3968 + $0x18] sm:$0xff] %v3938
        %3973 = vst [vmem:[%s3968 + $0x20] sm:$0xff] %v2736
        %3974 = vst [vmem:[%s3968 + $0x28] sm:$0xff] %v3138
        %3975 = vst [vmem:[%s3968 + $0x30] sm:$0xff] %v3540
        %3976 = vst [vmem:[%s3968 + $0x38] sm:$0xff] %v3942
        %3977 = vst [vmem:[%s3968 + $0x40] sm:$0xff] %v2740
        %3978 = vst [vmem:[%s3968 + $0x48] sm:$0xff] %v3142
        %3979 = vst [vmem:[%s3968 + $0x50] sm:$0xff] %v3544
        %3980 = vst [vmem:[%s3968 + $0x58] sm:$0xff] %v3946
        %3981 = vst [vmem:[%s3968 + $0x60] sm:$0xff] %v2744
        %3982 = vst [vmem:[%s3968 + $0x68] sm:$0xff] %v3146
        %3983 = vst [vmem:[%s3968 + $0x70] sm:$0xff] %v3548
        %3984 = vst [vmem:[%s3968 + $0x78] sm:$0xff] %v3950
        %s3985 = scalar_lea.vmem %s377, 128 [#allocation8]
        %3986 = vst [vmem:[%s3985] sm:$0xff] %v2748
        %3987 = vst [vmem:[%s3985 + $0x8] sm:$0xff] %v3150
        %3988 = vst [vmem:[%s3985 + $0x10] sm:$0xff] %v3552
        %3989 = vst [vmem:[%s3985 + $0x18] sm:$0xff] %v3954
        %3990 = vst [vmem:[%s3985 + $0x20] sm:$0xff] %v2752
        %3991 = vst [vmem:[%s3985 + $0x28] sm:$0xff] %v3154
        %3992 = vst [vmem:[%s3985 + $0x30] sm:$0xff] %v3556
        %3993 = vst [vmem:[%s3985 + $0x38] sm:$0xff] %v3958
        %3994 = vst [vmem:[%s3985 + $0x40] sm:$0xff] %v2756
        %3995 = vst [vmem:[%s3985 + $0x48] sm:$0xff] %v3158
        %3996 = vst [vmem:[%s3985 + $0x50] sm:$0xff] %v3560
        %3997 = vst [vmem:[%s3985 + $0x58] sm:$0xff] %v3962
        %3998 = vst [vmem:[%s3985 + $0x60] sm:$0xff] %v2760
        %3999 = vst [vmem:[%s3985 + $0x68] sm:$0xff] %v3162
        %4000 = vst [vmem:[%s3985 + $0x70] sm:$0xff] %v3564
        %4001 = vst [vmem:[%s3985 + $0x78] sm:$0xff] %v3966
        %s4002 = scalar_lea.vmem %s316, 128 [#allocation2]
        %v4003 = vld [vmem:[%s4002] sm:$0xff]
        %v4004 = vld [vmem:[%s4002 + $0x8] sm:$0xff]
        %v4005 = vld [vmem:[%s4002 + $0x10] sm:$0xff]
        %v4006 = vld [vmem:[%s4002 + $0x18] sm:$0xff]
        %v4007 = vld [vmem:[%s4002 + $0x20] sm:$0xff]
        %v4008 = vld [vmem:[%s4002 + $0x28] sm:$0xff]
        %v4009 = vld [vmem:[%s4002 + $0x30] sm:$0xff]
        %v4010 = vld [vmem:[%s4002 + $0x38] sm:$0xff]
        %v4011 = vld [vmem:[%s4002 + $0x40] sm:$0xff]
        %v4012 = vld [vmem:[%s4002 + $0x48] sm:$0xff]
        %v4013 = vld [vmem:[%s4002 + $0x50] sm:$0xff]
        %v4014 = vld [vmem:[%s4002 + $0x58] sm:$0xff]
        %v4015 = vld [vmem:[%s4002 + $0x60] sm:$0xff]
        %v4016 = vld [vmem:[%s4002 + $0x68] sm:$0xff]
        %v4017 = vld [vmem:[%s4002 + $0x70] sm:$0xff]
        %v4018 = vld [vmem:[%s4002 + $0x78] sm:$0xff]
        %v4019 = vmul.f32 %v2748, 0.5
        %v4020 = vmul.f32 %v3150, 0.5
        %v4021 = vmul.f32 %v3552, 0.5
        %v4022 = vmul.f32 %v3954, 0.5
        %v4023 = vmul.f32 %v2752, 0.5
        %v4024 = vmul.f32 %v3154, 0.5
        %v4025 = vmul.f32 %v3556, 0.5
        %v4026 = vmul.f32 %v3958, 0.5
        %v4027 = vmul.f32 %v2756, 0.5
        %v4028 = vmul.f32 %v3158, 0.5
        %v4029 = vmul.f32 %v3560, 0.5
        %v4030 = vmul.f32 %v3962, 0.5
        %v4031 = vmul.f32 %v2760, 0.5
        %v4032 = vmul.f32 %v3162, 0.5
        %v4033 = vmul.f32 %v3564, 0.5
        %v4034 = vmul.f32 %v3966, 0.5
        %v4035 = vmul.f32 %v4019, 1.442695
        %v4036 = vpow.pop %v4035
        %v4037 = vmul.f32 %v4020, 1.442695
        %v4038 = vpow.pop %v4037
        %v4039 = vmul.f32 %v4021, 1.442695
        %v4040 = vpow.pop %v4039
        %v4041 = vmul.f32 %v4022, 1.442695
        %v4042 = vpow.pop %v4041
        %v4043 = vmul.f32 %v4023, 1.442695
        %v4044 = vpow.pop %v4043
        %v4045 = vmul.f32 %v4024, 1.442695
        %v4046 = vpow.pop %v4045
        %v4047 = vmul.f32 %v4025, 1.442695
        %v4048 = vpow.pop %v4047
        %v4049 = vmul.f32 %v4026, 1.442695
        %v4050 = vpow.pop %v4049
        %v4051 = vmul.f32 %v4027, 1.442695
        %v4052 = vpow.pop %v4051
        %v4053 = vmul.f32 %v4028, 1.442695
        %v4054 = vpow.pop %v4053
        %v4055 = vmul.f32 %v4029, 1.442695
        %v4056 = vpow.pop %v4055
        %v4057 = vmul.f32 %v4030, 1.442695
        %v4058 = vpow.pop %v4057
        %v4059 = vmul.f32 %v4031, 1.442695
        %v4060 = vpow.pop %v4059
        %v4061 = vmul.f32 %v4032, 1.442695
        %v4062 = vpow.pop %v4061
        %v4063 = vmul.f32 %v4033, 1.442695
        %v4064 = vpow.pop %v4063
        %v4065 = vmul.f32 %v4034, 1.442695
        %v4066 = vpow.pop %v4065
        %v4067 = vmul.f32 %v4003, %v4036
        %v4068 = vmul.f32 %v4004, %v4038
        %v4069 = vmul.f32 %v4005, %v4040
        %v4070 = vmul.f32 %v4006, %v4042
        %v4071 = vmul.f32 %v4007, %v4044
        %v4072 = vmul.f32 %v4008, %v4046
        %v4073 = vmul.f32 %v4009, %v4048
        %v4074 = vmul.f32 %v4010, %v4050
        %v4075 = vmul.f32 %v4011, %v4052
        %v4076 = vmul.f32 %v4012, %v4054
        %v4077 = vmul.f32 %v4013, %v4056
        %v4078 = vmul.f32 %v4014, %v4058
        %v4079 = vmul.f32 %v4015, %v4060
        %v4080 = vmul.f32 %v4016, %v4062
        %v4081 = vmul.f32 %v4017, %v4064
        %v4082 = vmul.f32 %v4018, %v4066
        %v4083 = vadd.f32 %v2732, %v4067
        %v4084 = vadd.f32 %v3134, %v4068
        %v4085 = vadd.f32 %v3536, %v4069
        %v4086 = vadd.f32 %v3938, %v4070
        %v4087 = vadd.f32 %v2736, %v4071
        %v4088 = vadd.f32 %v3138, %v4072
        %v4089 = vadd.f32 %v3540, %v4073
        %v4090 = vadd.f32 %v3942, %v4074
        %v4091 = vadd.f32 %v2740, %v4075
        %v4092 = vadd.f32 %v3142, %v4076
        %v4093 = vadd.f32 %v3544, %v4077
        %v4094 = vadd.f32 %v3946, %v4078
        %v4095 = vadd.f32 %v2744, %v4079
        %v4096 = vadd.f32 %v3146, %v4080
        %v4097 = vadd.f32 %v3548, %v4081
        %v4098 = vadd.f32 %v3950, %v4082
        %s4099 = scalar_lea.vmem %s363, 128 [#allocation5]
        %4100 = vst [vmem:[%s4099] sm:$0xff] %v4083
        %4101 = vst [vmem:[%s4099 + $0x8] sm:$0xff] %v4084
        %4102 = vst [vmem:[%s4099 + $0x10] sm:$0xff] %v4085
        %4103 = vst [vmem:[%s4099 + $0x18] sm:$0xff] %v4086
        %4104 = vst [vmem:[%s4099 + $0x20] sm:$0xff] %v4087
        %4105 = vst [vmem:[%s4099 + $0x28] sm:$0xff] %v4088
        %4106 = vst [vmem:[%s4099 + $0x30] sm:$0xff] %v4089
        %4107 = vst [vmem:[%s4099 + $0x38] sm:$0xff] %v4090
        %4108 = vst [vmem:[%s4099 + $0x40] sm:$0xff] %v4091
        %4109 = vst [vmem:[%s4099 + $0x48] sm:$0xff] %v4092
        %4110 = vst [vmem:[%s4099 + $0x50] sm:$0xff] %v4093
        %4111 = vst [vmem:[%s4099 + $0x58] sm:$0xff] %v4094
        %4112 = vst [vmem:[%s4099 + $0x60] sm:$0xff] %v4095
        %4113 = vst [vmem:[%s4099 + $0x68] sm:$0xff] %v4096
        %4114 = vst [vmem:[%s4099 + $0x70] sm:$0xff] %v4097
        %4115 = vst [vmem:[%s4099 + $0x78] sm:$0xff] %v4098
        %s4116 = scalar_lea.vmem %s395, 128
        %v4117 = vld [vmem:[%s4116] sm:$0xff]
        %v4118 = vld [vmem:[%s4116 + $0x8] sm:$0xff]
        %v4119 = vld [vmem:[%s4116 + $0x10] sm:$0xff]
        %v4120 = vld [vmem:[%s4116 + $0x18] sm:$0xff]
        %v4121 = vld [vmem:[%s4116 + $0x20] sm:$0xff]
        %v4122 = vld [vmem:[%s4116 + $0x28] sm:$0xff]
        %v4123 = vld [vmem:[%s4116 + $0x30] sm:$0xff]
        %v4124 = vld [vmem:[%s4116 + $0x38] sm:$0xff]
        %s4125 = scalar_lea.vmem %s387, 256
        %v4126 = vld [vmem:[%s4125] sm:$0xff]
        %v4127 = vld [vmem:[%s4125 + $0x8] sm:$0xff]
        %v4128 = vld [vmem:[%s4125 + $0x10] sm:$0xff]
        %v4129 = vld [vmem:[%s4125 + $0x18] sm:$0xff]
        %v4130 = vld [vmem:[%s4125 + $0x20] sm:$0xff]
        %v4131 = vld [vmem:[%s4125 + $0x28] sm:$0xff]
        %v4132 = vld [vmem:[%s4125 + $0x30] sm:$0xff]
        %v4133 = vld [vmem:[%s4125 + $0x38] sm:$0xff]
        %v4134 = vld [vmem:[%s4125 + $0x40] sm:$0xff]
        %v4135 = vld [vmem:[%s4125 + $0x48] sm:$0xff]
        %v4136 = vld [vmem:[%s4125 + $0x50] sm:$0xff]
        %v4137 = vld [vmem:[%s4125 + $0x58] sm:$0xff]
        %v4138 = vld [vmem:[%s4125 + $0x60] sm:$0xff]
        %v4139 = vld [vmem:[%s4125 + $0x68] sm:$0xff]
        %v4140 = vld [vmem:[%s4125 + $0x70] sm:$0xff]
        %v4141 = vld [vmem:[%s4125 + $0x78] sm:$0xff]
        %s4142 = scalar_lea.vmem %s402, 128
        %v4143 = vld [vmem:[%s4142] sm:$0xff]
        %v4144 = vld [vmem:[%s4142 + $0x8] sm:$0xff]
        %v4145 = vld [vmem:[%s4142 + $0x10] sm:$0xff]
        %v4146 = vld [vmem:[%s4142 + $0x18] sm:$0xff]
        %v4147 = vld [vmem:[%s4142 + $0x20] sm:$0xff]
        %v4148 = vld [vmem:[%s4142 + $0x28] sm:$0xff]
        %v4149 = vld [vmem:[%s4142 + $0x30] sm:$0xff]
        %v4150 = vld [vmem:[%s4142 + $0x38] sm:$0xff]
        %4152 = vset.pattern.permute.xlu0 0
        %4153 = vperm.xlu0 %4152, %v4143
        %v4154 = vpop.permute.xlu0 %4153
        %4157 = vset.pattern.permute.xlu0 0
        %4158 = vperm.xlu0 %4157, %v4144
        %v4159 = vpop.permute.xlu0 %4158
        %4162 = vset.pattern.permute.xlu0 0
        %4163 = vperm.xlu0 %4162, %v4145
        %v4164 = vpop.permute.xlu0 %4163
        %4167 = vset.pattern.permute.xlu0 0
        %4168 = vperm.xlu0 %4167, %v4146
        %v4169 = vpop.permute.xlu0 %4168
        %4172 = vset.pattern.permute.xlu0 0
        %4173 = vperm.xlu0 %4172, %v4147
        %v4174 = vpop.permute.xlu0 %4173
        %4177 = vset.pattern.permute.xlu0 0
        %4178 = vperm.xlu0 %4177, %v4148
        %v4179 = vpop.permute.xlu0 %4178
        %4182 = vset.pattern.permute.xlu0 0
        %4183 = vperm.xlu0 %4182, %v4149
        %v4184 = vpop.permute.xlu0 %4183
        %4187 = vset.pattern.permute.xlu0 0
        %4188 = vperm.xlu0 %4187, %v4150
        %v4189 = vpop.permute.xlu0 %4188
        %v4192 = vsel %vm484, %v4117, 0
        %v4195 = vsel %vm484, %v4118, 0
        %v4198 = vsel %vm484, %v4119, 0
        %v4201 = vsel %vm484, %v4120, 0
        %v4204 = vsel %vm484, %v4121, 0
        %v4207 = vsel %vm484, %v4122, 0
        %v4210 = vsel %vm484, %v4123, 0
        %v4213 = vsel %vm484, %v4124, 0
        %4215 = vmatpush.msra.mxu0 0.0
        %4216 = vmatpush.msra.mxu0 0.0
        %4217 = vmatpush.msra.mxu0 0.0
        %4218 = vmatpush.msra.mxu0 0.0
        %4219 = vmatpush.msra.mxu0 0.0
        %4220 = vmatpush.msra.mxu0 0.0
        %4221 = vmatpush.msra.mxu0 0.0
        %4222 = vmatpush.msra.mxu0 0.0
        %4223 = vmatpush.msra.mxu0 0.0
        %4224 = vmatpush.msra.mxu0 0.0
        %4225 = vmatpush.msra.mxu0 0.0
        %4226 = vmatpush.msra.mxu0 0.0
        %v4227 = vand.u32 %v4138, 4294901760
        %4228 = vmatpush.msra.mxu0 %v4227
        %v4229 = vand.u32 %v4134, 4294901760
        %4230 = vmatpush.msra.mxu0 %v4229
        %v4231 = vand.u32 %v4130, 4294901760
        %4232 = vmatpush.msra.mxu0 %v4231
        %v4233 = vand.u32 %v4126, 4294901760
        %4234 = vmatpush.msra.mxu0 %v4233
        %v4235 = vand.u32 %v4192, 4294901760
        %v4236 = vsub.f32 %v4192, %v4235
        %v4237 = vand.u32 %v4236, 4294901760
        %v4238 = vsub.f32 %v4236, %v4237
        %v4239 = vand.u32 %v4238, 4294901760
        %4240 = vmatmul.f32.gmra.mxu0 %v4239
        %v4241 = vpop.f32.mrf.mxu0
        %v4242 = vadd.f32 %v4154, %v4241
        %v4243 = vand.u32 %v4195, 4294901760
        %v4244 = vsub.f32 %v4195, %v4243
        %v4245 = vand.u32 %v4244, 4294901760
        %v4246 = vsub.f32 %v4244, %v4245
        %v4247 = vand.u32 %v4246, 4294901760
        %4248 = vmatmul.f32.gmra.mxu0 %v4247
        %v4249 = vpop.f32.mrf.mxu0
        %v4250 = vadd.f32 %v4159, %v4249
        %v4251 = vand.u32 %v4198, 4294901760
        %v4252 = vsub.f32 %v4198, %v4251
        %v4253 = vand.u32 %v4252, 4294901760
        %v4254 = vsub.f32 %v4252, %v4253
        %v4255 = vand.u32 %v4254, 4294901760
        %4256 = vmatmul.f32.gmra.mxu0 %v4255
        %v4257 = vpop.f32.mrf.mxu0
        %v4258 = vadd.f32 %v4164, %v4257
        %v4259 = vand.u32 %v4201, 4294901760
        %v4260 = vsub.f32 %v4201, %v4259
        %v4261 = vand.u32 %v4260, 4294901760
        %v4262 = vsub.f32 %v4260, %v4261
        %v4263 = vand.u32 %v4262, 4294901760
        %4264 = vmatmul.f32.gmra.mxu0 %v4263
        %v4265 = vpop.f32.mrf.mxu0
        %v4266 = vadd.f32 %v4169, %v4265
        %v4267 = vand.u32 %v4204, 4294901760
        %v4268 = vsub.f32 %v4204, %v4267
        %v4269 = vand.u32 %v4268, 4294901760
        %v4270 = vsub.f32 %v4268, %v4269
        %v4271 = vand.u32 %v4270, 4294901760
        %4272 = vmatmul.f32.gmra.mxu0 %v4271
        %v4273 = vpop.f32.mrf.mxu0
        %v4274 = vadd.f32 %v4174, %v4273
        %v4275 = vand.u32 %v4207, 4294901760
        %v4276 = vsub.f32 %v4207, %v4275
        %v4277 = vand.u32 %v4276, 4294901760
        %v4278 = vsub.f32 %v4276, %v4277
        %v4279 = vand.u32 %v4278, 4294901760
        %4280 = vmatmul.f32.gmra.mxu0 %v4279
        %v4281 = vpop.f32.mrf.mxu0
        %v4282 = vadd.f32 %v4179, %v4281
        %v4283 = vand.u32 %v4210, 4294901760
        %v4284 = vsub.f32 %v4210, %v4283
        %v4285 = vand.u32 %v4284, 4294901760
        %v4286 = vsub.f32 %v4284, %v4285
        %v4287 = vand.u32 %v4286, 4294901760
        %4288 = vmatmul.f32.gmra.mxu0 %v4287
        %v4289 = vpop.f32.mrf.mxu0
        %v4290 = vadd.f32 %v4184, %v4289
        %v4291 = vand.u32 %v4213, 4294901760
        %v4292 = vsub.f32 %v4213, %v4291
        %v4293 = vand.u32 %v4292, 4294901760
        %v4294 = vsub.f32 %v4292, %v4293
        %v4295 = vand.u32 %v4294, 4294901760
        %4296 = vmatmul.f32.gmra.mxu0 %v4295
        %v4297 = vpop.f32.mrf.mxu0
        %v4298 = vadd.f32 %v4189, %v4297
        %4299 = vdwg.mxu0
        %4300 = vmatpush.msra.mxu0 0.0
        %4301 = vmatpush.msra.mxu0 0.0
        %4302 = vmatpush.msra.mxu0 0.0
        %4303 = vmatpush.msra.mxu0 0.0
        %4304 = vmatpush.msra.mxu0 0.0
        %4305 = vmatpush.msra.mxu0 0.0
        %4306 = vmatpush.msra.mxu0 0.0
        %4307 = vmatpush.msra.mxu0 0.0
        %4308 = vmatpush.msra.mxu0 0.0
        %4309 = vmatpush.msra.mxu0 0.0
        %4310 = vmatpush.msra.mxu0 0.0
        %4311 = vmatpush.msra.mxu0 0.0
        %v4312 = vand.u32 %v4138, 4294901760
        %v4313 = vsub.f32 %v4138, %v4312
        %v4314 = vand.u32 %v4313, 4294901760
        %v4315 = vsub.f32 %v4313, %v4314
        %v4316 = vand.u32 %v4315, 4294901760
        %4317 = vmatpush.msra.mxu0 %v4316
        %v4318 = vand.u32 %v4134, 4294901760
        %v4319 = vsub.f32 %v4134, %v4318
        %v4320 = vand.u32 %v4319, 4294901760
        %v4321 = vsub.f32 %v4319, %v4320
        %v4322 = vand.u32 %v4321, 4294901760
        %4323 = vmatpush.msra.mxu0 %v4322
        %v4324 = vand.u32 %v4130, 4294901760
        %v4325 = vsub.f32 %v4130, %v4324
        %v4326 = vand.u32 %v4325, 4294901760
        %v4327 = vsub.f32 %v4325, %v4326
        %v4328 = vand.u32 %v4327, 4294901760
        %4329 = vmatpush.msra.mxu0 %v4328
        %v4330 = vand.u32 %v4126, 4294901760
        %v4331 = vsub.f32 %v4126, %v4330
        %v4332 = vand.u32 %v4331, 4294901760
        %v4333 = vsub.f32 %v4331, %v4332
        %v4334 = vand.u32 %v4333, 4294901760
        %4335 = vmatpush.msra.mxu0 %v4334
        %v4336 = vand.u32 %v4192, 4294901760
        %4337 = vmatmul.f32.gmra.mxu0 %v4336
        %v4338 = vpop.f32.mrf.mxu0
        %v4339 = vadd.f32 %v4242, %v4338
        %v4340 = vand.u32 %v4195, 4294901760
        %4341 = vmatmul.f32.gmra.mxu0 %v4340
        %v4342 = vpop.f32.mrf.mxu0
        %v4343 = vadd.f32 %v4250, %v4342
        %v4344 = vand.u32 %v4198, 4294901760
        %4345 = vmatmul.f32.gmra.mxu0 %v4344
        %v4346 = vpop.f32.mrf.mxu0
        %v4347 = vadd.f32 %v4258, %v4346
        %v4348 = vand.u32 %v4201, 4294901760
        %4349 = vmatmul.f32.gmra.mxu0 %v4348
        %v4350 = vpop.f32.mrf.mxu0
        %v4351 = vadd.f32 %v4266, %v4350
        %v4352 = vand.u32 %v4204, 4294901760
        %4353 = vmatmul.f32.gmra.mxu0 %v4352
        %v4354 = vpop.f32.mrf.mxu0
        %v4355 = vadd.f32 %v4274, %v4354
        %v4356 = vand.u32 %v4207, 4294901760
        %4357 = vmatmul.f32.gmra.mxu0 %v4356
        %v4358 = vpop.f32.mrf.mxu0
        %v4359 = vadd.f32 %v4282, %v4358
        %v4360 = vand.u32 %v4210, 4294901760
        %4361 = vmatmul.f32.gmra.mxu0 %v4360
        %v4362 = vpop.f32.mrf.mxu0
        %v4363 = vadd.f32 %v4290, %v4362
        %v4364 = vand.u32 %v4213, 4294901760
        %4365 = vmatmul.f32.gmra.mxu0 %v4364
        %v4366 = vpop.f32.mrf.mxu0
        %v4367 = vadd.f32 %v4298, %v4366
        %4368 = vdwg.mxu0
        %4369 = vmatpush.msra.mxu0 0.0
        %4370 = vmatpush.msra.mxu0 0.0
        %4371 = vmatpush.msra.mxu0 0.0
        %4372 = vmatpush.msra.mxu0 0.0
        %4373 = vmatpush.msra.mxu0 0.0
        %4374 = vmatpush.msra.mxu0 0.0
        %4375 = vmatpush.msra.mxu0 0.0
        %4376 = vmatpush.msra.mxu0 0.0
        %4377 = vmatpush.msra.mxu0 0.0
        %4378 = vmatpush.msra.mxu0 0.0
        %4379 = vmatpush.msra.mxu0 0.0
        %4380 = vmatpush.msra.mxu0 0.0
        %v4381 = vand.u32 %v4138, 4294901760
        %v4382 = vsub.f32 %v4138, %v4381
        %4383 = vmatpush.msra.mxu0 %v4382
        %v4384 = vand.u32 %v4134, 4294901760
        %v4385 = vsub.f32 %v4134, %v4384
        %4386 = vmatpush.msra.mxu0 %v4385
        %v4387 = vand.u32 %v4130, 4294901760
        %v4388 = vsub.f32 %v4130, %v4387
        %4389 = vmatpush.msra.mxu0 %v4388
        %v4390 = vand.u32 %v4126, 4294901760
        %v4391 = vsub.f32 %v4126, %v4390
        %4392 = vmatpush.msra.mxu0 %v4391
        %v4393 = vand.u32 %v4192, 4294901760
        %v4394 = vsub.f32 %v4192, %v4393
        %4395 = vmatmul.f32.gmra.mxu0 %v4394
        %v4396 = vpop.f32.mrf.mxu0
        %v4397 = vadd.f32 %v4339, %v4396
        %v4398 = vand.u32 %v4195, 4294901760
        %v4399 = vsub.f32 %v4195, %v4398
        %4400 = vmatmul.f32.gmra.mxu0 %v4399
        %v4401 = vpop.f32.mrf.mxu0
        %v4402 = vadd.f32 %v4343, %v4401
        %v4403 = vand.u32 %v4198, 4294901760
        %v4404 = vsub.f32 %v4198, %v4403
        %4405 = vmatmul.f32.gmra.mxu0 %v4404
        %v4406 = vpop.f32.mrf.mxu0
        %v4407 = vadd.f32 %v4347, %v4406
        %v4408 = vand.u32 %v4201, 4294901760
        %v4409 = vsub.f32 %v4201, %v4408
        %4410 = vmatmul.f32.gmra.mxu0 %v4409
        %v4411 = vpop.f32.mrf.mxu0
        %v4412 = vadd.f32 %v4351, %v4411
        %v4413 = vand.u32 %v4204, 4294901760
        %v4414 = vsub.f32 %v4204, %v4413
        %4415 = vmatmul.f32.gmra.mxu0 %v4414
        %v4416 = vpop.f32.mrf.mxu0
        %v4417 = vadd.f32 %v4355, %v4416
        %v4418 = vand.u32 %v4207, 4294901760
        %v4419 = vsub.f32 %v4207, %v4418
        %4420 = vmatmul.f32.gmra.mxu0 %v4419
        %v4421 = vpop.f32.mrf.mxu0
        %v4422 = vadd.f32 %v4359, %v4421
        %v4423 = vand.u32 %v4210, 4294901760
        %v4424 = vsub.f32 %v4210, %v4423
        %4425 = vmatmul.f32.gmra.mxu0 %v4424
        %v4426 = vpop.f32.mrf.mxu0
        %v4427 = vadd.f32 %v4363, %v4426
        %v4428 = vand.u32 %v4213, 4294901760
        %v4429 = vsub.f32 %v4213, %v4428
        %4430 = vmatmul.f32.gmra.mxu0 %v4429
        %v4431 = vpop.f32.mrf.mxu0
        %v4432 = vadd.f32 %v4367, %v4431
        %4433 = vdwg.mxu0
        %4434 = vmatpush.msra.mxu0 0.0
        %4435 = vmatpush.msra.mxu0 0.0
        %4436 = vmatpush.msra.mxu0 0.0
        %4437 = vmatpush.msra.mxu0 0.0
        %4438 = vmatpush.msra.mxu0 0.0
        %4439 = vmatpush.msra.mxu0 0.0
        %4440 = vmatpush.msra.mxu0 0.0
        %4441 = vmatpush.msra.mxu0 0.0
        %4442 = vmatpush.msra.mxu0 0.0
        %4443 = vmatpush.msra.mxu0 0.0
        %4444 = vmatpush.msra.mxu0 0.0
        %4445 = vmatpush.msra.mxu0 0.0
        %v4446 = vand.u32 %v4138, 4294901760
        %4447 = vmatpush.msra.mxu0 %v4446
        %v4448 = vand.u32 %v4134, 4294901760
        %4449 = vmatpush.msra.mxu0 %v4448
        %v4450 = vand.u32 %v4130, 4294901760
        %4451 = vmatpush.msra.mxu0 %v4450
        %v4452 = vand.u32 %v4126, 4294901760
        %4453 = vmatpush.msra.mxu0 %v4452
        %v4454 = vand.u32 %v4192, 4294901760
        %v4455 = vsub.f32 %v4192, %v4454
        %v4456 = vand.u32 %v4455, 4294901760
        %4457 = vmatmul.f32.gmra.mxu0 %v4456
        %v4458 = vpop.f32.mrf.mxu0
        %v4459 = vadd.f32 %v4397, %v4458
        %v4460 = vand.u32 %v4195, 4294901760
        %v4461 = vsub.f32 %v4195, %v4460
        %v4462 = vand.u32 %v4461, 4294901760
        %4463 = vmatmul.f32.gmra.mxu0 %v4462
        %v4464 = vpop.f32.mrf.mxu0
        %v4465 = vadd.f32 %v4402, %v4464
        %v4466 = vand.u32 %v4198, 4294901760
        %v4467 = vsub.f32 %v4198, %v4466
        %v4468 = vand.u32 %v4467, 4294901760
        %4469 = vmatmul.f32.gmra.mxu0 %v4468
        %v4470 = vpop.f32.mrf.mxu0
        %v4471 = vadd.f32 %v4407, %v4470
        %v4472 = vand.u32 %v4201, 4294901760
        %v4473 = vsub.f32 %v4201, %v4472
        %v4474 = vand.u32 %v4473, 4294901760
        %4475 = vmatmul.f32.gmra.mxu0 %v4474
        %v4476 = vpop.f32.mrf.mxu0
        %v4477 = vadd.f32 %v4412, %v4476
        %v4478 = vand.u32 %v4204, 4294901760
        %v4479 = vsub.f32 %v4204, %v4478
        %v4480 = vand.u32 %v4479, 4294901760
        %4481 = vmatmul.f32.gmra.mxu0 %v4480
        %v4482 = vpop.f32.mrf.mxu0
        %v4483 = vadd.f32 %v4417, %v4482
        %v4484 = vand.u32 %v4207, 4294901760
        %v4485 = vsub.f32 %v4207, %v4484
        %v4486 = vand.u32 %v4485, 4294901760
        %4487 = vmatmul.f32.gmra.mxu0 %v4486
        %v4488 = vpop.f32.mrf.mxu0
        %v4489 = vadd.f32 %v4422, %v4488
        %v4490 = vand.u32 %v4210, 4294901760
        %v4491 = vsub.f32 %v4210, %v4490
        %v4492 = vand.u32 %v4491, 4294901760
        %4493 = vmatmul.f32.gmra.mxu0 %v4492
        %v4494 = vpop.f32.mrf.mxu0
        %v4495 = vadd.f32 %v4427, %v4494
        %v4496 = vand.u32 %v4213, 4294901760
        %v4497 = vsub.f32 %v4213, %v4496
        %v4498 = vand.u32 %v4497, 4294901760
        %4499 = vmatmul.f32.gmra.mxu0 %v4498
        %v4500 = vpop.f32.mrf.mxu0
        %v4501 = vadd.f32 %v4432, %v4500
        %4502 = vdwg.mxu0
        %4503 = vmatpush.msra.mxu0 0.0
        %4504 = vmatpush.msra.mxu0 0.0
        %4505 = vmatpush.msra.mxu0 0.0
        %4506 = vmatpush.msra.mxu0 0.0
        %4507 = vmatpush.msra.mxu0 0.0
        %4508 = vmatpush.msra.mxu0 0.0
        %4509 = vmatpush.msra.mxu0 0.0
        %4510 = vmatpush.msra.mxu0 0.0
        %4511 = vmatpush.msra.mxu0 0.0
        %4512 = vmatpush.msra.mxu0 0.0
        %4513 = vmatpush.msra.mxu0 0.0
        %4514 = vmatpush.msra.mxu0 0.0
        %v4515 = vand.u32 %v4138, 4294901760
        %v4516 = vsub.f32 %v4138, %v4515
        %v4517 = vand.u32 %v4516, 4294901760
        %4518 = vmatpush.msra.mxu0 %v4517
        %v4519 = vand.u32 %v4134, 4294901760
        %v4520 = vsub.f32 %v4134, %v4519
        %v4521 = vand.u32 %v4520, 4294901760
        %4522 = vmatpush.msra.mxu0 %v4521
        %v4523 = vand.u32 %v4130, 4294901760
        %v4524 = vsub.f32 %v4130, %v4523
        %v4525 = vand.u32 %v4524, 4294901760
        %4526 = vmatpush.msra.mxu0 %v4525
        %v4527 = vand.u32 %v4126, 4294901760
        %v4528 = vsub.f32 %v4126, %v4527
        %v4529 = vand.u32 %v4528, 4294901760
        %4530 = vmatpush.msra.mxu0 %v4529
        %v4531 = vand.u32 %v4192, 4294901760
        %4532 = vmatmul.f32.gmra.mxu0 %v4531
        %v4533 = vpop.f32.mrf.mxu0
        %v4534 = vadd.f32 %v4459, %v4533
        %v4535 = vand.u32 %v4195, 4294901760
        %4536 = vmatmul.f32.gmra.mxu0 %v4535
        %v4537 = vpop.f32.mrf.mxu0
        %v4538 = vadd.f32 %v4465, %v4537
        %v4539 = vand.u32 %v4198, 4294901760
        %4540 = vmatmul.f32.gmra.mxu0 %v4539
        %v4541 = vpop.f32.mrf.mxu0
        %v4542 = vadd.f32 %v4471, %v4541
        %v4543 = vand.u32 %v4201, 4294901760
        %4544 = vmatmul.f32.gmra.mxu0 %v4543
        %v4545 = vpop.f32.mrf.mxu0
        %v4546 = vadd.f32 %v4477, %v4545
        %v4547 = vand.u32 %v4204, 4294901760
        %4548 = vmatmul.f32.gmra.mxu0 %v4547
        %v4549 = vpop.f32.mrf.mxu0
        %v4550 = vadd.f32 %v4483, %v4549
        %v4551 = vand.u32 %v4207, 4294901760
        %4552 = vmatmul.f32.gmra.mxu0 %v4551
        %v4553 = vpop.f32.mrf.mxu0
        %v4554 = vadd.f32 %v4489, %v4553
        %v4555 = vand.u32 %v4210, 4294901760
        %4556 = vmatmul.f32.gmra.mxu0 %v4555
        %v4557 = vpop.f32.mrf.mxu0
        %v4558 = vadd.f32 %v4495, %v4557
        %v4559 = vand.u32 %v4213, 4294901760
        %4560 = vmatmul.f32.gmra.mxu0 %v4559
        %v4561 = vpop.f32.mrf.mxu0
        %v4562 = vadd.f32 %v4501, %v4561
        %4563 = vdwg.mxu0
        %4564 = vmatpush.msra.mxu0 0.0
        %4565 = vmatpush.msra.mxu0 0.0
        %4566 = vmatpush.msra.mxu0 0.0
        %4567 = vmatpush.msra.mxu0 0.0
        %4568 = vmatpush.msra.mxu0 0.0
        %4569 = vmatpush.msra.mxu0 0.0
        %4570 = vmatpush.msra.mxu0 0.0
        %4571 = vmatpush.msra.mxu0 0.0
        %4572 = vmatpush.msra.mxu0 0.0
        %4573 = vmatpush.msra.mxu0 0.0
        %4574 = vmatpush.msra.mxu0 0.0
        %4575 = vmatpush.msra.mxu0 0.0
        %v4576 = vand.u32 %v4138, 4294901760
        %4577 = vmatpush.msra.mxu0 %v4576
        %v4578 = vand.u32 %v4134, 4294901760
        %4579 = vmatpush.msra.mxu0 %v4578
        %v4580 = vand.u32 %v4130, 4294901760
        %4581 = vmatpush.msra.mxu0 %v4580
        %v4582 = vand.u32 %v4126, 4294901760
        %4583 = vmatpush.msra.mxu0 %v4582
        %v4584 = vand.u32 %v4192, 4294901760
        %4585 = vmatmul.f32.gmra.mxu0 %v4584
        %v4586 = vpop.f32.mrf.mxu0
        %v4587 = vadd.f32 %v4534, %v4586
        %v4588 = vand.u32 %v4195, 4294901760
        %4589 = vmatmul.f32.gmra.mxu0 %v4588
        %v4590 = vpop.f32.mrf.mxu0
        %v4591 = vadd.f32 %v4538, %v4590
        %v4592 = vand.u32 %v4198, 4294901760
        %4593 = vmatmul.f32.gmra.mxu0 %v4592
        %v4594 = vpop.f32.mrf.mxu0
        %v4595 = vadd.f32 %v4542, %v4594
        %v4596 = vand.u32 %v4201, 4294901760
        %4597 = vmatmul.f32.gmra.mxu0 %v4596
        %v4598 = vpop.f32.mrf.mxu0
        %v4599 = vadd.f32 %v4546, %v4598
        %v4600 = vand.u32 %v4204, 4294901760
        %4601 = vmatmul.f32.gmra.mxu0 %v4600
        %v4602 = vpop.f32.mrf.mxu0
        %v4603 = vadd.f32 %v4550, %v4602
        %v4604 = vand.u32 %v4207, 4294901760
        %4605 = vmatmul.f32.gmra.mxu0 %v4604
        %v4606 = vpop.f32.mrf.mxu0
        %v4607 = vadd.f32 %v4554, %v4606
        %v4608 = vand.u32 %v4210, 4294901760
        %4609 = vmatmul.f32.gmra.mxu0 %v4608
        %v4610 = vpop.f32.mrf.mxu0
        %v4611 = vadd.f32 %v4558, %v4610
        %v4612 = vand.u32 %v4213, 4294901760
        %4613 = vmatmul.f32.gmra.mxu0 %v4612
        %v4614 = vpop.f32.mrf.mxu0
        %v4615 = vadd.f32 %v4562, %v4614
        %4616 = vdwg.mxu0
        %4617 = vmatpush.msra.mxu0 0.0
        %4618 = vmatpush.msra.mxu0 0.0
        %4619 = vmatpush.msra.mxu0 0.0
        %4620 = vmatpush.msra.mxu0 0.0
        %4621 = vmatpush.msra.mxu0 0.0
        %4622 = vmatpush.msra.mxu0 0.0
        %4623 = vmatpush.msra.mxu0 0.0
        %4624 = vmatpush.msra.mxu0 0.0
        %4625 = vmatpush.msra.mxu0 0.0
        %4626 = vmatpush.msra.mxu0 0.0
        %4627 = vmatpush.msra.mxu0 0.0
        %4628 = vmatpush.msra.mxu0 0.0
        %v4629 = vand.u32 %v4139, 4294901760
        %4630 = vmatpush.msra.mxu0 %v4629
        %v4631 = vand.u32 %v4135, 4294901760
        %4632 = vmatpush.msra.mxu0 %v4631
        %v4633 = vand.u32 %v4131, 4294901760
        %4634 = vmatpush.msra.mxu0 %v4633
        %v4635 = vand.u32 %v4127, 4294901760
        %4636 = vmatpush.msra.mxu0 %v4635
        %v4637 = vand.u32 %v4192, 4294901760
        %v4638 = vsub.f32 %v4192, %v4637
        %v4639 = vand.u32 %v4638, 4294901760
        %v4640 = vsub.f32 %v4638, %v4639
        %v4641 = vand.u32 %v4640, 4294901760
        %4642 = vmatmul.f32.gmra.mxu0 %v4641
        %v4643 = vpop.f32.mrf.mxu0
        %v4644 = vadd.f32 %v4154, %v4643
        %v4645 = vand.u32 %v4195, 4294901760
        %v4646 = vsub.f32 %v4195, %v4645
        %v4647 = vand.u32 %v4646, 4294901760
        %v4648 = vsub.f32 %v4646, %v4647
        %v4649 = vand.u32 %v4648, 4294901760
        %4650 = vmatmul.f32.gmra.mxu0 %v4649
        %v4651 = vpop.f32.mrf.mxu0
        %v4652 = vadd.f32 %v4159, %v4651
        %v4653 = vand.u32 %v4198, 4294901760
        %v4654 = vsub.f32 %v4198, %v4653
        %v4655 = vand.u32 %v4654, 4294901760
        %v4656 = vsub.f32 %v4654, %v4655
        %v4657 = vand.u32 %v4656, 4294901760
        %4658 = vmatmul.f32.gmra.mxu0 %v4657
        %v4659 = vpop.f32.mrf.mxu0
        %v4660 = vadd.f32 %v4164, %v4659
        %v4661 = vand.u32 %v4201, 4294901760
        %v4662 = vsub.f32 %v4201, %v4661
        %v4663 = vand.u32 %v4662, 4294901760
        %v4664 = vsub.f32 %v4662, %v4663
        %v4665 = vand.u32 %v4664, 4294901760
        %4666 = vmatmul.f32.gmra.mxu0 %v4665
        %v4667 = vpop.f32.mrf.mxu0
        %v4668 = vadd.f32 %v4169, %v4667
        %v4669 = vand.u32 %v4204, 4294901760
        %v4670 = vsub.f32 %v4204, %v4669
        %v4671 = vand.u32 %v4670, 4294901760
        %v4672 = vsub.f32 %v4670, %v4671
        %v4673 = vand.u32 %v4672, 4294901760
        %4674 = vmatmul.f32.gmra.mxu0 %v4673
        %v4675 = vpop.f32.mrf.mxu0
        %v4676 = vadd.f32 %v4174, %v4675
        %v4677 = vand.u32 %v4207, 4294901760
        %v4678 = vsub.f32 %v4207, %v4677
        %v4679 = vand.u32 %v4678, 4294901760
        %v4680 = vsub.f32 %v4678, %v4679
        %v4681 = vand.u32 %v4680, 4294901760
        %4682 = vmatmul.f32.gmra.mxu0 %v4681
        %v4683 = vpop.f32.mrf.mxu0
        %v4684 = vadd.f32 %v4179, %v4683
        %v4685 = vand.u32 %v4210, 4294901760
        %v4686 = vsub.f32 %v4210, %v4685
        %v4687 = vand.u32 %v4686, 4294901760
        %v4688 = vsub.f32 %v4686, %v4687
        %v4689 = vand.u32 %v4688, 4294901760
        %4690 = vmatmul.f32.gmra.mxu0 %v4689
        %v4691 = vpop.f32.mrf.mxu0
        %v4692 = vadd.f32 %v4184, %v4691
        %v4693 = vand.u32 %v4213, 4294901760
        %v4694 = vsub.f32 %v4213, %v4693
        %v4695 = vand.u32 %v4694, 4294901760
        %v4696 = vsub.f32 %v4694, %v4695
        %v4697 = vand.u32 %v4696, 4294901760
        %4698 = vmatmul.f32.gmra.mxu0 %v4697
        %v4699 = vpop.f32.mrf.mxu0
        %v4700 = vadd.f32 %v4189, %v4699
        %4701 = vdwg.mxu0
        %4702 = vmatpush.msra.mxu0 0.0
        %4703 = vmatpush.msra.mxu0 0.0
        %4704 = vmatpush.msra.mxu0 0.0
        %4705 = vmatpush.msra.mxu0 0.0
        %4706 = vmatpush.msra.mxu0 0.0
        %4707 = vmatpush.msra.mxu0 0.0
        %4708 = vmatpush.msra.mxu0 0.0
        %4709 = vmatpush.msra.mxu0 0.0
        %4710 = vmatpush.msra.mxu0 0.0
        %4711 = vmatpush.msra.mxu0 0.0
        %4712 = vmatpush.msra.mxu0 0.0
        %4713 = vmatpush.msra.mxu0 0.0
        %v4714 = vand.u32 %v4139, 4294901760
        %v4715 = vsub.f32 %v4139, %v4714
        %v4716 = vand.u32 %v4715, 4294901760
        %v4717 = vsub.f32 %v4715, %v4716
        %v4718 = vand.u32 %v4717, 4294901760
        %4719 = vmatpush.msra.mxu0 %v4718
        %v4720 = vand.u32 %v4135, 4294901760
        %v4721 = vsub.f32 %v4135, %v4720
        %v4722 = vand.u32 %v4721, 4294901760
        %v4723 = vsub.f32 %v4721, %v4722
        %v4724 = vand.u32 %v4723, 4294901760
        %4725 = vmatpush.msra.mxu0 %v4724
        %v4726 = vand.u32 %v4131, 4294901760
        %v4727 = vsub.f32 %v4131, %v4726
        %v4728 = vand.u32 %v4727, 4294901760
        %v4729 = vsub.f32 %v4727, %v4728
        %v4730 = vand.u32 %v4729, 4294901760
        %4731 = vmatpush.msra.mxu0 %v4730
        %v4732 = vand.u32 %v4127, 4294901760
        %v4733 = vsub.f32 %v4127, %v4732
        %v4734 = vand.u32 %v4733, 4294901760
        %v4735 = vsub.f32 %v4733, %v4734
        %v4736 = vand.u32 %v4735, 4294901760
        %4737 = vmatpush.msra.mxu0 %v4736
        %v4738 = vand.u32 %v4192, 4294901760
        %4739 = vmatmul.f32.gmra.mxu0 %v4738
        %v4740 = vpop.f32.mrf.mxu0
        %v4741 = vadd.f32 %v4644, %v4740
        %v4742 = vand.u32 %v4195, 4294901760
        %4743 = vmatmul.f32.gmra.mxu0 %v4742
        %v4744 = vpop.f32.mrf.mxu0
        %v4745 = vadd.f32 %v4652, %v4744
        %v4746 = vand.u32 %v4198, 4294901760
        %4747 = vmatmul.f32.gmra.mxu0 %v4746
        %v4748 = vpop.f32.mrf.mxu0
        %v4749 = vadd.f32 %v4660, %v4748
        %v4750 = vand.u32 %v4201, 4294901760
        %4751 = vmatmul.f32.gmra.mxu0 %v4750
        %v4752 = vpop.f32.mrf.mxu0
        %v4753 = vadd.f32 %v4668, %v4752
        %v4754 = vand.u32 %v4204, 4294901760
        %4755 = vmatmul.f32.gmra.mxu0 %v4754
        %v4756 = vpop.f32.mrf.mxu0
        %v4757 = vadd.f32 %v4676, %v4756
        %v4758 = vand.u32 %v4207, 4294901760
        %4759 = vmatmul.f32.gmra.mxu0 %v4758
        %v4760 = vpop.f32.mrf.mxu0
        %v4761 = vadd.f32 %v4684, %v4760
        %v4762 = vand.u32 %v4210, 4294901760
        %4763 = vmatmul.f32.gmra.mxu0 %v4762
        %v4764 = vpop.f32.mrf.mxu0
        %v4765 = vadd.f32 %v4692, %v4764
        %v4766 = vand.u32 %v4213, 4294901760
        %4767 = vmatmul.f32.gmra.mxu0 %v4766
        %v4768 = vpop.f32.mrf.mxu0
        %v4769 = vadd.f32 %v4700, %v4768
        %4770 = vdwg.mxu0
        %4771 = vmatpush.msra.mxu0 0.0
        %4772 = vmatpush.msra.mxu0 0.0
        %4773 = vmatpush.msra.mxu0 0.0
        %4774 = vmatpush.msra.mxu0 0.0
        %4775 = vmatpush.msra.mxu0 0.0
        %4776 = vmatpush.msra.mxu0 0.0
        %4777 = vmatpush.msra.mxu0 0.0
        %4778 = vmatpush.msra.mxu0 0.0
        %4779 = vmatpush.msra.mxu0 0.0
        %4780 = vmatpush.msra.mxu0 0.0
        %4781 = vmatpush.msra.mxu0 0.0
        %4782 = vmatpush.msra.mxu0 0.0
        %v4783 = vand.u32 %v4139, 4294901760
        %v4784 = vsub.f32 %v4139, %v4783
        %4785 = vmatpush.msra.mxu0 %v4784
        %v4786 = vand.u32 %v4135, 4294901760
        %v4787 = vsub.f32 %v4135, %v4786
        %4788 = vmatpush.msra.mxu0 %v4787
        %v4789 = vand.u32 %v4131, 4294901760
        %v4790 = vsub.f32 %v4131, %v4789
        %4791 = vmatpush.msra.mxu0 %v4790
        %v4792 = vand.u32 %v4127, 4294901760
        %v4793 = vsub.f32 %v4127, %v4792
        %4794 = vmatpush.msra.mxu0 %v4793
        %v4795 = vand.u32 %v4192, 4294901760
        %v4796 = vsub.f32 %v4192, %v4795
        %4797 = vmatmul.f32.gmra.mxu0 %v4796
        %v4798 = vpop.f32.mrf.mxu0
        %v4799 = vadd.f32 %v4741, %v4798
        %v4800 = vand.u32 %v4195, 4294901760
        %v4801 = vsub.f32 %v4195, %v4800
        %4802 = vmatmul.f32.gmra.mxu0 %v4801
        %v4803 = vpop.f32.mrf.mxu0
        %v4804 = vadd.f32 %v4745, %v4803
        %v4805 = vand.u32 %v4198, 4294901760
        %v4806 = vsub.f32 %v4198, %v4805
        %4807 = vmatmul.f32.gmra.mxu0 %v4806
        %v4808 = vpop.f32.mrf.mxu0
        %v4809 = vadd.f32 %v4749, %v4808
        %v4810 = vand.u32 %v4201, 4294901760
        %v4811 = vsub.f32 %v4201, %v4810
        %4812 = vmatmul.f32.gmra.mxu0 %v4811
        %v4813 = vpop.f32.mrf.mxu0
        %v4814 = vadd.f32 %v4753, %v4813
        %v4815 = vand.u32 %v4204, 4294901760
        %v4816 = vsub.f32 %v4204, %v4815
        %4817 = vmatmul.f32.gmra.mxu0 %v4816
        %v4818 = vpop.f32.mrf.mxu0
        %v4819 = vadd.f32 %v4757, %v4818
        %v4820 = vand.u32 %v4207, 4294901760
        %v4821 = vsub.f32 %v4207, %v4820
        %4822 = vmatmul.f32.gmra.mxu0 %v4821
        %v4823 = vpop.f32.mrf.mxu0
        %v4824 = vadd.f32 %v4761, %v4823
        %v4825 = vand.u32 %v4210, 4294901760
        %v4826 = vsub.f32 %v4210, %v4825
        %4827 = vmatmul.f32.gmra.mxu0 %v4826
        %v4828 = vpop.f32.mrf.mxu0
        %v4829 = vadd.f32 %v4765, %v4828
        %v4830 = vand.u32 %v4213, 4294901760
        %v4831 = vsub.f32 %v4213, %v4830
        %4832 = vmatmul.f32.gmra.mxu0 %v4831
        %v4833 = vpop.f32.mrf.mxu0
        %v4834 = vadd.f32 %v4769, %v4833
        %4835 = vdwg.mxu0
        %4836 = vmatpush.msra.mxu0 0.0
        %4837 = vmatpush.msra.mxu0 0.0
        %4838 = vmatpush.msra.mxu0 0.0
        %4839 = vmatpush.msra.mxu0 0.0
        %4840 = vmatpush.msra.mxu0 0.0
        %4841 = vmatpush.msra.mxu0 0.0
        %4842 = vmatpush.msra.mxu0 0.0
        %4843 = vmatpush.msra.mxu0 0.0
        %4844 = vmatpush.msra.mxu0 0.0
        %4845 = vmatpush.msra.mxu0 0.0
        %4846 = vmatpush.msra.mxu0 0.0
        %4847 = vmatpush.msra.mxu0 0.0
        %v4848 = vand.u32 %v4139, 4294901760
        %4849 = vmatpush.msra.mxu0 %v4848
        %v4850 = vand.u32 %v4135, 4294901760
        %4851 = vmatpush.msra.mxu0 %v4850
        %v4852 = vand.u32 %v4131, 4294901760
        %4853 = vmatpush.msra.mxu0 %v4852
        %v4854 = vand.u32 %v4127, 4294901760
        %4855 = vmatpush.msra.mxu0 %v4854
        %v4856 = vand.u32 %v4192, 4294901760
        %v4857 = vsub.f32 %v4192, %v4856
        %v4858 = vand.u32 %v4857, 4294901760
        %4859 = vmatmul.f32.gmra.mxu0 %v4858
        %v4860 = vpop.f32.mrf.mxu0
        %v4861 = vadd.f32 %v4799, %v4860
        %v4862 = vand.u32 %v4195, 4294901760
        %v4863 = vsub.f32 %v4195, %v4862
        %v4864 = vand.u32 %v4863, 4294901760
        %4865 = vmatmul.f32.gmra.mxu0 %v4864
        %v4866 = vpop.f32.mrf.mxu0
        %v4867 = vadd.f32 %v4804, %v4866
        %v4868 = vand.u32 %v4198, 4294901760
        %v4869 = vsub.f32 %v4198, %v4868
        %v4870 = vand.u32 %v4869, 4294901760
        %4871 = vmatmul.f32.gmra.mxu0 %v4870
        %v4872 = vpop.f32.mrf.mxu0
        %v4873 = vadd.f32 %v4809, %v4872
        %v4874 = vand.u32 %v4201, 4294901760
        %v4875 = vsub.f32 %v4201, %v4874
        %v4876 = vand.u32 %v4875, 4294901760
        %4877 = vmatmul.f32.gmra.mxu0 %v4876
        %v4878 = vpop.f32.mrf.mxu0
        %v4879 = vadd.f32 %v4814, %v4878
        %v4880 = vand.u32 %v4204, 4294901760
        %v4881 = vsub.f32 %v4204, %v4880
        %v4882 = vand.u32 %v4881, 4294901760
        %4883 = vmatmul.f32.gmra.mxu0 %v4882
        %v4884 = vpop.f32.mrf.mxu0
        %v4885 = vadd.f32 %v4819, %v4884
        %v4886 = vand.u32 %v4207, 4294901760
        %v4887 = vsub.f32 %v4207, %v4886
        %v4888 = vand.u32 %v4887, 4294901760
        %4889 = vmatmul.f32.gmra.mxu0 %v4888
        %v4890 = vpop.f32.mrf.mxu0
        %v4891 = vadd.f32 %v4824, %v4890
        %v4892 = vand.u32 %v4210, 4294901760
        %v4893 = vsub.f32 %v4210, %v4892
        %v4894 = vand.u32 %v4893, 4294901760
        %4895 = vmatmul.f32.gmra.mxu0 %v4894
        %v4896 = vpop.f32.mrf.mxu0
        %v4897 = vadd.f32 %v4829, %v4896
        %v4898 = vand.u32 %v4213, 4294901760
        %v4899 = vsub.f32 %v4213, %v4898
        %v4900 = vand.u32 %v4899, 4294901760
        %4901 = vmatmul.f32.gmra.mxu0 %v4900
        %v4902 = vpop.f32.mrf.mxu0
        %v4903 = vadd.f32 %v4834, %v4902
        %4904 = vdwg.mxu0
        %4905 = vmatpush.msra.mxu0 0.0
        %4906 = vmatpush.msra.mxu0 0.0
        %4907 = vmatpush.msra.mxu0 0.0
        %4908 = vmatpush.msra.mxu0 0.0
        %4909 = vmatpush.msra.mxu0 0.0
        %4910 = vmatpush.msra.mxu0 0.0
        %4911 = vmatpush.msra.mxu0 0.0
        %4912 = vmatpush.msra.mxu0 0.0
        %4913 = vmatpush.msra.mxu0 0.0
        %4914 = vmatpush.msra.mxu0 0.0
        %4915 = vmatpush.msra.mxu0 0.0
        %4916 = vmatpush.msra.mxu0 0.0
        %v4917 = vand.u32 %v4139, 4294901760
        %v4918 = vsub.f32 %v4139, %v4917
        %v4919 = vand.u32 %v4918, 4294901760
        %4920 = vmatpush.msra.mxu0 %v4919
        %v4921 = vand.u32 %v4135, 4294901760
        %v4922 = vsub.f32 %v4135, %v4921
        %v4923 = vand.u32 %v4922, 4294901760
        %4924 = vmatpush.msra.mxu0 %v4923
        %v4925 = vand.u32 %v4131, 4294901760
        %v4926 = vsub.f32 %v4131, %v4925
        %v4927 = vand.u32 %v4926, 4294901760
        %4928 = vmatpush.msra.mxu0 %v4927
        %v4929 = vand.u32 %v4127, 4294901760
        %v4930 = vsub.f32 %v4127, %v4929
        %v4931 = vand.u32 %v4930, 4294901760
        %4932 = vmatpush.msra.mxu0 %v4931
        %v4933 = vand.u32 %v4192, 4294901760
        %4934 = vmatmul.f32.gmra.mxu0 %v4933
        %v4935 = vpop.f32.mrf.mxu0
        %v4936 = vadd.f32 %v4861, %v4935
        %v4937 = vand.u32 %v4195, 4294901760
        %4938 = vmatmul.f32.gmra.mxu0 %v4937
        %v4939 = vpop.f32.mrf.mxu0
        %v4940 = vadd.f32 %v4867, %v4939
        %v4941 = vand.u32 %v4198, 4294901760
        %4942 = vmatmul.f32.gmra.mxu0 %v4941
        %v4943 = vpop.f32.mrf.mxu0
        %v4944 = vadd.f32 %v4873, %v4943
        %v4945 = vand.u32 %v4201, 4294901760
        %4946 = vmatmul.f32.gmra.mxu0 %v4945
        %v4947 = vpop.f32.mrf.mxu0
        %v4948 = vadd.f32 %v4879, %v4947
        %v4949 = vand.u32 %v4204, 4294901760
        %4950 = vmatmul.f32.gmra.mxu0 %v4949
        %v4951 = vpop.f32.mrf.mxu0
        %v4952 = vadd.f32 %v4885, %v4951
        %v4953 = vand.u32 %v4207, 4294901760
        %4954 = vmatmul.f32.gmra.mxu0 %v4953
        %v4955 = vpop.f32.mrf.mxu0
        %v4956 = vadd.f32 %v4891, %v4955
        %v4957 = vand.u32 %v4210, 4294901760
        %4958 = vmatmul.f32.gmra.mxu0 %v4957
        %v4959 = vpop.f32.mrf.mxu0
        %v4960 = vadd.f32 %v4897, %v4959
        %v4961 = vand.u32 %v4213, 4294901760
        %4962 = vmatmul.f32.gmra.mxu0 %v4961
        %v4963 = vpop.f32.mrf.mxu0
        %v4964 = vadd.f32 %v4903, %v4963
        %4965 = vdwg.mxu0
        %4966 = vmatpush.msra.mxu0 0.0
        %4967 = vmatpush.msra.mxu0 0.0
        %4968 = vmatpush.msra.mxu0 0.0
        %4969 = vmatpush.msra.mxu0 0.0
        %4970 = vmatpush.msra.mxu0 0.0
        %4971 = vmatpush.msra.mxu0 0.0
        %4972 = vmatpush.msra.mxu0 0.0
        %4973 = vmatpush.msra.mxu0 0.0
        %4974 = vmatpush.msra.mxu0 0.0
        %4975 = vmatpush.msra.mxu0 0.0
        %4976 = vmatpush.msra.mxu0 0.0
        %4977 = vmatpush.msra.mxu0 0.0
        %v4978 = vand.u32 %v4139, 4294901760
        %4979 = vmatpush.msra.mxu0 %v4978
        %v4980 = vand.u32 %v4135, 4294901760
        %4981 = vmatpush.msra.mxu0 %v4980
        %v4982 = vand.u32 %v4131, 4294901760
        %4983 = vmatpush.msra.mxu0 %v4982
        %v4984 = vand.u32 %v4127, 4294901760
        %4985 = vmatpush.msra.mxu0 %v4984
        %v4986 = vand.u32 %v4192, 4294901760
        %4987 = vmatmul.f32.gmra.mxu0 %v4986
        %v4988 = vpop.f32.mrf.mxu0
        %v4989 = vadd.f32 %v4936, %v4988
        %v4990 = vand.u32 %v4195, 4294901760
        %4991 = vmatmul.f32.gmra.mxu0 %v4990
        %v4992 = vpop.f32.mrf.mxu0
        %v4993 = vadd.f32 %v4940, %v4992
        %v4994 = vand.u32 %v4198, 4294901760
        %4995 = vmatmul.f32.gmra.mxu0 %v4994
        %v4996 = vpop.f32.mrf.mxu0
        %v4997 = vadd.f32 %v4944, %v4996
        %v4998 = vand.u32 %v4201, 4294901760
        %4999 = vmatmul.f32.gmra.mxu0 %v4998
        %v5000 = vpop.f32.mrf.mxu0
        %v5001 = vadd.f32 %v4948, %v5000
        %v5002 = vand.u32 %v4204, 4294901760
        %5003 = vmatmul.f32.gmra.mxu0 %v5002
        %v5004 = vpop.f32.mrf.mxu0
        %v5005 = vadd.f32 %v4952, %v5004
        %v5006 = vand.u32 %v4207, 4294901760
        %5007 = vmatmul.f32.gmra.mxu0 %v5006
        %v5008 = vpop.f32.mrf.mxu0
        %v5009 = vadd.f32 %v4956, %v5008
        %v5010 = vand.u32 %v4210, 4294901760
        %5011 = vmatmul.f32.gmra.mxu0 %v5010
        %v5012 = vpop.f32.mrf.mxu0
        %v5013 = vadd.f32 %v4960, %v5012
        %v5014 = vand.u32 %v4213, 4294901760
        %5015 = vmatmul.f32.gmra.mxu0 %v5014
        %v5016 = vpop.f32.mrf.mxu0
        %v5017 = vadd.f32 %v4964, %v5016
        %5018 = vdwg.mxu0
        %5019 = vmatpush.msra.mxu0 0.0
        %5020 = vmatpush.msra.mxu0 0.0
        %5021 = vmatpush.msra.mxu0 0.0
        %5022 = vmatpush.msra.mxu0 0.0
        %5023 = vmatpush.msra.mxu0 0.0
        %5024 = vmatpush.msra.mxu0 0.0
        %5025 = vmatpush.msra.mxu0 0.0
        %5026 = vmatpush.msra.mxu0 0.0
        %5027 = vmatpush.msra.mxu0 0.0
        %5028 = vmatpush.msra.mxu0 0.0
        %5029 = vmatpush.msra.mxu0 0.0
        %5030 = vmatpush.msra.mxu0 0.0
        %v5031 = vand.u32 %v4140, 4294901760
        %5032 = vmatpush.msra.mxu0 %v5031
        %v5033 = vand.u32 %v4136, 4294901760
        %5034 = vmatpush.msra.mxu0 %v5033
        %v5035 = vand.u32 %v4132, 4294901760
        %5036 = vmatpush.msra.mxu0 %v5035
        %v5037 = vand.u32 %v4128, 4294901760
        %5038 = vmatpush.msra.mxu0 %v5037
        %v5039 = vand.u32 %v4192, 4294901760
        %v5040 = vsub.f32 %v4192, %v5039
        %v5041 = vand.u32 %v5040, 4294901760
        %v5042 = vsub.f32 %v5040, %v5041
        %v5043 = vand.u32 %v5042, 4294901760
        %5044 = vmatmul.f32.gmra.mxu0 %v5043
        %v5045 = vpop.f32.mrf.mxu0
        %v5046 = vadd.f32 %v4154, %v5045
        %v5047 = vand.u32 %v4195, 4294901760
        %v5048 = vsub.f32 %v4195, %v5047
        %v5049 = vand.u32 %v5048, 4294901760
        %v5050 = vsub.f32 %v5048, %v5049
        %v5051 = vand.u32 %v5050, 4294901760
        %5052 = vmatmul.f32.gmra.mxu0 %v5051
        %v5053 = vpop.f32.mrf.mxu0
        %v5054 = vadd.f32 %v4159, %v5053
        %v5055 = vand.u32 %v4198, 4294901760
        %v5056 = vsub.f32 %v4198, %v5055
        %v5057 = vand.u32 %v5056, 4294901760
        %v5058 = vsub.f32 %v5056, %v5057
        %v5059 = vand.u32 %v5058, 4294901760
        %5060 = vmatmul.f32.gmra.mxu0 %v5059
        %v5061 = vpop.f32.mrf.mxu0
        %v5062 = vadd.f32 %v4164, %v5061
        %v5063 = vand.u32 %v4201, 4294901760
        %v5064 = vsub.f32 %v4201, %v5063
        %v5065 = vand.u32 %v5064, 4294901760
        %v5066 = vsub.f32 %v5064, %v5065
        %v5067 = vand.u32 %v5066, 4294901760
        %5068 = vmatmul.f32.gmra.mxu0 %v5067
        %v5069 = vpop.f32.mrf.mxu0
        %v5070 = vadd.f32 %v4169, %v5069
        %v5071 = vand.u32 %v4204, 4294901760
        %v5072 = vsub.f32 %v4204, %v5071
        %v5073 = vand.u32 %v5072, 4294901760
        %v5074 = vsub.f32 %v5072, %v5073
        %v5075 = vand.u32 %v5074, 4294901760
        %5076 = vmatmul.f32.gmra.mxu0 %v5075
        %v5077 = vpop.f32.mrf.mxu0
        %v5078 = vadd.f32 %v4174, %v5077
        %v5079 = vand.u32 %v4207, 4294901760
        %v5080 = vsub.f32 %v4207, %v5079
        %v5081 = vand.u32 %v5080, 4294901760
        %v5082 = vsub.f32 %v5080, %v5081
        %v5083 = vand.u32 %v5082, 4294901760
        %5084 = vmatmul.f32.gmra.mxu0 %v5083
        %v5085 = vpop.f32.mrf.mxu0
        %v5086 = vadd.f32 %v4179, %v5085
        %v5087 = vand.u32 %v4210, 4294901760
        %v5088 = vsub.f32 %v4210, %v5087
        %v5089 = vand.u32 %v5088, 4294901760
        %v5090 = vsub.f32 %v5088, %v5089
        %v5091 = vand.u32 %v5090, 4294901760
        %5092 = vmatmul.f32.gmra.mxu0 %v5091
        %v5093 = vpop.f32.mrf.mxu0
        %v5094 = vadd.f32 %v4184, %v5093
        %v5095 = vand.u32 %v4213, 4294901760
        %v5096 = vsub.f32 %v4213, %v5095
        %v5097 = vand.u32 %v5096, 4294901760
        %v5098 = vsub.f32 %v5096, %v5097
        %v5099 = vand.u32 %v5098, 4294901760
        %5100 = vmatmul.f32.gmra.mxu0 %v5099
        %v5101 = vpop.f32.mrf.mxu0
        %v5102 = vadd.f32 %v4189, %v5101
        %5103 = vdwg.mxu0
        %5104 = vmatpush.msra.mxu0 0.0
        %5105 = vmatpush.msra.mxu0 0.0
        %5106 = vmatpush.msra.mxu0 0.0
        %5107 = vmatpush.msra.mxu0 0.0
        %5108 = vmatpush.msra.mxu0 0.0
        %5109 = vmatpush.msra.mxu0 0.0
        %5110 = vmatpush.msra.mxu0 0.0
        %5111 = vmatpush.msra.mxu0 0.0
        %5112 = vmatpush.msra.mxu0 0.0
        %5113 = vmatpush.msra.mxu0 0.0
        %5114 = vmatpush.msra.mxu0 0.0
        %5115 = vmatpush.msra.mxu0 0.0
        %v5116 = vand.u32 %v4140, 4294901760
        %v5117 = vsub.f32 %v4140, %v5116
        %v5118 = vand.u32 %v5117, 4294901760
        %v5119 = vsub.f32 %v5117, %v5118
        %v5120 = vand.u32 %v5119, 4294901760
        %5121 = vmatpush.msra.mxu0 %v5120
        %v5122 = vand.u32 %v4136, 4294901760
        %v5123 = vsub.f32 %v4136, %v5122
        %v5124 = vand.u32 %v5123, 4294901760
        %v5125 = vsub.f32 %v5123, %v5124
        %v5126 = vand.u32 %v5125, 4294901760
        %5127 = vmatpush.msra.mxu0 %v5126
        %v5128 = vand.u32 %v4132, 4294901760
        %v5129 = vsub.f32 %v4132, %v5128
        %v5130 = vand.u32 %v5129, 4294901760
        %v5131 = vsub.f32 %v5129, %v5130
        %v5132 = vand.u32 %v5131, 4294901760
        %5133 = vmatpush.msra.mxu0 %v5132
        %v5134 = vand.u32 %v4128, 4294901760
        %v5135 = vsub.f32 %v4128, %v5134
        %v5136 = vand.u32 %v5135, 4294901760
        %v5137 = vsub.f32 %v5135, %v5136
        %v5138 = vand.u32 %v5137, 4294901760
        %5139 = vmatpush.msra.mxu0 %v5138
        %v5140 = vand.u32 %v4192, 4294901760
        %5141 = vmatmul.f32.gmra.mxu0 %v5140
        %v5142 = vpop.f32.mrf.mxu0
        %v5143 = vadd.f32 %v5046, %v5142
        %v5144 = vand.u32 %v4195, 4294901760
        %5145 = vmatmul.f32.gmra.mxu0 %v5144
        %v5146 = vpop.f32.mrf.mxu0
        %v5147 = vadd.f32 %v5054, %v5146
        %v5148 = vand.u32 %v4198, 4294901760
        %5149 = vmatmul.f32.gmra.mxu0 %v5148
        %v5150 = vpop.f32.mrf.mxu0
        %v5151 = vadd.f32 %v5062, %v5150
        %v5152 = vand.u32 %v4201, 4294901760
        %5153 = vmatmul.f32.gmra.mxu0 %v5152
        %v5154 = vpop.f32.mrf.mxu0
        %v5155 = vadd.f32 %v5070, %v5154
        %v5156 = vand.u32 %v4204, 4294901760
        %5157 = vmatmul.f32.gmra.mxu0 %v5156
        %v5158 = vpop.f32.mrf.mxu0
        %v5159 = vadd.f32 %v5078, %v5158
        %v5160 = vand.u32 %v4207, 4294901760
        %5161 = vmatmul.f32.gmra.mxu0 %v5160
        %v5162 = vpop.f32.mrf.mxu0
        %v5163 = vadd.f32 %v5086, %v5162
        %v5164 = vand.u32 %v4210, 4294901760
        %5165 = vmatmul.f32.gmra.mxu0 %v5164
        %v5166 = vpop.f32.mrf.mxu0
        %v5167 = vadd.f32 %v5094, %v5166
        %v5168 = vand.u32 %v4213, 4294901760
        %5169 = vmatmul.f32.gmra.mxu0 %v5168
        %v5170 = vpop.f32.mrf.mxu0
        %v5171 = vadd.f32 %v5102, %v5170
        %5172 = vdwg.mxu0
        %5173 = vmatpush.msra.mxu0 0.0
        %5174 = vmatpush.msra.mxu0 0.0
        %5175 = vmatpush.msra.mxu0 0.0
        %5176 = vmatpush.msra.mxu0 0.0
        %5177 = vmatpush.msra.mxu0 0.0
        %5178 = vmatpush.msra.mxu0 0.0
        %5179 = vmatpush.msra.mxu0 0.0
        %5180 = vmatpush.msra.mxu0 0.0
        %5181 = vmatpush.msra.mxu0 0.0
        %5182 = vmatpush.msra.mxu0 0.0
        %5183 = vmatpush.msra.mxu0 0.0
        %5184 = vmatpush.msra.mxu0 0.0
        %v5185 = vand.u32 %v4140, 4294901760
        %v5186 = vsub.f32 %v4140, %v5185
        %5187 = vmatpush.msra.mxu0 %v5186
        %v5188 = vand.u32 %v4136, 4294901760
        %v5189 = vsub.f32 %v4136, %v5188
        %5190 = vmatpush.msra.mxu0 %v5189
        %v5191 = vand.u32 %v4132, 4294901760
        %v5192 = vsub.f32 %v4132, %v5191
        %5193 = vmatpush.msra.mxu0 %v5192
        %v5194 = vand.u32 %v4128, 4294901760
        %v5195 = vsub.f32 %v4128, %v5194
        %5196 = vmatpush.msra.mxu0 %v5195
        %v5197 = vand.u32 %v4192, 4294901760
        %v5198 = vsub.f32 %v4192, %v5197
        %5199 = vmatmul.f32.gmra.mxu0 %v5198
        %v5200 = vpop.f32.mrf.mxu0
        %v5201 = vadd.f32 %v5143, %v5200
        %v5202 = vand.u32 %v4195, 4294901760
        %v5203 = vsub.f32 %v4195, %v5202
        %5204 = vmatmul.f32.gmra.mxu0 %v5203
        %v5205 = vpop.f32.mrf.mxu0
        %v5206 = vadd.f32 %v5147, %v5205
        %v5207 = vand.u32 %v4198, 4294901760
        %v5208 = vsub.f32 %v4198, %v5207
        %5209 = vmatmul.f32.gmra.mxu0 %v5208
        %v5210 = vpop.f32.mrf.mxu0
        %v5211 = vadd.f32 %v5151, %v5210
        %v5212 = vand.u32 %v4201, 4294901760
        %v5213 = vsub.f32 %v4201, %v5212
        %5214 = vmatmul.f32.gmra.mxu0 %v5213
        %v5215 = vpop.f32.mrf.mxu0
        %v5216 = vadd.f32 %v5155, %v5215
        %v5217 = vand.u32 %v4204, 4294901760
        %v5218 = vsub.f32 %v4204, %v5217
        %5219 = vmatmul.f32.gmra.mxu0 %v5218
        %v5220 = vpop.f32.mrf.mxu0
        %v5221 = vadd.f32 %v5159, %v5220
        %v5222 = vand.u32 %v4207, 4294901760
        %v5223 = vsub.f32 %v4207, %v5222
        %5224 = vmatmul.f32.gmra.mxu0 %v5223
        %v5225 = vpop.f32.mrf.mxu0
        %v5226 = vadd.f32 %v5163, %v5225
        %v5227 = vand.u32 %v4210, 4294901760
        %v5228 = vsub.f32 %v4210, %v5227
        %5229 = vmatmul.f32.gmra.mxu0 %v5228
        %v5230 = vpop.f32.mrf.mxu0
        %v5231 = vadd.f32 %v5167, %v5230
        %v5232 = vand.u32 %v4213, 4294901760
        %v5233 = vsub.f32 %v4213, %v5232
        %5234 = vmatmul.f32.gmra.mxu0 %v5233
        %v5235 = vpop.f32.mrf.mxu0
        %v5236 = vadd.f32 %v5171, %v5235
        %5237 = vdwg.mxu0
        %5238 = vmatpush.msra.mxu0 0.0
        %5239 = vmatpush.msra.mxu0 0.0
        %5240 = vmatpush.msra.mxu0 0.0
        %5241 = vmatpush.msra.mxu0 0.0
        %5242 = vmatpush.msra.mxu0 0.0
        %5243 = vmatpush.msra.mxu0 0.0
        %5244 = vmatpush.msra.mxu0 0.0
        %5245 = vmatpush.msra.mxu0 0.0
        %5246 = vmatpush.msra.mxu0 0.0
        %5247 = vmatpush.msra.mxu0 0.0
        %5248 = vmatpush.msra.mxu0 0.0
        %5249 = vmatpush.msra.mxu0 0.0
        %v5250 = vand.u32 %v4140, 4294901760
        %5251 = vmatpush.msra.mxu0 %v5250
        %v5252 = vand.u32 %v4136, 4294901760
        %5253 = vmatpush.msra.mxu0 %v5252
        %v5254 = vand.u32 %v4132, 4294901760
        %5255 = vmatpush.msra.mxu0 %v5254
        %v5256 = vand.u32 %v4128, 4294901760
        %5257 = vmatpush.msra.mxu0 %v5256
        %v5258 = vand.u32 %v4192, 4294901760
        %v5259 = vsub.f32 %v4192, %v5258
        %v5260 = vand.u32 %v5259, 4294901760
        %5261 = vmatmul.f32.gmra.mxu0 %v5260
        %v5262 = vpop.f32.mrf.mxu0
        %v5263 = vadd.f32 %v5201, %v5262
        %v5264 = vand.u32 %v4195, 4294901760
        %v5265 = vsub.f32 %v4195, %v5264
        %v5266 = vand.u32 %v5265, 4294901760
        %5267 = vmatmul.f32.gmra.mxu0 %v5266
        %v5268 = vpop.f32.mrf.mxu0
        %v5269 = vadd.f32 %v5206, %v5268
        %v5270 = vand.u32 %v4198, 4294901760
        %v5271 = vsub.f32 %v4198, %v5270
        %v5272 = vand.u32 %v5271, 4294901760
        %5273 = vmatmul.f32.gmra.mxu0 %v5272
        %v5274 = vpop.f32.mrf.mxu0
        %v5275 = vadd.f32 %v5211, %v5274
        %v5276 = vand.u32 %v4201, 4294901760
        %v5277 = vsub.f32 %v4201, %v5276
        %v5278 = vand.u32 %v5277, 4294901760
        %5279 = vmatmul.f32.gmra.mxu0 %v5278
        %v5280 = vpop.f32.mrf.mxu0
        %v5281 = vadd.f32 %v5216, %v5280
        %v5282 = vand.u32 %v4204, 4294901760
        %v5283 = vsub.f32 %v4204, %v5282
        %v5284 = vand.u32 %v5283, 4294901760
        %5285 = vmatmul.f32.gmra.mxu0 %v5284
        %v5286 = vpop.f32.mrf.mxu0
        %v5287 = vadd.f32 %v5221, %v5286
        %v5288 = vand.u32 %v4207, 4294901760
        %v5289 = vsub.f32 %v4207, %v5288
        %v5290 = vand.u32 %v5289, 4294901760
        %5291 = vmatmul.f32.gmra.mxu0 %v5290
        %v5292 = vpop.f32.mrf.mxu0
        %v5293 = vadd.f32 %v5226, %v5292
        %v5294 = vand.u32 %v4210, 4294901760
        %v5295 = vsub.f32 %v4210, %v5294
        %v5296 = vand.u32 %v5295, 4294901760
        %5297 = vmatmul.f32.gmra.mxu0 %v5296
        %v5298 = vpop.f32.mrf.mxu0
        %v5299 = vadd.f32 %v5231, %v5298
        %v5300 = vand.u32 %v4213, 4294901760
        %v5301 = vsub.f32 %v4213, %v5300
        %v5302 = vand.u32 %v5301, 4294901760
        %5303 = vmatmul.f32.gmra.mxu0 %v5302
        %v5304 = vpop.f32.mrf.mxu0
        %v5305 = vadd.f32 %v5236, %v5304
        %5306 = vdwg.mxu0
        %5307 = vmatpush.msra.mxu0 0.0
        %5308 = vmatpush.msra.mxu0 0.0
        %5309 = vmatpush.msra.mxu0 0.0
        %5310 = vmatpush.msra.mxu0 0.0
        %5311 = vmatpush.msra.mxu0 0.0
        %5312 = vmatpush.msra.mxu0 0.0
        %5313 = vmatpush.msra.mxu0 0.0
        %5314 = vmatpush.msra.mxu0 0.0
        %5315 = vmatpush.msra.mxu0 0.0
        %5316 = vmatpush.msra.mxu0 0.0
        %5317 = vmatpush.msra.mxu0 0.0
        %5318 = vmatpush.msra.mxu0 0.0
        %v5319 = vand.u32 %v4140, 4294901760
        %v5320 = vsub.f32 %v4140, %v5319
        %v5321 = vand.u32 %v5320, 4294901760
        %5322 = vmatpush.msra.mxu0 %v5321
        %v5323 = vand.u32 %v4136, 4294901760
        %v5324 = vsub.f32 %v4136, %v5323
        %v5325 = vand.u32 %v5324, 4294901760
        %5326 = vmatpush.msra.mxu0 %v5325
        %v5327 = vand.u32 %v4132, 4294901760
        %v5328 = vsub.f32 %v4132, %v5327
        %v5329 = vand.u32 %v5328, 4294901760
        %5330 = vmatpush.msra.mxu0 %v5329
        %v5331 = vand.u32 %v4128, 4294901760
        %v5332 = vsub.f32 %v4128, %v5331
        %v5333 = vand.u32 %v5332, 4294901760
        %5334 = vmatpush.msra.mxu0 %v5333
        %v5335 = vand.u32 %v4192, 4294901760
        %5336 = vmatmul.f32.gmra.mxu0 %v5335
        %v5337 = vpop.f32.mrf.mxu0
        %v5338 = vadd.f32 %v5263, %v5337
        %v5339 = vand.u32 %v4195, 4294901760
        %5340 = vmatmul.f32.gmra.mxu0 %v5339
        %v5341 = vpop.f32.mrf.mxu0
        %v5342 = vadd.f32 %v5269, %v5341
        %v5343 = vand.u32 %v4198, 4294901760
        %5344 = vmatmul.f32.gmra.mxu0 %v5343
        %v5345 = vpop.f32.mrf.mxu0
        %v5346 = vadd.f32 %v5275, %v5345
        %v5347 = vand.u32 %v4201, 4294901760
        %5348 = vmatmul.f32.gmra.mxu0 %v5347
        %v5349 = vpop.f32.mrf.mxu0
        %v5350 = vadd.f32 %v5281, %v5349
        %v5351 = vand.u32 %v4204, 4294901760
        %5352 = vmatmul.f32.gmra.mxu0 %v5351
        %v5353 = vpop.f32.mrf.mxu0
        %v5354 = vadd.f32 %v5287, %v5353
        %v5355 = vand.u32 %v4207, 4294901760
        %5356 = vmatmul.f32.gmra.mxu0 %v5355
        %v5357 = vpop.f32.mrf.mxu0
        %v5358 = vadd.f32 %v5293, %v5357
        %v5359 = vand.u32 %v4210, 4294901760
        %5360 = vmatmul.f32.gmra.mxu0 %v5359
        %v5361 = vpop.f32.mrf.mxu0
        %v5362 = vadd.f32 %v5299, %v5361
        %v5363 = vand.u32 %v4213, 4294901760
        %5364 = vmatmul.f32.gmra.mxu0 %v5363
        %v5365 = vpop.f32.mrf.mxu0
        %v5366 = vadd.f32 %v5305, %v5365
        %5367 = vdwg.mxu0
        %5368 = vmatpush.msra.mxu0 0.0
        %5369 = vmatpush.msra.mxu0 0.0
        %5370 = vmatpush.msra.mxu0 0.0
        %5371 = vmatpush.msra.mxu0 0.0
        %5372 = vmatpush.msra.mxu0 0.0
        %5373 = vmatpush.msra.mxu0 0.0
        %5374 = vmatpush.msra.mxu0 0.0
        %5375 = vmatpush.msra.mxu0 0.0
        %5376 = vmatpush.msra.mxu0 0.0
        %5377 = vmatpush.msra.mxu0 0.0
        %5378 = vmatpush.msra.mxu0 0.0
        %5379 = vmatpush.msra.mxu0 0.0
        %v5380 = vand.u32 %v4140, 4294901760
        %5381 = vmatpush.msra.mxu0 %v5380
        %v5382 = vand.u32 %v4136, 4294901760
        %5383 = vmatpush.msra.mxu0 %v5382
        %v5384 = vand.u32 %v4132, 4294901760
        %5385 = vmatpush.msra.mxu0 %v5384
        %v5386 = vand.u32 %v4128, 4294901760
        %5387 = vmatpush.msra.mxu0 %v5386
        %v5388 = vand.u32 %v4192, 4294901760
        %5389 = vmatmul.f32.gmra.mxu0 %v5388
        %v5390 = vpop.f32.mrf.mxu0
        %v5391 = vadd.f32 %v5338, %v5390
        %v5392 = vand.u32 %v4195, 4294901760
        %5393 = vmatmul.f32.gmra.mxu0 %v5392
        %v5394 = vpop.f32.mrf.mxu0
        %v5395 = vadd.f32 %v5342, %v5394
        %v5396 = vand.u32 %v4198, 4294901760
        %5397 = vmatmul.f32.gmra.mxu0 %v5396
        %v5398 = vpop.f32.mrf.mxu0
        %v5399 = vadd.f32 %v5346, %v5398
        %v5400 = vand.u32 %v4201, 4294901760
        %5401 = vmatmul.f32.gmra.mxu0 %v5400
        %v5402 = vpop.f32.mrf.mxu0
        %v5403 = vadd.f32 %v5350, %v5402
        %v5404 = vand.u32 %v4204, 4294901760
        %5405 = vmatmul.f32.gmra.mxu0 %v5404
        %v5406 = vpop.f32.mrf.mxu0
        %v5407 = vadd.f32 %v5354, %v5406
        %v5408 = vand.u32 %v4207, 4294901760
        %5409 = vmatmul.f32.gmra.mxu0 %v5408
        %v5410 = vpop.f32.mrf.mxu0
        %v5411 = vadd.f32 %v5358, %v5410
        %v5412 = vand.u32 %v4210, 4294901760
        %5413 = vmatmul.f32.gmra.mxu0 %v5412
        %v5414 = vpop.f32.mrf.mxu0
        %v5415 = vadd.f32 %v5362, %v5414
        %v5416 = vand.u32 %v4213, 4294901760
        %5417 = vmatmul.f32.gmra.mxu0 %v5416
        %v5418 = vpop.f32.mrf.mxu0
        %v5419 = vadd.f32 %v5366, %v5418
        %5420 = vdwg.mxu0
        %5421 = vmatpush.msra.mxu0 0.0
        %5422 = vmatpush.msra.mxu0 0.0
        %5423 = vmatpush.msra.mxu0 0.0
        %5424 = vmatpush.msra.mxu0 0.0
        %5425 = vmatpush.msra.mxu0 0.0
        %5426 = vmatpush.msra.mxu0 0.0
        %5427 = vmatpush.msra.mxu0 0.0
        %5428 = vmatpush.msra.mxu0 0.0
        %5429 = vmatpush.msra.mxu0 0.0
        %5430 = vmatpush.msra.mxu0 0.0
        %5431 = vmatpush.msra.mxu0 0.0
        %5432 = vmatpush.msra.mxu0 0.0
        %v5433 = vand.u32 %v4141, 4294901760
        %5434 = vmatpush.msra.mxu0 %v5433
        %v5435 = vand.u32 %v4137, 4294901760
        %5436 = vmatpush.msra.mxu0 %v5435
        %v5437 = vand.u32 %v4133, 4294901760
        %5438 = vmatpush.msra.mxu0 %v5437
        %v5439 = vand.u32 %v4129, 4294901760
        %5440 = vmatpush.msra.mxu0 %v5439
        %v5441 = vand.u32 %v4192, 4294901760
        %v5442 = vsub.f32 %v4192, %v5441
        %v5443 = vand.u32 %v5442, 4294901760
        %v5444 = vsub.f32 %v5442, %v5443
        %v5445 = vand.u32 %v5444, 4294901760
        %5446 = vmatmul.f32.gmra.mxu0 %v5445
        %v5447 = vpop.f32.mrf.mxu0
        %v5448 = vadd.f32 %v4154, %v5447
        %v5449 = vand.u32 %v4195, 4294901760
        %v5450 = vsub.f32 %v4195, %v5449
        %v5451 = vand.u32 %v5450, 4294901760
        %v5452 = vsub.f32 %v5450, %v5451
        %v5453 = vand.u32 %v5452, 4294901760
        %5454 = vmatmul.f32.gmra.mxu0 %v5453
        %v5455 = vpop.f32.mrf.mxu0
        %v5456 = vadd.f32 %v4159, %v5455
        %v5457 = vand.u32 %v4198, 4294901760
        %v5458 = vsub.f32 %v4198, %v5457
        %v5459 = vand.u32 %v5458, 4294901760
        %v5460 = vsub.f32 %v5458, %v5459
        %v5461 = vand.u32 %v5460, 4294901760
        %5462 = vmatmul.f32.gmra.mxu0 %v5461
        %v5463 = vpop.f32.mrf.mxu0
        %v5464 = vadd.f32 %v4164, %v5463
        %v5465 = vand.u32 %v4201, 4294901760
        %v5466 = vsub.f32 %v4201, %v5465
        %v5467 = vand.u32 %v5466, 4294901760
        %v5468 = vsub.f32 %v5466, %v5467
        %v5469 = vand.u32 %v5468, 4294901760
        %5470 = vmatmul.f32.gmra.mxu0 %v5469
        %v5471 = vpop.f32.mrf.mxu0
        %v5472 = vadd.f32 %v4169, %v5471
        %v5473 = vand.u32 %v4204, 4294901760
        %v5474 = vsub.f32 %v4204, %v5473
        %v5475 = vand.u32 %v5474, 4294901760
        %v5476 = vsub.f32 %v5474, %v5475
        %v5477 = vand.u32 %v5476, 4294901760
        %5478 = vmatmul.f32.gmra.mxu0 %v5477
        %v5479 = vpop.f32.mrf.mxu0
        %v5480 = vadd.f32 %v4174, %v5479
        %v5481 = vand.u32 %v4207, 4294901760
        %v5482 = vsub.f32 %v4207, %v5481
        %v5483 = vand.u32 %v5482, 4294901760
        %v5484 = vsub.f32 %v5482, %v5483
        %v5485 = vand.u32 %v5484, 4294901760
        %5486 = vmatmul.f32.gmra.mxu0 %v5485
        %v5487 = vpop.f32.mrf.mxu0
        %v5488 = vadd.f32 %v4179, %v5487
        %v5489 = vand.u32 %v4210, 4294901760
        %v5490 = vsub.f32 %v4210, %v5489
        %v5491 = vand.u32 %v5490, 4294901760
        %v5492 = vsub.f32 %v5490, %v5491
        %v5493 = vand.u32 %v5492, 4294901760
        %5494 = vmatmul.f32.gmra.mxu0 %v5493
        %v5495 = vpop.f32.mrf.mxu0
        %v5496 = vadd.f32 %v4184, %v5495
        %v5497 = vand.u32 %v4213, 4294901760
        %v5498 = vsub.f32 %v4213, %v5497
        %v5499 = vand.u32 %v5498, 4294901760
        %v5500 = vsub.f32 %v5498, %v5499
        %v5501 = vand.u32 %v5500, 4294901760
        %5502 = vmatmul.f32.gmra.mxu0 %v5501
        %v5503 = vpop.f32.mrf.mxu0
        %v5504 = vadd.f32 %v4189, %v5503
        %5505 = vdwg.mxu0
        %5506 = vmatpush.msra.mxu0 0.0
        %5507 = vmatpush.msra.mxu0 0.0
        %5508 = vmatpush.msra.mxu0 0.0
        %5509 = vmatpush.msra.mxu0 0.0
        %5510 = vmatpush.msra.mxu0 0.0
        %5511 = vmatpush.msra.mxu0 0.0
        %5512 = vmatpush.msra.mxu0 0.0
        %5513 = vmatpush.msra.mxu0 0.0
        %5514 = vmatpush.msra.mxu0 0.0
        %5515 = vmatpush.msra.mxu0 0.0
        %5516 = vmatpush.msra.mxu0 0.0
        %5517 = vmatpush.msra.mxu0 0.0
        %v5518 = vand.u32 %v4141, 4294901760
        %v5519 = vsub.f32 %v4141, %v5518
        %v5520 = vand.u32 %v5519, 4294901760
        %v5521 = vsub.f32 %v5519, %v5520
        %v5522 = vand.u32 %v5521, 4294901760
        %5523 = vmatpush.msra.mxu0 %v5522
        %v5524 = vand.u32 %v4137, 4294901760
        %v5525 = vsub.f32 %v4137, %v5524
        %v5526 = vand.u32 %v5525, 4294901760
        %v5527 = vsub.f32 %v5525, %v5526
        %v5528 = vand.u32 %v5527, 4294901760
        %5529 = vmatpush.msra.mxu0 %v5528
        %v5530 = vand.u32 %v4133, 4294901760
        %v5531 = vsub.f32 %v4133, %v5530
        %v5532 = vand.u32 %v5531, 4294901760
        %v5533 = vsub.f32 %v5531, %v5532
        %v5534 = vand.u32 %v5533, 4294901760
        %5535 = vmatpush.msra.mxu0 %v5534
        %v5536 = vand.u32 %v4129, 4294901760
        %v5537 = vsub.f32 %v4129, %v5536
        %v5538 = vand.u32 %v5537, 4294901760
        %v5539 = vsub.f32 %v5537, %v5538
        %v5540 = vand.u32 %v5539, 4294901760
        %5541 = vmatpush.msra.mxu0 %v5540
        %v5542 = vand.u32 %v4192, 4294901760
        %5543 = vmatmul.f32.gmra.mxu0 %v5542
        %v5544 = vpop.f32.mrf.mxu0
        %v5545 = vadd.f32 %v5448, %v5544
        %v5546 = vand.u32 %v4195, 4294901760
        %5547 = vmatmul.f32.gmra.mxu0 %v5546
        %v5548 = vpop.f32.mrf.mxu0
        %v5549 = vadd.f32 %v5456, %v5548
        %v5550 = vand.u32 %v4198, 4294901760
        %5551 = vmatmul.f32.gmra.mxu0 %v5550
        %v5552 = vpop.f32.mrf.mxu0
        %v5553 = vadd.f32 %v5464, %v5552
        %v5554 = vand.u32 %v4201, 4294901760
        %5555 = vmatmul.f32.gmra.mxu0 %v5554
        %v5556 = vpop.f32.mrf.mxu0
        %v5557 = vadd.f32 %v5472, %v5556
        %v5558 = vand.u32 %v4204, 4294901760
        %5559 = vmatmul.f32.gmra.mxu0 %v5558
        %v5560 = vpop.f32.mrf.mxu0
        %v5561 = vadd.f32 %v5480, %v5560
        %v5562 = vand.u32 %v4207, 4294901760
        %5563 = vmatmul.f32.gmra.mxu0 %v5562
        %v5564 = vpop.f32.mrf.mxu0
        %v5565 = vadd.f32 %v5488, %v5564
        %v5566 = vand.u32 %v4210, 4294901760
        %5567 = vmatmul.f32.gmra.mxu0 %v5566
        %v5568 = vpop.f32.mrf.mxu0
        %v5569 = vadd.f32 %v5496, %v5568
        %v5570 = vand.u32 %v4213, 4294901760
        %5571 = vmatmul.f32.gmra.mxu0 %v5570
        %v5572 = vpop.f32.mrf.mxu0
        %v5573 = vadd.f32 %v5504, %v5572
        %5574 = vdwg.mxu0
        %5575 = vmatpush.msra.mxu0 0.0
        %5576 = vmatpush.msra.mxu0 0.0
        %5577 = vmatpush.msra.mxu0 0.0
        %5578 = vmatpush.msra.mxu0 0.0
        %5579 = vmatpush.msra.mxu0 0.0
        %5580 = vmatpush.msra.mxu0 0.0
        %5581 = vmatpush.msra.mxu0 0.0
        %5582 = vmatpush.msra.mxu0 0.0
        %5583 = vmatpush.msra.mxu0 0.0
        %5584 = vmatpush.msra.mxu0 0.0
        %5585 = vmatpush.msra.mxu0 0.0
        %5586 = vmatpush.msra.mxu0 0.0
        %v5587 = vand.u32 %v4141, 4294901760
        %v5588 = vsub.f32 %v4141, %v5587
        %5589 = vmatpush.msra.mxu0 %v5588
        %v5590 = vand.u32 %v4137, 4294901760
        %v5591 = vsub.f32 %v4137, %v5590
        %5592 = vmatpush.msra.mxu0 %v5591
        %v5593 = vand.u32 %v4133, 4294901760
        %v5594 = vsub.f32 %v4133, %v5593
        %5595 = vmatpush.msra.mxu0 %v5594
        %v5596 = vand.u32 %v4129, 4294901760
        %v5597 = vsub.f32 %v4129, %v5596
        %5598 = vmatpush.msra.mxu0 %v5597
        %v5599 = vand.u32 %v4192, 4294901760
        %v5600 = vsub.f32 %v4192, %v5599
        %5601 = vmatmul.f32.gmra.mxu0 %v5600
        %v5602 = vpop.f32.mrf.mxu0
        %v5603 = vadd.f32 %v5545, %v5602
        %v5604 = vand.u32 %v4195, 4294901760
        %v5605 = vsub.f32 %v4195, %v5604
        %5606 = vmatmul.f32.gmra.mxu0 %v5605
        %v5607 = vpop.f32.mrf.mxu0
        %v5608 = vadd.f32 %v5549, %v5607
        %v5609 = vand.u32 %v4198, 4294901760
        %v5610 = vsub.f32 %v4198, %v5609
        %5611 = vmatmul.f32.gmra.mxu0 %v5610
        %v5612 = vpop.f32.mrf.mxu0
        %v5613 = vadd.f32 %v5553, %v5612
        %v5614 = vand.u32 %v4201, 4294901760
        %v5615 = vsub.f32 %v4201, %v5614
        %5616 = vmatmul.f32.gmra.mxu0 %v5615
        %v5617 = vpop.f32.mrf.mxu0
        %v5618 = vadd.f32 %v5557, %v5617
        %v5619 = vand.u32 %v4204, 4294901760
        %v5620 = vsub.f32 %v4204, %v5619
        %5621 = vmatmul.f32.gmra.mxu0 %v5620
        %v5622 = vpop.f32.mrf.mxu0
        %v5623 = vadd.f32 %v5561, %v5622
        %v5624 = vand.u32 %v4207, 4294901760
        %v5625 = vsub.f32 %v4207, %v5624
        %5626 = vmatmul.f32.gmra.mxu0 %v5625
        %v5627 = vpop.f32.mrf.mxu0
        %v5628 = vadd.f32 %v5565, %v5627
        %v5629 = vand.u32 %v4210, 4294901760
        %v5630 = vsub.f32 %v4210, %v5629
        %5631 = vmatmul.f32.gmra.mxu0 %v5630
        %v5632 = vpop.f32.mrf.mxu0
        %v5633 = vadd.f32 %v5569, %v5632
        %v5634 = vand.u32 %v4213, 4294901760
        %v5635 = vsub.f32 %v4213, %v5634
        %5636 = vmatmul.f32.gmra.mxu0 %v5635
        %v5637 = vpop.f32.mrf.mxu0
        %v5638 = vadd.f32 %v5573, %v5637
        %5639 = vdwg.mxu0
        %5640 = vmatpush.msra.mxu0 0.0
        %5641 = vmatpush.msra.mxu0 0.0
        %5642 = vmatpush.msra.mxu0 0.0
        %5643 = vmatpush.msra.mxu0 0.0
        %5644 = vmatpush.msra.mxu0 0.0
        %5645 = vmatpush.msra.mxu0 0.0
        %5646 = vmatpush.msra.mxu0 0.0
        %5647 = vmatpush.msra.mxu0 0.0
        %5648 = vmatpush.msra.mxu0 0.0
        %5649 = vmatpush.msra.mxu0 0.0
        %5650 = vmatpush.msra.mxu0 0.0
        %5651 = vmatpush.msra.mxu0 0.0
        %v5652 = vand.u32 %v4141, 4294901760
        %5653 = vmatpush.msra.mxu0 %v5652
        %v5654 = vand.u32 %v4137, 4294901760
        %5655 = vmatpush.msra.mxu0 %v5654
        %v5656 = vand.u32 %v4133, 4294901760
        %5657 = vmatpush.msra.mxu0 %v5656
        %v5658 = vand.u32 %v4129, 4294901760
        %5659 = vmatpush.msra.mxu0 %v5658
        %v5660 = vand.u32 %v4192, 4294901760
        %v5661 = vsub.f32 %v4192, %v5660
        %v5662 = vand.u32 %v5661, 4294901760
        %5663 = vmatmul.f32.gmra.mxu0 %v5662
        %v5664 = vpop.f32.mrf.mxu0
        %v5665 = vadd.f32 %v5603, %v5664
        %v5666 = vand.u32 %v4195, 4294901760
        %v5667 = vsub.f32 %v4195, %v5666
        %v5668 = vand.u32 %v5667, 4294901760
        %5669 = vmatmul.f32.gmra.mxu0 %v5668
        %v5670 = vpop.f32.mrf.mxu0
        %v5671 = vadd.f32 %v5608, %v5670
        %v5672 = vand.u32 %v4198, 4294901760
        %v5673 = vsub.f32 %v4198, %v5672
        %v5674 = vand.u32 %v5673, 4294901760
        %5675 = vmatmul.f32.gmra.mxu0 %v5674
        %v5676 = vpop.f32.mrf.mxu0
        %v5677 = vadd.f32 %v5613, %v5676
        %v5678 = vand.u32 %v4201, 4294901760
        %v5679 = vsub.f32 %v4201, %v5678
        %v5680 = vand.u32 %v5679, 4294901760
        %5681 = vmatmul.f32.gmra.mxu0 %v5680
        %v5682 = vpop.f32.mrf.mxu0
        %v5683 = vadd.f32 %v5618, %v5682
        %v5684 = vand.u32 %v4204, 4294901760
        %v5685 = vsub.f32 %v4204, %v5684
        %v5686 = vand.u32 %v5685, 4294901760
        %5687 = vmatmul.f32.gmra.mxu0 %v5686
        %v5688 = vpop.f32.mrf.mxu0
        %v5689 = vadd.f32 %v5623, %v5688
        %v5690 = vand.u32 %v4207, 4294901760
        %v5691 = vsub.f32 %v4207, %v5690
        %v5692 = vand.u32 %v5691, 4294901760
        %5693 = vmatmul.f32.gmra.mxu0 %v5692
        %v5694 = vpop.f32.mrf.mxu0
        %v5695 = vadd.f32 %v5628, %v5694
        %v5696 = vand.u32 %v4210, 4294901760
        %v5697 = vsub.f32 %v4210, %v5696
        %v5698 = vand.u32 %v5697, 4294901760
        %5699 = vmatmul.f32.gmra.mxu0 %v5698
        %v5700 = vpop.f32.mrf.mxu0
        %v5701 = vadd.f32 %v5633, %v5700
        %v5702 = vand.u32 %v4213, 4294901760
        %v5703 = vsub.f32 %v4213, %v5702
        %v5704 = vand.u32 %v5703, 4294901760
        %5705 = vmatmul.f32.gmra.mxu0 %v5704
        %v5706 = vpop.f32.mrf.mxu0
        %v5707 = vadd.f32 %v5638, %v5706
        %5708 = vdwg.mxu0
        %5709 = vmatpush.msra.mxu0 0.0
        %5710 = vmatpush.msra.mxu0 0.0
        %5711 = vmatpush.msra.mxu0 0.0
        %5712 = vmatpush.msra.mxu0 0.0
        %5713 = vmatpush.msra.mxu0 0.0
        %5714 = vmatpush.msra.mxu0 0.0
        %5715 = vmatpush.msra.mxu0 0.0
        %5716 = vmatpush.msra.mxu0 0.0
        %5717 = vmatpush.msra.mxu0 0.0
        %5718 = vmatpush.msra.mxu0 0.0
        %5719 = vmatpush.msra.mxu0 0.0
        %5720 = vmatpush.msra.mxu0 0.0
        %v5721 = vand.u32 %v4141, 4294901760
        %v5722 = vsub.f32 %v4141, %v5721
        %v5723 = vand.u32 %v5722, 4294901760
        %5724 = vmatpush.msra.mxu0 %v5723
        %v5725 = vand.u32 %v4137, 4294901760
        %v5726 = vsub.f32 %v4137, %v5725
        %v5727 = vand.u32 %v5726, 4294901760
        %5728 = vmatpush.msra.mxu0 %v5727
        %v5729 = vand.u32 %v4133, 4294901760
        %v5730 = vsub.f32 %v4133, %v5729
        %v5731 = vand.u32 %v5730, 4294901760
        %5732 = vmatpush.msra.mxu0 %v5731
        %v5733 = vand.u32 %v4129, 4294901760
        %v5734 = vsub.f32 %v4129, %v5733
        %v5735 = vand.u32 %v5734, 4294901760
        %5736 = vmatpush.msra.mxu0 %v5735
        %v5737 = vand.u32 %v4192, 4294901760
        %5738 = vmatmul.f32.gmra.mxu0 %v5737
        %v5739 = vpop.f32.mrf.mxu0
        %v5740 = vadd.f32 %v5665, %v5739
        %v5741 = vand.u32 %v4195, 4294901760
        %5742 = vmatmul.f32.gmra.mxu0 %v5741
        %v5743 = vpop.f32.mrf.mxu0
        %v5744 = vadd.f32 %v5671, %v5743
        %v5745 = vand.u32 %v4198, 4294901760
        %5746 = vmatmul.f32.gmra.mxu0 %v5745
        %v5747 = vpop.f32.mrf.mxu0
        %v5748 = vadd.f32 %v5677, %v5747
        %v5749 = vand.u32 %v4201, 4294901760
        %5750 = vmatmul.f32.gmra.mxu0 %v5749
        %v5751 = vpop.f32.mrf.mxu0
        %v5752 = vadd.f32 %v5683, %v5751
        %v5753 = vand.u32 %v4204, 4294901760
        %5754 = vmatmul.f32.gmra.mxu0 %v5753
        %v5755 = vpop.f32.mrf.mxu0
        %v5756 = vadd.f32 %v5689, %v5755
        %v5757 = vand.u32 %v4207, 4294901760
        %5758 = vmatmul.f32.gmra.mxu0 %v5757
        %v5759 = vpop.f32.mrf.mxu0
        %v5760 = vadd.f32 %v5695, %v5759
        %v5761 = vand.u32 %v4210, 4294901760
        %5762 = vmatmul.f32.gmra.mxu0 %v5761
        %v5763 = vpop.f32.mrf.mxu0
        %v5764 = vadd.f32 %v5701, %v5763
        %v5765 = vand.u32 %v4213, 4294901760
        %5766 = vmatmul.f32.gmra.mxu0 %v5765
        %v5767 = vpop.f32.mrf.mxu0
        %v5768 = vadd.f32 %v5707, %v5767
        %5769 = vdwg.mxu0
        %5770 = vmatpush.msra.mxu0 0.0
        %5771 = vmatpush.msra.mxu0 0.0
        %5772 = vmatpush.msra.mxu0 0.0
        %5773 = vmatpush.msra.mxu0 0.0
        %5774 = vmatpush.msra.mxu0 0.0
        %5775 = vmatpush.msra.mxu0 0.0
        %5776 = vmatpush.msra.mxu0 0.0
        %5777 = vmatpush.msra.mxu0 0.0
        %5778 = vmatpush.msra.mxu0 0.0
        %5779 = vmatpush.msra.mxu0 0.0
        %5780 = vmatpush.msra.mxu0 0.0
        %5781 = vmatpush.msra.mxu0 0.0
        %v5782 = vand.u32 %v4141, 4294901760
        %5783 = vmatpush.msra.mxu0 %v5782
        %v5784 = vand.u32 %v4137, 4294901760
        %5785 = vmatpush.msra.mxu0 %v5784
        %v5786 = vand.u32 %v4133, 4294901760
        %5787 = vmatpush.msra.mxu0 %v5786
        %v5788 = vand.u32 %v4129, 4294901760
        %5789 = vmatpush.msra.mxu0 %v5788
        %v5790 = vand.u32 %v4192, 4294901760
        %5791 = vmatmul.f32.gmra.mxu0 %v5790
        %v5792 = vpop.f32.mrf.mxu0
        %v5793 = vadd.f32 %v5740, %v5792
        %v5794 = vand.u32 %v4195, 4294901760
        %5795 = vmatmul.f32.gmra.mxu0 %v5794
        %v5796 = vpop.f32.mrf.mxu0
        %v5797 = vadd.f32 %v5744, %v5796
        %v5798 = vand.u32 %v4198, 4294901760
        %5799 = vmatmul.f32.gmra.mxu0 %v5798
        %v5800 = vpop.f32.mrf.mxu0
        %v5801 = vadd.f32 %v5748, %v5800
        %v5802 = vand.u32 %v4201, 4294901760
        %5803 = vmatmul.f32.gmra.mxu0 %v5802
        %v5804 = vpop.f32.mrf.mxu0
        %v5805 = vadd.f32 %v5752, %v5804
        %v5806 = vand.u32 %v4204, 4294901760
        %5807 = vmatmul.f32.gmra.mxu0 %v5806
        %v5808 = vpop.f32.mrf.mxu0
        %v5809 = vadd.f32 %v5756, %v5808
        %v5810 = vand.u32 %v4207, 4294901760
        %5811 = vmatmul.f32.gmra.mxu0 %v5810
        %v5812 = vpop.f32.mrf.mxu0
        %v5813 = vadd.f32 %v5760, %v5812
        %v5814 = vand.u32 %v4210, 4294901760
        %5815 = vmatmul.f32.gmra.mxu0 %v5814
        %v5816 = vpop.f32.mrf.mxu0
        %v5817 = vadd.f32 %v5764, %v5816
        %v5818 = vand.u32 %v4213, 4294901760
        %5819 = vmatmul.f32.gmra.mxu0 %v5818
        %v5820 = vpop.f32.mrf.mxu0
        %v5821 = vadd.f32 %v5768, %v5820
        %5822 = vdwg.mxu0
        %s5823 = scalar_lea.vmem %s370, 256 [#allocation6]
        %5824 = vst [vmem:[%s5823] sm:$0xff] %v4587
        %5825 = vst [vmem:[%s5823 + $0x8] sm:$0xff] %v4989
        %5826 = vst [vmem:[%s5823 + $0x10] sm:$0xff] %v5391
        %5827 = vst [vmem:[%s5823 + $0x18] sm:$0xff] %v5793
        %5828 = vst [vmem:[%s5823 + $0x20] sm:$0xff] %v4591
        %5829 = vst [vmem:[%s5823 + $0x28] sm:$0xff] %v4993
        %5830 = vst [vmem:[%s5823 + $0x30] sm:$0xff] %v5395
        %5831 = vst [vmem:[%s5823 + $0x38] sm:$0xff] %v5797
        %5832 = vst [vmem:[%s5823 + $0x40] sm:$0xff] %v4595
        %5833 = vst [vmem:[%s5823 + $0x48] sm:$0xff] %v4997
        %5834 = vst [vmem:[%s5823 + $0x50] sm:$0xff] %v5399
        %5835 = vst [vmem:[%s5823 + $0x58] sm:$0xff] %v5801
        %5836 = vst [vmem:[%s5823 + $0x60] sm:$0xff] %v4599
        %5837 = vst [vmem:[%s5823 + $0x68] sm:$0xff] %v5001
        %5838 = vst [vmem:[%s5823 + $0x70] sm:$0xff] %v5403
        %5839 = vst [vmem:[%s5823 + $0x78] sm:$0xff] %v5805
        %s5840 = scalar_lea.vmem %s377, 256 [#allocation8]
        %5841 = vst [vmem:[%s5840] sm:$0xff] %v4603
        %5842 = vst [vmem:[%s5840 + $0x8] sm:$0xff] %v5005
        %5843 = vst [vmem:[%s5840 + $0x10] sm:$0xff] %v5407
        %5844 = vst [vmem:[%s5840 + $0x18] sm:$0xff] %v5809
        %5845 = vst [vmem:[%s5840 + $0x20] sm:$0xff] %v4607
        %5846 = vst [vmem:[%s5840 + $0x28] sm:$0xff] %v5009
        %5847 = vst [vmem:[%s5840 + $0x30] sm:$0xff] %v5411
        %5848 = vst [vmem:[%s5840 + $0x38] sm:$0xff] %v5813
        %5849 = vst [vmem:[%s5840 + $0x40] sm:$0xff] %v4611
        %5850 = vst [vmem:[%s5840 + $0x48] sm:$0xff] %v5013
        %5851 = vst [vmem:[%s5840 + $0x50] sm:$0xff] %v5415
        %5852 = vst [vmem:[%s5840 + $0x58] sm:$0xff] %v5817
        %5853 = vst [vmem:[%s5840 + $0x60] sm:$0xff] %v4615
        %5854 = vst [vmem:[%s5840 + $0x68] sm:$0xff] %v5017
        %5855 = vst [vmem:[%s5840 + $0x70] sm:$0xff] %v5419
        %5856 = vst [vmem:[%s5840 + $0x78] sm:$0xff] %v5821
        %s5857 = scalar_lea.vmem %s316, 256 [#allocation2]
        %v5858 = vld [vmem:[%s5857] sm:$0xff]
        %v5859 = vld [vmem:[%s5857 + $0x8] sm:$0xff]
        %v5860 = vld [vmem:[%s5857 + $0x10] sm:$0xff]
        %v5861 = vld [vmem:[%s5857 + $0x18] sm:$0xff]
        %v5862 = vld [vmem:[%s5857 + $0x20] sm:$0xff]
        %v5863 = vld [vmem:[%s5857 + $0x28] sm:$0xff]
        %v5864 = vld [vmem:[%s5857 + $0x30] sm:$0xff]
        %v5865 = vld [vmem:[%s5857 + $0x38] sm:$0xff]
        %v5866 = vld [vmem:[%s5857 + $0x40] sm:$0xff]
        %v5867 = vld [vmem:[%s5857 + $0x48] sm:$0xff]
        %v5868 = vld [vmem:[%s5857 + $0x50] sm:$0xff]
        %v5869 = vld [vmem:[%s5857 + $0x58] sm:$0xff]
        %v5870 = vld [vmem:[%s5857 + $0x60] sm:$0xff]
        %v5871 = vld [vmem:[%s5857 + $0x68] sm:$0xff]
        %v5872 = vld [vmem:[%s5857 + $0x70] sm:$0xff]
        %v5873 = vld [vmem:[%s5857 + $0x78] sm:$0xff]
        %v5874 = vmul.f32 %v4603, 0.5
        %v5875 = vmul.f32 %v5005, 0.5
        %v5876 = vmul.f32 %v5407, 0.5
        %v5877 = vmul.f32 %v5809, 0.5
        %v5878 = vmul.f32 %v4607, 0.5
        %v5879 = vmul.f32 %v5009, 0.5
        %v5880 = vmul.f32 %v5411, 0.5
        %v5881 = vmul.f32 %v5813, 0.5
        %v5882 = vmul.f32 %v4611, 0.5
        %v5883 = vmul.f32 %v5013, 0.5
        %v5884 = vmul.f32 %v5415, 0.5
        %v5885 = vmul.f32 %v5817, 0.5
        %v5886 = vmul.f32 %v4615, 0.5
        %v5887 = vmul.f32 %v5017, 0.5
        %v5888 = vmul.f32 %v5419, 0.5
        %v5889 = vmul.f32 %v5821, 0.5
        %v5890 = vmul.f32 %v5874, 1.442695
        %v5891 = vpow.pop %v5890
        %v5892 = vmul.f32 %v5875, 1.442695
        %v5893 = vpow.pop %v5892
        %v5894 = vmul.f32 %v5876, 1.442695
        %v5895 = vpow.pop %v5894
        %v5896 = vmul.f32 %v5877, 1.442695
        %v5897 = vpow.pop %v5896
        %v5898 = vmul.f32 %v5878, 1.442695
        %v5899 = vpow.pop %v5898
        %v5900 = vmul.f32 %v5879, 1.442695
        %v5901 = vpow.pop %v5900
        %v5902 = vmul.f32 %v5880, 1.442695
        %v5903 = vpow.pop %v5902
        %v5904 = vmul.f32 %v5881, 1.442695
        %v5905 = vpow.pop %v5904
        %v5906 = vmul.f32 %v5882, 1.442695
        %v5907 = vpow.pop %v5906
        %v5908 = vmul.f32 %v5883, 1.442695
        %v5909 = vpow.pop %v5908
        %v5910 = vmul.f32 %v5884, 1.442695
        %v5911 = vpow.pop %v5910
        %v5912 = vmul.f32 %v5885, 1.442695
        %v5913 = vpow.pop %v5912
        %v5914 = vmul.f32 %v5886, 1.442695
        %v5915 = vpow.pop %v5914
        %v5916 = vmul.f32 %v5887, 1.442695
        %v5917 = vpow.pop %v5916
        %v5918 = vmul.f32 %v5888, 1.442695
        %v5919 = vpow.pop %v5918
        %v5920 = vmul.f32 %v5889, 1.442695
        %v5921 = vpow.pop %v5920
        %v5922 = vmul.f32 %v5858, %v5891
        %v5923 = vmul.f32 %v5859, %v5893
        %v5924 = vmul.f32 %v5860, %v5895
        %v5925 = vmul.f32 %v5861, %v5897
        %v5926 = vmul.f32 %v5862, %v5899
        %v5927 = vmul.f32 %v5863, %v5901
        %v5928 = vmul.f32 %v5864, %v5903
        %v5929 = vmul.f32 %v5865, %v5905
        %v5930 = vmul.f32 %v5866, %v5907
        %v5931 = vmul.f32 %v5867, %v5909
        %v5932 = vmul.f32 %v5868, %v5911
        %v5933 = vmul.f32 %v5869, %v5913
        %v5934 = vmul.f32 %v5870, %v5915
        %v5935 = vmul.f32 %v5871, %v5917
        %v5936 = vmul.f32 %v5872, %v5919
        %v5937 = vmul.f32 %v5873, %v5921
        %v5938 = vadd.f32 %v4587, %v5922
        %v5939 = vadd.f32 %v4989, %v5923
        %v5940 = vadd.f32 %v5391, %v5924
        %v5941 = vadd.f32 %v5793, %v5925
        %v5942 = vadd.f32 %v4591, %v5926
        %v5943 = vadd.f32 %v4993, %v5927
        %v5944 = vadd.f32 %v5395, %v5928
        %v5945 = vadd.f32 %v5797, %v5929
        %v5946 = vadd.f32 %v4595, %v5930
        %v5947 = vadd.f32 %v4997, %v5931
        %v5948 = vadd.f32 %v5399, %v5932
        %v5949 = vadd.f32 %v5801, %v5933
        %v5950 = vadd.f32 %v4599, %v5934
        %v5951 = vadd.f32 %v5001, %v5935
        %v5952 = vadd.f32 %v5403, %v5936
        %v5953 = vadd.f32 %v5805, %v5937
        %s5954 = scalar_lea.vmem %s363, 256 [#allocation5]
        %5955 = vst [vmem:[%s5954] sm:$0xff] %v5938
        %5956 = vst [vmem:[%s5954 + $0x8] sm:$0xff] %v5939
        %5957 = vst [vmem:[%s5954 + $0x10] sm:$0xff] %v5940
        %5958 = vst [vmem:[%s5954 + $0x18] sm:$0xff] %v5941
        %5959 = vst [vmem:[%s5954 + $0x20] sm:$0xff] %v5942
        %5960 = vst [vmem:[%s5954 + $0x28] sm:$0xff] %v5943
        %5961 = vst [vmem:[%s5954 + $0x30] sm:$0xff] %v5944
        %5962 = vst [vmem:[%s5954 + $0x38] sm:$0xff] %v5945
        %5963 = vst [vmem:[%s5954 + $0x40] sm:$0xff] %v5946
        %5964 = vst [vmem:[%s5954 + $0x48] sm:$0xff] %v5947
        %5965 = vst [vmem:[%s5954 + $0x50] sm:$0xff] %v5948
        %5966 = vst [vmem:[%s5954 + $0x58] sm:$0xff] %v5949
        %5967 = vst [vmem:[%s5954 + $0x60] sm:$0xff] %v5950
        %5968 = vst [vmem:[%s5954 + $0x68] sm:$0xff] %v5951
        %5969 = vst [vmem:[%s5954 + $0x70] sm:$0xff] %v5952
        %5970 = vst [vmem:[%s5954 + $0x78] sm:$0xff] %v5953
        %s5971 = sand.u32 %s157, 1
        %s5972 = scalar_lea.sflag [#allocation4], %s5971
        %s5973 = sand.u32 %s157, 1
        %s5974 = smul.addr %s5973, 384
        %s5975 = scalar_lea.vmem [#allocation5], %s5974
        %s5976 = sand.u32 %s27, 1
        %s5977 = scalar_lea.sflag [#allocation7], %s5976
        %s5978 = sand.u32 %s185, 1
        %s5979 = smul.addr %s5978, 384
        %s5980 = scalar_lea.vmem [#allocation6], %s5979
        %s5981 = sand.u32 %s27, 1
        %s5982 = scalar_lea.sflag [#allocation7], %s5981
        %s5983 = sand.u32 %s213, 1
        %s5984 = smul.addr %s5983, 384
        %s5985 = scalar_lea.vmem [#allocation8], %s5984
        // Predicated region
        $region41: #{hexplane_vae_fused.1} parent=35 // pred_check
          %p5986 = pneg %p167
        $region42: #{hexplane_vae_fused.1} parent=35 // pred_check_branch
          %5988 = sbr.rel (%p5986) target = $region44
        $region43: #{hexplane_vae_fused.1} parent=35 // pred_region
          %s5989 = smul.u32 3, %s31
          %s5990 = smul.u32 4, %s32
          %5992 = vsyncadd %s5972, 0
          %s5993 = smul.addr %s5989, 16
          %s5994 = sadd.s32 %s5990, %s5993
          %s5995 = smul.addr %s5994, 8
          %s5996 = scalar_lea.hbm %s4, %s5995
          %s5997 = sshll.u32 %s5975, 4
          %s5998 = int_to_ptr.vmem [resolvable:$true] %s5997
          %s5999 = sshll.u32 %s5996, 4
          %s6000 = int_to_ptr.hbm [resolvable:$true] %s5999
          %6005 = dma.vmem_to_hbm [thread:$0]  %s5998, 6144, %s6000, %s5972, 512, 512, 32
        $region44: #{hexplane_vae_fused.1} parent=35 // pred_fallthru
          _
        // Predicated region
        $region45: #{hexplane_vae_fused.1} parent=35 // pred_check
          %p6006 = pneg %p195
        $region46: #{hexplane_vae_fused.1} parent=35 // pred_check_branch
          %6008 = sbr.rel (%p6006) target = $region48
        $region47: #{hexplane_vae_fused.1} parent=35 // pred_region
          %s6009 = smul.u32 3, %s31
          %s6010 = smul.u32 4, %s32
          %6012 = vsyncadd %s5977, 0
          %s6013 = smul.addr %s6009, 16
          %s6014 = sadd.s32 %s6010, %s6013
          %s6015 = smul.addr %s6014, 8
          %s6016 = scalar_lea.hbm %s5, %s6015
          %s6017 = sshll.u32 %s5980, 4
          %s6018 = int_to_ptr.vmem [resolvable:$true] %s6017
          %s6019 = sshll.u32 %s6016, 4
          %s6020 = int_to_ptr.hbm [resolvable:$true] %s6019
          %6025 = dma.vmem_to_hbm [thread:$0]  %s6018, 6144, %s6020, %s5977, 512, 512, 32
        $region48: #{hexplane_vae_fused.1} parent=35 // pred_fallthru
          _
        // Predicated region
        $region49: #{hexplane_vae_fused.1} parent=35 // pred_check
          %p6026 = pneg %p223
        $region50: #{hexplane_vae_fused.1} parent=35 // pred_check_branch
          %6028 = sbr.rel (%p6026) target = $region52
        $region51: #{hexplane_vae_fused.1} parent=35 // pred_region
          %s6029 = smul.u32 3, %s31
          %s6030 = smul.u32 4, %s32
          %6032 = vsyncadd %s5982, 0
          %s6033 = smul.addr %s6029, 16
          %s6034 = sadd.s32 %s6030, %s6033
          %s6035 = smul.addr %s6034, 8
          %s6036 = scalar_lea.hbm %s6, %s6035
          %s6037 = sshll.u32 %s5985, 4
          %s6038 = int_to_ptr.vmem [resolvable:$true] %s6037
          %s6039 = sshll.u32 %s6036, 4
          %s6040 = int_to_ptr.hbm [resolvable:$true] %s6039
          %6045 = dma.vmem_to_hbm [thread:$0]  %s6038, 6144, %s6040, %s5982, 512, 512, 32
        $region52: #{hexplane_vae_fused.1} parent=35 // pred_fallthru
          _
      $region36: #{hexplane_vae_fused.1} parent=5 // pred_fallthru
        _
      %p6046 = scmp.le.s32.totalorder 2, %s22
      // Predicated region
      $region53: #{hexplane_vae_fused.1} parent=5 // pred_check
        %p6047 = pneg %p6046
      $region54: #{hexplane_vae_fused.1} parent=5 // pred_check_branch
        %6049 = sbr.rel (%p6047) target = $region56
      $region55: #{hexplane_vae_fused.1} parent=5 // pred_region
        %s6050 = ssub.s32 %s22, 2
        // Predicated region
        $region57: #{hexplane_vae_fused.1} parent=55 // pred_check
          %p6051 = pneg %p173
        $region58: #{hexplane_vae_fused.1} parent=55 // pred_check_branch
          %6053 = sbr.rel (%p6051) target = $region60
        $region59: #{hexplane_vae_fused.1} parent=55 // pred_region
          %s6054 = sand.u32 %s158, 1
          %s6055 = scalar_lea.sflag [#allocation4], %s6054
          %s6056 = sand.u32 %s158, 1
          %s6057 = smul.addr %s6056, 384
          %s6058 = scalar_lea.vmem [#allocation5], %s6057
          %6060 = dma.done %s6055, 6144
        $region60: #{hexplane_vae_fused.1} parent=55 // pred_fallthru
          _
        // Predicated region
        $region61: #{hexplane_vae_fused.1} parent=55 // pred_check
          %p6061 = pneg %p201
        $region62: #{hexplane_vae_fused.1} parent=55 // pred_check_branch
          %6063 = sbr.rel (%p6061) target = $region64
        $region63: #{hexplane_vae_fused.1} parent=55 // pred_region
          %s6064 = sand.u32 %s28, 1
          %s6065 = scalar_lea.sflag [#allocation7], %s6064
          %s6066 = sand.u32 %s186, 1
          %s6067 = smul.addr %s6066, 384
          %s6068 = scalar_lea.vmem [#allocation6], %s6067
          %6070 = dma.done %s6065, 6144
        $region64: #{hexplane_vae_fused.1} parent=55 // pred_fallthru
          _
        // Predicated region
        $region65: #{hexplane_vae_fused.1} parent=55 // pred_check
          %p6071 = pneg %p229
        $region66: #{hexplane_vae_fused.1} parent=55 // pred_check_branch
          %6073 = sbr.rel (%p6071) target = $region68
        $region67: #{hexplane_vae_fused.1} parent=55 // pred_region
          %s6074 = sand.u32 %s28, 1
          %s6075 = scalar_lea.sflag [#allocation7], %s6074
          %s6076 = sand.u32 %s214, 1
          %s6077 = smul.addr %s6076, 384
          %s6078 = scalar_lea.vmem [#allocation8], %s6077
          %6080 = dma.done %s6075, 6144
        $region68: #{hexplane_vae_fused.1} parent=55 // pred_fallthru
          _
      $region56: #{hexplane_vae_fused.1} parent=5 // pred_fallthru
        _
    $region6: #{hexplane_vae_fused.1} parent=1 // loop_footer
      %s26 = sadd.s32 1, %s22
    $region7: #{hexplane_vae_fused.1} parent=1 // loop_footer_branch
      %21 = sbr.rel target = $region3
    $region8: #{hexplane_vae_fused.1} parent=1 // loop_exit
      _
    %6081 = vsyncpa [#allocation3], 1
    %s6082 = scalar_lea.sflag [#allocation3], 1
    %6083 = vsyncpa %s6082, 1
    %6084 = vsyncpa [#allocation4], 1
    %s6085 = scalar_lea.sflag [#allocation4], 1
    %6086 = vsyncpa %s6085, 1
    %6087 = vsyncpa [#allocation7], 1
    %s6088 = scalar_lea.sflag [#allocation7], 1
    %6089 = vsyncpa %s6088, 1

</llo_original>
